<compile_context>
chip_gen: v5e
topology: v5e:2x2
jax: 0.10.0
libtpu: 0.0.40
codegen_flags: <defaults>
</compile_context>

<pallas_src>
import functools

import jax
import jax.numpy as jnp
from jax.experimental import pallas as pl
from jax.experimental.pallas import tpu as pltpu

LATENT_DIM = 5
BETA = 8.0
COMPUTE_DTYPE = jnp.bfloat16     # MXU operand dtype (accumulation stays f32)
TM = 512                         # lane tile for conv GEMM outputs


# ---------------------------------------------------------------------------
# Pallas kernels
# ---------------------------------------------------------------------------
def _conv_gemm_kernel(w_ref, x_ref, b_ref, o_ref, *, relu):
    # Blocks: w (1, N, K), x (1, K, TM), b (N, 1), o (1, N, TM).
    acc = jnp.dot(w_ref[0], x_ref[0], preferred_element_type=jnp.float32)
    acc = acc + b_ref[...]                       # (N,1) broadcast over lanes
    if relu:
        acc = jnp.maximum(acc, 0.0)
    o_ref[0] = acc.astype(o_ref.dtype)


def grouped_conv_gemm(w, x, b, *, relu, out_dtype):
    """out[g] = act(w[g] @ x[g] + b).  w:(G,N,K)  x:(G,K,M)  b:(N,) -> (G,N,M).

    Lane-dense orientation: the big spatial axis M is the last (lane) dim of
    the output, N = C_out sits on sublanes."""
    G, N, K = w.shape
    M = x.shape[2]
    if M >= TM:
        Mp = -(-M // TM) * TM
        tile_m = TM
    else:
        Mp = max(128, -(-M // 128) * 128)
        tile_m = Mp
    if Mp != M:
        x = jnp.pad(x, ((0, 0), (0, 0), (0, Mp - M)))

    out = pl.pallas_call(
        functools.partial(_conv_gemm_kernel, relu=relu),
        out_shape=jax.ShapeDtypeStruct((G, N, Mp), out_dtype),
        grid_spec=pltpu.PrefetchScalarGridSpec(
            num_scalar_prefetch=0,
            grid=(G, Mp // tile_m),
            in_specs=[
                pl.BlockSpec((1, N, K), lambda g, m: (g, 0, 0)),
                pl.BlockSpec((1, K, tile_m), lambda g, m: (g, 0, m)),
                pl.BlockSpec((N, 1), lambda g, m: (0, 0)),
            ],
            out_specs=pl.BlockSpec((1, N, tile_m), lambda g, m: (g, 0, m)),
        ),
        compiler_params=pltpu.CompilerParams(
            dimension_semantics=("parallel", "parallel")),
    )(w.astype(COMPUTE_DTYPE), x.astype(COMPUTE_DTYPE),
      b.reshape(N, 1).astype(jnp.float32))
    return out[:, :, :M]


def _mlp3_kernel(x_ref, w1_ref, b1_ref, w2_ref, b2_ref, w3_ref, b3_ref,
                 o_ref, *, relus):
    h = jnp.dot(x_ref[...], w1_ref[...],
                preferred_element_type=jnp.float32) + b1_ref[...]
    if relus[0]:
        h = jnp.maximum(h, 0.0)
    h = jnp.dot(h.astype(COMPUTE_DTYPE), w2_ref[...],
                preferred_element_type=jnp.float32) + b2_ref[...]
    if relus[1]:
        h = jnp.maximum(h, 0.0)
    h = jnp.dot(h.astype(COMPUTE_DTYPE), w3_ref[...],
                preferred_element_type=jnp.float32) + b3_ref[...]
    if relus[2]:
        h = jnp.maximum(h, 0.0)
    o_ref[...] = h.astype(o_ref.dtype)


def fused_mlp3(x, layers, *, relus, out_dtype):
    """Three chained Linear layers in one pallas_call.  x:(B, K0); weights are
    (in, out); biases (1, out)."""
    (w1, b1), (w2, b2), (w3, b3) = layers
    B, K0 = x.shape
    Bp = max(8, -(-B // 8) * 8)
    if Bp != B:
        x = jnp.pad(x, ((0, Bp - B), (0, 0)))
    N = w3.shape[1]

    def full(shape):
        return pl.BlockSpec(shape, lambda i: tuple(0 for _ in shape))

    out = pl.pallas_call(
        functools.partial(_mlp3_kernel, relus=relus),
        out_shape=jax.ShapeDtypeStruct((Bp, N), out_dtype),
        grid_spec=pltpu.PrefetchScalarGridSpec(
            num_scalar_prefetch=0,
            grid=(1,),
            in_specs=[full((Bp, K0)),
                      full(w1.shape), full((1, w1.shape[1])),
                      full(w2.shape), full((1, w2.shape[1])),
                      full(w3.shape), full((1, w3.shape[1]))],
            out_specs=full((Bp, N)),
        ),
    )(x.astype(COMPUTE_DTYPE),
      w1.astype(COMPUTE_DTYPE), b1.reshape(1, -1).astype(jnp.float32),
      w2.astype(COMPUTE_DTYPE), b2.reshape(1, -1).astype(jnp.float32),
      w3.astype(COMPUTE_DTYPE), b3.reshape(1, -1).astype(jnp.float32))
    return out[:B]


def _loss_kernel(xo_ref, xi_ref, mu_ref, lv_ref, bce_ref, kld_ref, acc_ref):
    step = pl.program_id(0)

    @pl.when(step == 0)
    def _():
        acc_ref[...] = jnp.zeros_like(acc_ref)

    xo = xo_ref[...]
    xi = xi_ref[...]
    # numerically-stable binary_cross_entropy_with_logits, summed.
    bce = jnp.maximum(xo, 0.0) - xo * xi + jnp.log(1.0 + jnp.exp(-jnp.abs(xo)))
    acc_ref[...] += jnp.sum(bce, keepdims=True)

    @pl.when(step == pl.num_programs(0) - 1)
    def _():
        bce_ref[...] = acc_ref[...]
        mu = mu_ref[...]
        lv = lv_ref[...]
        kld_ref[...] = -0.5 * jnp.sum(1.0 + lv - mu * mu - jnp.exp(lv),
                                      keepdims=True)


def _row_tile(rows, cap=512):
    best = 8
    t = 8
    while t <= min(rows, cap):
        if rows % t == 0:
            best = t
        t += 8
    return best


def vae_loss(x_in, x_out_logits, z_mu, z_logvar):
    B = x_out_logits.shape[0]
    xo = x_out_logits.reshape(-1, 128).astype(jnp.float32)
    xi = x_in.reshape(-1, 128).astype(jnp.float32)
    R = xo.shape[0]
    tr = _row_tile(R)

    bce, kld = pl.pallas_call(
        _loss_kernel,
        out_shape=(jax.ShapeDtypeStruct((1, 1), jnp.float32),
                   jax.ShapeDtypeStruct((1, 1), jnp.float32)),
        grid_spec=pltpu.PrefetchScalarGridSpec(
            num_scalar_prefetch=0,
            grid=(R // tr,),
            in_specs=[
                pl.BlockSpec((tr, 128), lambda i: (i, 0)),
                pl.BlockSpec((tr, 128), lambda i: (i, 0)),
                pl.BlockSpec(z_mu.shape, lambda i: (0, 0)),
                pl.BlockSpec(z_logvar.shape, lambda i: (0, 0)),
            ],
            out_specs=[pl.BlockSpec((1, 1), lambda i: (0, 0)),
                       pl.BlockSpec((1, 1), lambda i: (0, 0))],
            scratch_shapes=[pltpu.VMEM((1, 1), jnp.float32)],
        ),
        compiler_params=pltpu.CompilerParams(
            dimension_semantics=("arbitrary",)),
    )(xo, xi, z_mu.astype(jnp.float32), z_logvar.astype(jnp.float32))
    bce_s = bce[0, 0]
    kld_s = kld[0, 0]
    loss = (bce_s + BETA * kld_s) / B
    return loss, BETA * kld_s / B, bce_s / B


# ---------------------------------------------------------------------------
# Conv layers (channels-first activations, patches built in (K, M) orientation)
# ---------------------------------------------------------------------------
def conv2d_s2(act, w_mat, b, *, relu, out_dtype):
    """Conv2d(k=4, s=2, p=1).  act: (C_in, B, H, W) channels-first,
    w_mat: (C_out, 16*C_in).  Returns (C_out, B, H/2, W/2)."""
    C, B, H, W = act.shape
    Ho, Wo = H // 2, W // 2
    xp = jnp.pad(act, ((0, 0), (0, 0), (1, 1), (1, 1)))
    taps = [xp[:, :, i:i + 2 * Ho:2, j:j + 2 * Wo:2]
            for i in range(4) for j in range(4)]
    cols = jnp.stack(taps, axis=0).reshape(16 * C, B * Ho * Wo)   # (K, M)
    out = grouped_conv_gemm(w_mat[None], cols[None], b,
                            relu=relu, out_dtype=out_dtype)        # (1,Cout,M)
    return out.reshape(-1, B, Ho, Wo)


# For ConvTranspose2d(k=4, s=2, p=1): output parity r -> ((kernel_idx, slice
# start into the 1-padded input), ...) along each spatial dim.
_ROW_TAPS = {0: ((3, 0), (1, 1)), 1: ((2, 1), (0, 2))}


def conv_transpose2d_s2(act, w_g, b, *, relu, out_dtype):
    """ConvTranspose2d(k=4, s=2, p=1) via sub-pixel decomposition.
    act: (C_in, B, H, W); w_g: (4, C_out, 4*C_in) per output parity.
    Returns (C_out, B, 2H, 2W)."""
    C, B, H, W = act.shape
    C_out = w_g.shape[1]
    xp = jnp.pad(act, ((0, 0), (0, 0), (1, 1), (1, 1)))
    M = B * H * W
    cols_g = []
    for rh in range(2):
        for rw in range(2):
            taps = [xp[:, :, rs:rs + H, cs:cs + W]
                    for (_, rs) in _ROW_TAPS[rh]
                    for (_, cs) in _ROW_TAPS[rw]]
            cols_g.append(jnp.stack(taps, axis=0).reshape(4 * C, M))
    cols = jnp.stack(cols_g, axis=0)                      # (4, 4*C, M)
    out = grouped_conv_gemm(w_g, cols, b, relu=relu, out_dtype=out_dtype)
    out = out.reshape(2, 2, C_out, B, H, W)
    # interleave parities:  y[c,b,2m+rh,2n+rw] = out[rh,rw,c,b,m,n]
    out = out.transpose(2, 3, 4, 0, 5, 1).reshape(C_out, B, 2 * H, 2 * W)
    return out


# ---------------------------------------------------------------------------
# Parameters (deterministic synthetic init, PyTorch-like uniform bounds)
# ---------------------------------------------------------------------------
def _uniform(key, shape, bound):
    return jax.random.uniform(key, shape, jnp.float32, -bound, bound)


def init_params(key):
    def conv_p(k, cin, cout, ks):
        k1, k2 = jax.random.split(k)
        bound = 1.0 / (cin * ks * ks) ** 0.5
        return (_uniform(k1, (cout, cin, ks, ks), bound),
                _uniform(k2, (cout,), bound))

    def convT_p(k, cin, cout, ks):
        k1, k2 = jax.random.split(k)
        bound = 1.0 / (cin * ks * ks) ** 0.5
        return (_uniform(k1, (cin, cout, ks, ks), bound),
                _uniform(k2, (cout,), bound))

    def lin_p(k, fin, fout):
        k1, k2 = jax.random.split(k)
        bound = 1.0 / fin ** 0.5
        return (_uniform(k1, (fin, fout), bound), _uniform(k2, (fout,), bound))

    ks = jax.random.split(key, 14)
    return {
        "cnn1_en": conv_p(ks[0], 1, 32, 4),
        "cnn2_en": conv_p(ks[1], 32, 32, 4),
        "cnn3_en": conv_p(ks[2], 32, 32, 4),
        "cnn4_en": conv_p(ks[3], 32, 32, 4),
        "linear1_en": lin_p(ks[4], 32 * 4 * 4, 256),
        "linear2_en": lin_p(ks[5], 256, 256),
        "z_mean": lin_p(ks[6], 256, 2 * LATENT_DIM),
        "linear1_dec": lin_p(ks[7], LATENT_DIM, 256),
        "linear2_dec": lin_p(ks[8], 256, 256),
        "linear3_dec": lin_p(ks[9], 256, 32 * 4 * 4),
        "cnn1_dec": convT_p(ks[10], 32, 32, 4),
        "cnn2_dec": convT_p(ks[11], 32, 32, 4),
        "cnn3_dec": convT_p(ks[12], 32, 32, 4),
        "cnn4_dec": convT_p(ks[13], 32, 1, 4),
    }


def prepare_params(params):
    """Convert PyTorch-layout params into kernel-ready (bf16) layouts once."""
    kp = {}
    for name in ("cnn1_en", "cnn2_en", "cnn3_en", "cnn4_en"):
        w, b = params[name]                        # (C_out, C_in, 4, 4)
        C_out, C_in = w.shape[0], w.shape[1]
        w_mat = w.transpose(0, 2, 3, 1).reshape(C_out, 16 * C_in)
        kp[name] = (w_mat.astype(COMPUTE_DTYPE), b.astype(jnp.float32))
    for name in ("cnn1_dec", "cnn2_dec", "cnn3_dec", "cnn4_dec"):
        w, b = params[name]                        # (C_in, C_out, 4, 4)
        C_in, C_out = w.shape[0], w.shape[1]
        wt = w.transpose(2, 3, 1, 0)               # (kh, kw, C_out, C_in)
        groups = []
        for rh in range(2):
            for rw in range(2):
                wsub = [wt[kh, kw]
                        for (kh, _) in _ROW_TAPS[rh]
                        for (kw, _) in _ROW_TAPS[rw]]     # 4 x (C_out, C_in)
                groups.append(jnp.stack(wsub, 0).transpose(1, 0, 2)
                              .reshape(C_out, 4 * C_in))
        kp[name] = (jnp.stack(groups, 0).astype(COMPUTE_DTYPE),
                    b.astype(jnp.float32))
    for name in ("linear1_en", "linear2_en", "z_mean",
                 "linear1_dec", "linear2_dec", "linear3_dec"):
        w, b = params[name]
        kp[name] = (w.astype(COMPUTE_DTYPE),
                    b.reshape(1, -1).astype(jnp.float32))
    return kp


# ---------------------------------------------------------------------------
# VAE forward
# ---------------------------------------------------------------------------
def encoder(kp, x):
    act = x.reshape(-1, 64, 64)[None].astype(COMPUTE_DTYPE)   # (1, B, 64, 64)
    act = conv2d_s2(act, *kp["cnn1_en"], relu=True, out_dtype=COMPUTE_DTYPE)
    act = conv2d_s2(act, *kp["cnn2_en"], relu=True, out_dtype=COMPUTE_DTYPE)
    act = conv2d_s2(act, *kp["cnn3_en"], relu=True, out_dtype=COMPUTE_DTYPE)
    act = conv2d_s2(act, *kp["cnn4_en"], relu=True, out_dtype=COMPUTE_DTYPE)
    B = act.shape[1]
    feat = act.transpose(1, 0, 2, 3).reshape(B, 32 * 4 * 4)    # NCHW flatten
    zp = fused_mlp3(feat, [kp["linear1_en"], kp["linear2_en"], kp["z_mean"]],
                    relus=(True, True, False), out_dtype=jnp.float32)
    return zp[:, :LATENT_DIM], zp[:, LATENT_DIM:]


def decoder(kp, z):
    h = fused_mlp3(z,
                   [kp["linear1_dec"], kp["linear2_dec"], kp["linear3_dec"]],
                   relus=(True, True, True), out_dtype=COMPUTE_DTYPE)
    B = h.shape[0]
    act = h.reshape(B, 32, 4, 4).transpose(1, 0, 2, 3)          # (32, B, 4, 4)
    act = conv_transpose2d_s2(act, *kp["cnn1_dec"], relu=True,
                              out_dtype=COMPUTE_DTYPE)
    act = conv_transpose2d_s2(act, *kp["cnn2_dec"], relu=True,
                              out_dtype=COMPUTE_DTYPE)
    act = conv_transpose2d_s2(act, *kp["cnn3_dec"], relu=True,
                              out_dtype=COMPUTE_DTYPE)
    act = conv_transpose2d_s2(act, *kp["cnn4_dec"], relu=False,
                              out_dtype=jnp.float32)            # (1, B, 64, 64)
    return act.reshape(B, 64, 64)


def vae_forward(kp, x, eps_key):
    z_mean, z_logvar = encoder(kp, x)
    # reparametrize: std = exp(logvar / 2), z = mu + std * eps
    std = jnp.exp(z_logvar / 2.0)
    eps = jax.random.normal(eps_key, std.shape, dtype=std.dtype)
    z = z_mean + std * eps
    logits = decoder(kp, z)
    loss = vae_loss(x.astype(jnp.float32), logits, z_mean, z_logvar)
    return loss, z_mean


if __name__ == "__main__":
    key = jax.random.PRNGKey(0)
    k_x, k_params, k_eps = jax.random.split(key, 3)
    # batch=2 "images" of 64x64 (the module hard-codes 64x64 spatial size)
    x = jax.random.uniform(k_x, (2, 64, 64), dtype=jnp.float32)
    params = init_params(k_params)
    kparams = prepare_params(params)
    fwd = jax.jit(vae_forward)
    (loss, kld_term, bce_term), z_mean = fwd(kparams, x, k_eps)
    jax.block_until_ready((loss, kld_term, bce_term, z_mean))
    print("KERNEL_OK")
</pallas_src>

<mosaic_0001>
module attributes {stable_mosaic.version = 11 : i64} {
  func.func @_conv_gemm_kernel(%arg0: i32, %arg1: i32, %arg2: memref<1x32x16xbf16, #tpu.memory_space<vmem>>, %arg3: memref<1x16x512xbf16, #tpu.memory_space<vmem>>, %arg4: memref<32x1xf32, #tpu.memory_space<vmem>>, %arg5: memref<1x32x512xbf16, #tpu.memory_space<vmem>>) attributes {dimension_semantics = [#tpu.dimension_semantics<parallel>, #tpu.dimension_semantics<parallel>], iteration_bounds = array<i64: 1, 4>, scalar_prefetch = 0 : i64, scratch_operands = 0 : i64, tpu.core_type = #tpu.core_type<tc>, window_params = [{transform_indices = @transform_0, window_bounds = array<i64: 1, 32, 16>}, {transform_indices = @transform_1, window_bounds = array<i64: 1, 16, 512>}, {pipeline_mode = #tpu.pipeline_mode<synchronous>, transform_indices = @transform_2, window_bounds = array<i64: 32, 1>}, {transform_indices = @transform_3, window_bounds = array<i64: 1, 32, 512>}]} {
    %c0 = arith.constant 0 : index
    %c0_0 = arith.constant 0 : index
    %c0_1 = arith.constant 0 : index
    %0 = vector.load %arg2[%c0, %c0_0, %c0_1] : memref<1x32x16xbf16, #tpu.memory_space<vmem>>, vector<1x32x16xbf16>
    %1 = vector.shape_cast %0 : vector<1x32x16xbf16> to vector<32x16xbf16>
    %c0_2 = arith.constant 0 : index
    %c0_3 = arith.constant 0 : index
    %c0_4 = arith.constant 0 : index
    %2 = vector.load %arg3[%c0_2, %c0_3, %c0_4] : memref<1x16x512xbf16, #tpu.memory_space<vmem>>, vector<1x16x512xbf16>
    %3 = vector.shape_cast %2 : vector<1x16x512xbf16> to vector<16x512xbf16>
    %cst = arith.constant dense<0.000000e+00> : vector<32x512xf32>
    %4 = tpu.matmul %1, %3, %cst {dimension_numbers = #tpu.dot_dimension_numbers<[1], [0], [0], [1], [0, 0, 1, 1], [], []>} : vector<32x16xbf16>, vector<16x512xbf16>, vector<32x512xf32> -> vector<32x512xf32>
    %c0_5 = arith.constant 0 : index
    %c0_6 = arith.constant 0 : index
    %5 = vector.load %arg4[%c0_5, %c0_6] : memref<32x1xf32, #tpu.memory_space<vmem>>, vector<32x1xf32>
    %6 = vector.broadcast %5 : vector<32x1xf32> to vector<32x512xf32>
    %7 = arith.addf %4, %6 : vector<32x512xf32>
    %cst_7 = arith.constant 0.000000e+00 : f32
    %8 = vector.broadcast %cst_7 : f32 to vector<32x512xf32>
    %9 = arith.maximumf %7, %8 : vector<32x512xf32>
    %10 = arith.truncf %9 : vector<32x512xf32> to vector<32x512xbf16>
    %c0_8 = arith.constant 0 : index
    %c0_9 = arith.constant 0 : index
    %c0_10 = arith.constant 0 : index
    %11 = vector.load %arg5[%c0_8, %c0_9, %c0_10] : memref<1x32x512xbf16, #tpu.memory_space<vmem>>, vector<1x32x512xbf16>
    %12 = vector.shape_cast %11 : vector<1x32x512xbf16> to vector<32x512xbf16>
    %13 = vector.shape_cast %10 : vector<32x512xbf16> to vector<1x32x512xbf16>
    tpu.vector_store %arg5[%c0_8, %c0_9, %c0_10], %13 {strides = array<i32>} : memref<1x32x512xbf16, #tpu.memory_space<vmem>>, vector<1x32x512xbf16>,
    return
  }
  func.func @transform_0(%arg0: i32, %arg1: i32) -> (i32, i32, i32) {
    %c0_i32 = arith.constant 0 : i32
    %c0_i32_0 = arith.constant 0 : i32
    %c0_i32_1 = arith.constant 0 : i32
    return %arg0, %c0_i32, %c0_i32_0 : i32, i32, i32
  }
  func.func @transform_1(%arg0: i32, %arg1: i32) -> (i32, i32, i32) {
    %c0_i32 = arith.constant 0 : i32
    %c0_i32_0 = arith.constant 0 : i32
    return %arg0, %c0_i32, %arg1 : i32, i32, i32
  }
  func.func @transform_2(%arg0: i32, %arg1: i32) -> (i32, i32) {
    %c0_i32 = arith.constant 0 : i32
    %c0_i32_0 = arith.constant 0 : i32
    %c0_i32_1 = arith.constant 0 : i32
    return %c0_i32, %c0_i32_0 : i32, i32
  }
  func.func @transform_3(%arg0: i32, %arg1: i32) -> (i32, i32, i32) {
    %c0_i32 = arith.constant 0 : i32
    %c0_i32_0 = arith.constant 0 : i32
    return %arg0, %c0_i32, %arg1 : i32, i32, i32
  }
}

module attributes {stable_mosaic.version = 11 : i64} {
  func.func @_conv_gemm_kernel(%arg0: i32, %arg1: i32, %arg2: memref<1x32x512xbf16, #tpu.memory_space<vmem>>, %arg3: memref<1x512x512xbf16, #tpu.memory_space<vmem>>, %arg4: memref<32x1xf32, #tpu.memory_space<vmem>>, %arg5: memref<1x32x512xbf16, #tpu.memory_space<vmem>>) attributes {dimension_semantics = [#tpu.dimension_semantics<parallel>, #tpu.dimension_semantics<parallel>], iteration_bounds = array<i64: 1, 1>, scalar_prefetch = 0 : i64, scratch_operands = 0 : i64, tpu.core_type = #tpu.core_type<tc>, window_params = [{transform_indices = @transform_0, window_bounds = array<i64: 1, 32, 512>}, {transform_indices = @transform_1, window_bounds = array<i64: 1, 512, 512>}, {pipeline_mode = #tpu.pipeline_mode<synchronous>, transform_indices = @transform_2, window_bounds = array<i64: 32, 1>}, {transform_indices = @transform_3, window_bounds = array<i64: 1, 32, 512>}]} {
    %c0 = arith.constant 0 : index
    %c0_0 = arith.constant 0 : index
    %c0_1 = arith.constant 0 : index
    %0 = vector.load %arg2[%c0, %c0_0, %c0_1] : memref<1x32x512xbf16, #tpu.memory_space<vmem>>, vector<1x32x512xbf16>
    %1 = vector.shape_cast %0 : vector<1x32x512xbf16> to vector<32x512xbf16>
    %c0_2 = arith.constant 0 : index
    %c0_3 = arith.constant 0 : index
    %c0_4 = arith.constant 0 : index
    %2 = vector.load %arg3[%c0_2, %c0_3, %c0_4] : memref<1x512x512xbf16, #tpu.memory_space<vmem>>, vector<1x512x512xbf16>
    %3 = vector.shape_cast %2 : vector<1x512x512xbf16> to vector<512x512xbf16>
    %cst = arith.constant dense<0.000000e+00> : vector<32x512xf32>
    %4 = tpu.matmul %1, %3, %cst {dimension_numbers = #tpu.dot_dimension_numbers<[1], [0], [0], [1], [0, 0, 1, 1], [], []>} : vector<32x512xbf16>, vector<512x512xbf16>, vector<32x512xf32> -> vector<32x512xf32>
    %c0_5 = arith.constant 0 : index
    %c0_6 = arith.constant 0 : index
    %5 = vector.load %arg4[%c0_5, %c0_6] : memref<32x1xf32, #tpu.memory_space<vmem>>, vector<32x1xf32>
    %6 = vector.broadcast %5 : vector<32x1xf32> to vector<32x512xf32>
    %7 = arith.addf %4, %6 : vector<32x512xf32>
    %cst_7 = arith.constant 0.000000e+00 : f32
    %8 = vector.broadcast %cst_7 : f32 to vector<32x512xf32>
    %9 = arith.maximumf %7, %8 : vector<32x512xf32>
    %10 = arith.truncf %9 : vector<32x512xf32> to vector<32x512xbf16>
    %c0_8 = arith.constant 0 : index
    %c0_9 = arith.constant 0 : index
    %c0_10 = arith.constant 0 : index
    %11 = vector.load %arg5[%c0_8, %c0_9, %c0_10] : memref<1x32x512xbf16, #tpu.memory_space<vmem>>, vector<1x32x512xbf16>
    %12 = vector.shape_cast %11 : vector<1x32x512xbf16> to vector<32x512xbf16>
    %13 = vector.shape_cast %10 : vector<32x512xbf16> to vector<1x32x512xbf16>
    tpu.vector_store %arg5[%c0_8, %c0_9, %c0_10], %13 {strides = array<i32>} : memref<1x32x512xbf16, #tpu.memory_space<vmem>>, vector<1x32x512xbf16>,
    return
  }
  func.func @transform_0(%arg0: i32, %arg1: i32) -> (i32, i32, i32) {
    %c0_i32 = arith.constant 0 : i32
    %c0_i32_0 = arith.constant 0 : i32
    %c0_i32_1 = arith.constant 0 : i32
    return %arg0, %c0_i32, %c0_i32_0 : i32, i32, i32
  }
  func.func @transform_1(%arg0: i32, %arg1: i32) -> (i32, i32, i32) {
    %c0_i32 = arith.constant 0 : i32
    %c0_i32_0 = arith.constant 0 : i32
    return %arg0, %c0_i32, %arg1 : i32, i32, i32
  }
  func.func @transform_2(%arg0: i32, %arg1: i32) -> (i32, i32) {
    %c0_i32 = arith.constant 0 : i32
    %c0_i32_0 = arith.constant 0 : i32
    %c0_i32_1 = arith.constant 0 : i32
    return %c0_i32, %c0_i32_0 : i32, i32
  }
  func.func @transform_3(%arg0: i32, %arg1: i32) -> (i32, i32, i32) {
    %c0_i32 = arith.constant 0 : i32
    %c0_i32_0 = arith.constant 0 : i32
    return %arg0, %c0_i32, %arg1 : i32, i32, i32
  }
}

module attributes {stable_mosaic.version = 11 : i64} {
  func.func @_conv_gemm_kernel(%arg0: i32, %arg1: i32, %arg2: memref<1x32x512xbf16, #tpu.memory_space<vmem>>, %arg3: memref<1x512x128xbf16, #tpu.memory_space<vmem>>, %arg4: memref<32x1xf32, #tpu.memory_space<vmem>>, %arg5: memref<1x32x128xbf16, #tpu.memory_space<vmem>>) attributes {dimension_semantics = [#tpu.dimension_semantics<parallel>, #tpu.dimension_semantics<parallel>], iteration_bounds = array<i64: 1, 1>, scalar_prefetch = 0 : i64, scratch_operands = 0 : i64, tpu.core_type = #tpu.core_type<tc>, window_params = [{transform_indices = @transform_0, window_bounds = array<i64: 1, 32, 512>}, {transform_indices = @transform_1, window_bounds = array<i64: 1, 512, 128>}, {pipeline_mode = #tpu.pipeline_mode<synchronous>, transform_indices = @transform_2, window_bounds = array<i64: 32, 1>}, {transform_indices = @transform_3, window_bounds = array<i64: 1, 32, 128>}]} {
    %c0 = arith.constant 0 : index
    %c0_0 = arith.constant 0 : index
    %c0_1 = arith.constant 0 : index
    %0 = vector.load %arg2[%c0, %c0_0, %c0_1] : memref<1x32x512xbf16, #tpu.memory_space<vmem>>, vector<1x32x512xbf16>
    %1 = vector.shape_cast %0 : vector<1x32x512xbf16> to vector<32x512xbf16>
    %c0_2 = arith.constant 0 : index
    %c0_3 = arith.constant 0 : index
    %c0_4 = arith.constant 0 : index
    %2 = vector.load %arg3[%c0_2, %c0_3, %c0_4] : memref<1x512x128xbf16, #tpu.memory_space<vmem>>, vector<1x512x128xbf16>
    %3 = vector.shape_cast %2 : vector<1x512x128xbf16> to vector<512x128xbf16>
    %cst = arith.constant dense<0.000000e+00> : vector<32x128xf32>
    %4 = tpu.matmul %1, %3, %cst {dimension_numbers = #tpu.dot_dimension_numbers<[1], [0], [0], [1], [0, 0, 1, 1], [], []>} : vector<32x512xbf16>, vector<512x128xbf16>, vector<32x128xf32> -> vector<32x128xf32>
    %c0_5 = arith.constant 0 : index
    %c0_6 = arith.constant 0 : index
    %5 = vector.load %arg4[%c0_5, %c0_6] : memref<32x1xf32, #tpu.memory_space<vmem>>, vector<32x1xf32>
    %6 = vector.broadcast %5 : vector<32x1xf32> to vector<32x128xf32>
    %7 = arith.addf %4, %6 : vector<32x128xf32>
    %cst_7 = arith.constant 0.000000e+00 : f32
    %8 = vector.broadcast %cst_7 : f32 to vector<32x128xf32>
    %9 = arith.maximumf %7, %8 : vector<32x128xf32>
    %10 = arith.truncf %9 : vector<32x128xf32> to vector<32x128xbf16>
    %c0_8 = arith.constant 0 : index
    %c0_9 = arith.constant 0 : index
    %c0_10 = arith.constant 0 : index
    %11 = vector.load %arg5[%c0_8, %c0_9, %c0_10] : memref<1x32x128xbf16, #tpu.memory_space<vmem>>, vector<1x32x128xbf16>
    %12 = vector.shape_cast %11 : vector<1x32x128xbf16> to vector<32x128xbf16>
    %13 = vector.shape_cast %10 : vector<32x128xbf16> to vector<1x32x128xbf16>
    tpu.vector_store %arg5[%c0_8, %c0_9, %c0_10], %13 {strides = array<i32>} : memref<1x32x128xbf16, #tpu.memory_space<vmem>>, vector<1x32x128xbf16>,
    return
  }
  func.func @transform_0(%arg0: i32, %arg1: i32) -> (i32, i32, i32) {
    %c0_i32 = arith.constant 0 : i32
    %c0_i32_0 = arith.constant 0 : i32
    %c0_i32_1 = arith.constant 0 : i32
    return %arg0, %c0_i32, %c0_i32_0 : i32, i32, i32
  }
  func.func @transform_1(%arg0: i32, %arg1: i32) -> (i32, i32, i32) {
    %c0_i32 = arith.constant 0 : i32
    %c0_i32_0 = arith.constant 0 : i32
    return %arg0, %c0_i32, %arg1 : i32, i32, i32
  }
  func.func @transform_2(%arg0: i32, %arg1: i32) -> (i32, i32) {
    %c0_i32 = arith.constant 0 : i32
    %c0_i32_0 = arith.constant 0 : i32
    %c0_i32_1 = arith.constant 0 : i32
    return %c0_i32, %c0_i32_0 : i32, i32
  }
  func.func @transform_3(%arg0: i32, %arg1: i32) -> (i32, i32, i32) {
    %c0_i32 = arith.constant 0 : i32
    %c0_i32_0 = arith.constant 0 : i32
    return %arg0, %c0_i32, %arg1 : i32, i32, i32
  }
}

module attributes {stable_mosaic.version = 11 : i64} {
  func.func @_mlp3_kernel(%arg0: i32, %arg1: memref<8x512xbf16, #tpu.memory_space<vmem>>, %arg2: memref<512x256xbf16, #tpu.memory_space<vmem>>, %arg3: memref<1x256xf32, #tpu.memory_space<vmem>>, %arg4: memref<256x256xbf16, #tpu.memory_space<vmem>>, %arg5: memref<1x256xf32, #tpu.memory_space<vmem>>, %arg6: memref<256x10xbf16, #tpu.memory_space<vmem>>, %arg7: memref<1x10xf32, #tpu.memory_space<vmem>>, %arg8: memref<8x10xf32, #tpu.memory_space<vmem>>) attributes {dimension_semantics = [#tpu.dimension_semantics<arbitrary>], iteration_bounds = array<i64: 1>, scalar_prefetch = 0 : i64, scratch_operands = 0 : i64, tpu.core_type = #tpu.core_type<tc>, window_params = [{pipeline_mode = #tpu.pipeline_mode<synchronous>, transform_indices = @transform_0, window_bounds = array<i64: 8, 512>}, {pipeline_mode = #tpu.pipeline_mode<synchronous>, transform_indices = @transform_1, window_bounds = array<i64: 512, 256>}, {pipeline_mode = #tpu.pipeline_mode<synchronous>, transform_indices = @transform_2, window_bounds = array<i64: 1, 256>}, {pipeline_mode = #tpu.pipeline_mode<synchronous>, transform_indices = @transform_3, window_bounds = array<i64: 256, 256>}, {pipeline_mode = #tpu.pipeline_mode<synchronous>, transform_indices = @transform_4, window_bounds = array<i64: 1, 256>}, {pipeline_mode = #tpu.pipeline_mode<synchronous>, transform_indices = @transform_5, window_bounds = array<i64: 256, 10>}, {pipeline_mode = #tpu.pipeline_mode<synchronous>, transform_indices = @transform_6, window_bounds = array<i64: 1, 10>}, {pipeline_mode = #tpu.pipeline_mode<synchronous>, transform_indices = @transform_7, window_bounds = array<i64: 8, 10>}]} {
    %c0 = arith.constant 0 : index
    %c0_0 = arith.constant 0 : index
    %0 = vector.load %arg1[%c0, %c0_0] : memref<8x512xbf16, #tpu.memory_space<vmem>>, vector<8x512xbf16>
    %c0_1 = arith.constant 0 : index
    %c0_2 = arith.constant 0 : index
    %1 = vector.load %arg2[%c0_1, %c0_2] : memref<512x256xbf16, #tpu.memory_space<vmem>>, vector<512x256xbf16>
    %cst = arith.constant dense<0.000000e+00> : vector<8x256xf32>
    %2 = tpu.matmul %0, %1, %cst {dimension_numbers = #tpu.dot_dimension_numbers<[1], [0], [0], [1], [0, 0, 1, 1], [], []>} : vector<8x512xbf16>, vector<512x256xbf16>, vector<8x256xf32> -> vector<8x256xf32>
    %c0_3 = arith.constant 0 : index
    %c0_4 = arith.constant 0 : index
    %3 = vector.load %arg3[%c0_3, %c0_4] : memref<1x256xf32, #tpu.memory_space<vmem>>, vector<1x256xf32>
    %4 = vector.broadcast %3 : vector<1x256xf32> to vector<8x256xf32>
    %5 = arith.addf %2, %4 : vector<8x256xf32>
    %cst_5 = arith.constant 0.000000e+00 : f32
    %6 = vector.broadcast %cst_5 : f32 to vector<8x256xf32>
    %7 = arith.maximumf %5, %6 : vector<8x256xf32>
    %8 = arith.truncf %7 : vector<8x256xf32> to vector<8x256xbf16>
    %c0_6 = arith.constant 0 : index
    %c0_7 = arith.constant 0 : index
    %9 = vector.load %arg4[%c0_6, %c0_7] : memref<256x256xbf16, #tpu.memory_space<vmem>>, vector<256x256xbf16>
    %cst_8 = arith.constant dense<0.000000e+00> : vector<8x256xf32>
    %10 = tpu.matmul %8, %9, %cst_8 {dimension_numbers = #tpu.dot_dimension_numbers<[1], [0], [0], [1], [0, 0, 1, 1], [], []>} : vector<8x256xbf16>, vector<256x256xbf16>, vector<8x256xf32> -> vector<8x256xf32>
    %c0_9 = arith.constant 0 : index
    %c0_10 = arith.constant 0 : index
    %11 = vector.load %arg5[%c0_9, %c0_10] : memref<1x256xf32, #tpu.memory_space<vmem>>, vector<1x256xf32>
    %12 = vector.broadcast %11 : vector<1x256xf32> to vector<8x256xf32>
    %13 = arith.addf %10, %12 : vector<8x256xf32>
    %cst_11 = arith.constant 0.000000e+00 : f32
    %14 = vector.broadcast %cst_11 : f32 to vector<8x256xf32>
    %15 = arith.maximumf %13, %14 : vector<8x256xf32>
    %16 = arith.truncf %15 : vector<8x256xf32> to vector<8x256xbf16>
    %c0_12 = arith.constant 0 : index
    %c0_13 = arith.constant 0 : index
    %17 = vector.load %arg6[%c0_12, %c0_13] : memref<256x10xbf16, #tpu.memory_space<vmem>>, vector<256x10xbf16>
    %cst_14 = arith.constant dense<0.000000e+00> : vector<8x10xf32>
    %18 = tpu.matmul %16, %17, %cst_14 {dimension_numbers = #tpu.dot_dimension_numbers<[1], [0], [0], [1], [0, 0, 1, 1], [], []>} : vector<8x256xbf16>, vector<256x10xbf16>, vector<8x10xf32> -> vector<8x10xf32>
    %c0_15 = arith.constant 0 : index
    %c0_16 = arith.constant 0 : index
    %19 = vector.load %arg7[%c0_15, %c0_16] : memref<1x10xf32, #tpu.memory_space<vmem>>, vector<1x10xf32>
    %20 = vector.broadcast %19 : vector<1x10xf32> to vector<8x10xf32>
    %21 = arith.addf %18, %20 : vector<8x10xf32>
    %c0_17 = arith.constant 0 : index
    %c0_18 = arith.constant 0 : index
    %22 = vector.load %arg8[%c0_17, %c0_18] : memref<8x10xf32, #tpu.memory_space<vmem>>, vector<8x10xf32>
    tpu.vector_store %arg8[%c0_17, %c0_18], %21 {strides = array<i32>} : memref<8x10xf32, #tpu.memory_space<vmem>>, vector<8x10xf32>,
    return
  }
  func.func @transform_0(%arg0: i32) -> (i32, i32) {
    %c0_i32 = arith.constant 0 : i32
    %c0_i32_0 = arith.constant 0 : i32
    %c0_i32_1 = arith.constant 0 : i32
    return %c0_i32, %c0_i32_0 : i32, i32
  }
  func.func @transform_1(%arg0: i32) -> (i32, i32) {
    %c0_i32 = arith.constant 0 : i32
    %c0_i32_0 = arith.constant 0 : i32
    %c0_i32_1 = arith.constant 0 : i32
    return %c0_i32, %c0_i32_0 : i32, i32
  }
  func.func @transform_2(%arg0: i32) -> (i32, i32) {
    %c0_i32 = arith.constant 0 : i32
    %c0_i32_0 = arith.constant 0 : i32
    %c0_i32_1 = arith.constant 0 : i32
    return %c0_i32, %c0_i32_0 : i32, i32
  }
  func.func @transform_3(%arg0: i32) -> (i32, i32) {
    %c0_i32 = arith.constant 0 : i32
    %c0_i32_0 = arith.constant 0 : i32
    %c0_i32_1 = arith.constant 0 : i32
    return %c0_i32, %c0_i32_0 : i32, i32
  }
  func.func @transform_4(%arg0: i32) -> (i32, i32) {
    %c0_i32 = arith.constant 0 : i32
    %c0_i32_0 = arith.constant 0 : i32
    %c0_i32_1 = arith.constant 0 : i32
    return %c0_i32, %c0_i32_0 : i32, i32
  }
  func.func @transform_5(%arg0: i32) -> (i32, i32) {
    %c0_i32 = arith.constant 0 : i32
    %c0_i32_0 = arith.constant 0 : i32
    %c0_i32_1 = arith.constant 0 : i32
    return %c0_i32, %c0_i32_0 : i32, i32
  }
  func.func @transform_6(%arg0: i32) -> (i32, i32) {
    %c0_i32 = arith.constant 0 : i32
    %c0_i32_0 = arith.constant 0 : i32
    %c0_i32_1 = arith.constant 0 : i32
    return %c0_i32, %c0_i32_0 : i32, i32
  }
  func.func @transform_7(%arg0: i32) -> (i32, i32) {
    %c0_i32 = arith.constant 0 : i32
    %c0_i32_0 = arith.constant 0 : i32
    %c0_i32_1 = arith.constant 0 : i32
    return %c0_i32, %c0_i32_0 : i32, i32
  }
}

module attributes {stable_mosaic.version = 11 : i64} {
  func.func @_mlp3_kernel(%arg0: i32, %arg1: memref<8x5xbf16, #tpu.memory_space<vmem>>, %arg2: memref<5x256xbf16, #tpu.memory_space<vmem>>, %arg3: memref<1x256xf32, #tpu.memory_space<vmem>>, %arg4: memref<256x256xbf16, #tpu.memory_space<vmem>>, %arg5: memref<1x256xf32, #tpu.memory_space<vmem>>, %arg6: memref<256x512xbf16, #tpu.memory_space<vmem>>, %arg7: memref<1x512xf32, #tpu.memory_space<vmem>>, %arg8: memref<8x512xbf16, #tpu.memory_space<vmem>>) attributes {dimension_semantics = [#tpu.dimension_semantics<arbitrary>], iteration_bounds = array<i64: 1>, scalar_prefetch = 0 : i64, scratch_operands = 0 : i64, tpu.core_type = #tpu.core_type<tc>, window_params = [{pipeline_mode = #tpu.pipeline_mode<synchronous>, transform_indices = @transform_0, window_bounds = array<i64: 8, 5>}, {pipeline_mode = #tpu.pipeline_mode<synchronous>, transform_indices = @transform_1, window_bounds = array<i64: 5, 256>}, {pipeline_mode = #tpu.pipeline_mode<synchronous>, transform_indices = @transform_2, window_bounds = array<i64: 1, 256>}, {pipeline_mode = #tpu.pipeline_mode<synchronous>, transform_indices = @transform_3, window_bounds = array<i64: 256, 256>}, {pipeline_mode = #tpu.pipeline_mode<synchronous>, transform_indices = @transform_4, window_bounds = array<i64: 1, 256>}, {pipeline_mode = #tpu.pipeline_mode<synchronous>, transform_indices = @transform_5, window_bounds = array<i64: 256, 512>}, {pipeline_mode = #tpu.pipeline_mode<synchronous>, transform_indices = @transform_6, window_bounds = array<i64: 1, 512>}, {pipeline_mode = #tpu.pipeline_mode<synchronous>, transform_indices = @transform_7, window_bounds = array<i64: 8, 512>}]} {
    %c0 = arith.constant 0 : index
    %c0_0 = arith.constant 0 : index
    %0 = vector.load %arg1[%c0, %c0_0] : memref<8x5xbf16, #tpu.memory_space<vmem>>, vector<8x5xbf16>
    %c0_1 = arith.constant 0 : index
    %c0_2 = arith.constant 0 : index
    %1 = vector.load %arg2[%c0_1, %c0_2] : memref<5x256xbf16, #tpu.memory_space<vmem>>, vector<5x256xbf16>
    %cst = arith.constant dense<0.000000e+00> : vector<8x256xf32>
    %2 = tpu.matmul %0, %1, %cst {dimension_numbers = #tpu.dot_dimension_numbers<[1], [0], [0], [1], [0, 0, 1, 1], [], []>} : vector<8x5xbf16>, vector<5x256xbf16>, vector<8x256xf32> -> vector<8x256xf32>
    %c0_3 = arith.constant 0 : index
    %c0_4 = arith.constant 0 : index
    %3 = vector.load %arg3[%c0_3, %c0_4] : memref<1x256xf32, #tpu.memory_space<vmem>>, vector<1x256xf32>
    %4 = vector.broadcast %3 : vector<1x256xf32> to vector<8x256xf32>
    %5 = arith.addf %2, %4 : vector<8x256xf32>
    %cst_5 = arith.constant 0.000000e+00 : f32
    %6 = vector.broadcast %cst_5 : f32 to vector<8x256xf32>
    %7 = arith.maximumf %5, %6 : vector<8x256xf32>
    %8 = arith.truncf %7 : vector<8x256xf32> to vector<8x256xbf16>
    %c0_6 = arith.constant 0 : index
    %c0_7 = arith.constant 0 : index
    %9 = vector.load %arg4[%c0_6, %c0_7] : memref<256x256xbf16, #tpu.memory_space<vmem>>, vector<256x256xbf16>
    %cst_8 = arith.constant dense<0.000000e+00> : vector<8x256xf32>
    %10 = tpu.matmul %8, %9, %cst_8 {dimension_numbers = #tpu.dot_dimension_numbers<[1], [0], [0], [1], [0, 0, 1, 1], [], []>} : vector<8x256xbf16>, vector<256x256xbf16>, vector<8x256xf32> -> vector<8x256xf32>
    %c0_9 = arith.constant 0 : index
    %c0_10 = arith.constant 0 : index
    %11 = vector.load %arg5[%c0_9, %c0_10] : memref<1x256xf32, #tpu.memory_space<vmem>>, vector<1x256xf32>
    %12 = vector.broadcast %11 : vector<1x256xf32> to vector<8x256xf32>
    %13 = arith.addf %10, %12 : vector<8x256xf32>
    %cst_11 = arith.constant 0.000000e+00 : f32
    %14 = vector.broadcast %cst_11 : f32 to vector<8x256xf32>
    %15 = arith.maximumf %13, %14 : vector<8x256xf32>
    %16 = arith.truncf %15 : vector<8x256xf32> to vector<8x256xbf16>
    %c0_12 = arith.constant 0 : index
    %c0_13 = arith.constant 0 : index
    %17 = vector.load %arg6[%c0_12, %c0_13] : memref<256x512xbf16, #tpu.memory_space<vmem>>, vector<256x512xbf16>
    %cst_14 = arith.constant dense<0.000000e+00> : vector<8x512xf32>
    %18 = tpu.matmul %16, %17, %cst_14 {dimension_numbers = #tpu.dot_dimension_numbers<[1], [0], [0], [1], [0, 0, 1, 1], [], []>} : vector<8x256xbf16>, vector<256x512xbf16>, vector<8x512xf32> -> vector<8x512xf32>
    %c0_15 = arith.constant 0 : index
    %c0_16 = arith.constant 0 : index
    %19 = vector.load %arg7[%c0_15, %c0_16] : memref<1x512xf32, #tpu.memory_space<vmem>>, vector<1x512xf32>
    %20 = vector.broadcast %19 : vector<1x512xf32> to vector<8x512xf32>
    %21 = arith.addf %18, %20 : vector<8x512xf32>
    %cst_17 = arith.constant 0.000000e+00 : f32
    %22 = vector.broadcast %cst_17 : f32 to vector<8x512xf32>
    %23 = arith.maximumf %21, %22 : vector<8x512xf32>
    %24 = arith.truncf %23 : vector<8x512xf32> to vector<8x512xbf16>
    %c0_18 = arith.constant 0 : index
    %c0_19 = arith.constant 0 : index
    %25 = vector.load %arg8[%c0_18, %c0_19] : memref<8x512xbf16, #tpu.memory_space<vmem>>, vector<8x512xbf16>
    tpu.vector_store %arg8[%c0_18, %c0_19], %24 {strides = array<i32>} : memref<8x512xbf16, #tpu.memory_space<vmem>>, vector<8x512xbf16>,
    return
  }
  func.func @transform_0(%arg0: i32) -> (i32, i32) {
    %c0_i32 = arith.constant 0 : i32
    %c0_i32_0 = arith.constant 0 : i32
    %c0_i32_1 = arith.constant 0 : i32
    return %c0_i32, %c0_i32_0 : i32, i32
  }
  func.func @transform_1(%arg0: i32) -> (i32, i32) {
    %c0_i32 = arith.constant 0 : i32
    %c0_i32_0 = arith.constant 0 : i32
    %c0_i32_1 = arith.constant 0 : i32
    return %c0_i32, %c0_i32_0 : i32, i32
  }
  func.func @transform_2(%arg0: i32) -> (i32, i32) {
    %c0_i32 = arith.constant 0 : i32
    %c0_i32_0 = arith.constant 0 : i32
    %c0_i32_1 = arith.constant 0 : i32
    return %c0_i32, %c0_i32_0 : i32, i32
  }
  func.func @transform_3(%arg0: i32) -> (i32, i32) {
    %c0_i32 = arith.constant 0 : i32
    %c0_i32_0 = arith.constant 0 : i32
    %c0_i32_1 = arith.constant 0 : i32
    return %c0_i32, %c0_i32_0 : i32, i32
  }
  func.func @transform_4(%arg0: i32) -> (i32, i32) {
    %c0_i32 = arith.constant 0 : i32
    %c0_i32_0 = arith.constant 0 : i32
    %c0_i32_1 = arith.constant 0 : i32
    return %c0_i32, %c0_i32_0 : i32, i32
  }
  func.func @transform_5(%arg0: i32) -> (i32, i32) {
    %c0_i32 = arith.constant 0 : i32
    %c0_i32_0 = arith.constant 0 : i32
    %c0_i32_1 = arith.constant 0 : i32
    return %c0_i32, %c0_i32_0 : i32, i32
  }
  func.func @transform_6(%arg0: i32) -> (i32, i32) {
    %c0_i32 = arith.constant 0 : i32
    %c0_i32_0 = arith.constant 0 : i32
    %c0_i32_1 = arith.constant 0 : i32
    return %c0_i32, %c0_i32_0 : i32, i32
  }
  func.func @transform_7(%arg0: i32) -> (i32, i32) {
    %c0_i32 = arith.constant 0 : i32
    %c0_i32_0 = arith.constant 0 : i32
    %c0_i32_1 = arith.constant 0 : i32
    return %c0_i32, %c0_i32_0 : i32, i32
  }
}

module attributes {stable_mosaic.version = 11 : i64} {
  func.func @_conv_gemm_kernel(%arg0: i32, %arg1: i32, %arg2: memref<1x32x128xbf16, #tpu.memory_space<vmem>>, %arg3: memref<1x128x128xbf16, #tpu.memory_space<vmem>>, %arg4: memref<32x1xf32, #tpu.memory_space<vmem>>, %arg5: memref<1x32x128xbf16, #tpu.memory_space<vmem>>) attributes {dimension_semantics = [#tpu.dimension_semantics<parallel>, #tpu.dimension_semantics<parallel>], iteration_bounds = array<i64: 4, 1>, scalar_prefetch = 0 : i64, scratch_operands = 0 : i64, tpu.core_type = #tpu.core_type<tc>, window_params = [{transform_indices = @transform_0, window_bounds = array<i64: 1, 32, 128>}, {transform_indices = @transform_1, window_bounds = array<i64: 1, 128, 128>}, {pipeline_mode = #tpu.pipeline_mode<synchronous>, transform_indices = @transform_2, window_bounds = array<i64: 32, 1>}, {transform_indices = @transform_3, window_bounds = array<i64: 1, 32, 128>}]} {
    %c0 = arith.constant 0 : index
    %c0_0 = arith.constant 0 : index
    %c0_1 = arith.constant 0 : index
    %0 = vector.load %arg2[%c0, %c0_0, %c0_1] : memref<1x32x128xbf16, #tpu.memory_space<vmem>>, vector<1x32x128xbf16>
    %1 = vector.shape_cast %0 : vector<1x32x128xbf16> to vector<32x128xbf16>
    %c0_2 = arith.constant 0 : index
    %c0_3 = arith.constant 0 : index
    %c0_4 = arith.constant 0 : index
    %2 = vector.load %arg3[%c0_2, %c0_3, %c0_4] : memref<1x128x128xbf16, #tpu.memory_space<vmem>>, vector<1x128x128xbf16>
    %3 = vector.shape_cast %2 : vector<1x128x128xbf16> to vector<128x128xbf16>
    %cst = arith.constant dense<0.000000e+00> : vector<32x128xf32>
    %4 = tpu.matmul %1, %3, %cst {dimension_numbers = #tpu.dot_dimension_numbers<[1], [0], [0], [1], [0, 0, 1, 1], [], []>} : vector<32x128xbf16>, vector<128x128xbf16>, vector<32x128xf32> -> vector<32x128xf32>
    %c0_5 = arith.constant 0 : index
    %c0_6 = arith.constant 0 : index
    %5 = vector.load %arg4[%c0_5, %c0_6] : memref<32x1xf32, #tpu.memory_space<vmem>>, vector<32x1xf32>
    %6 = vector.broadcast %5 : vector<32x1xf32> to vector<32x128xf32>
    %7 = arith.addf %4, %6 : vector<32x128xf32>
    %cst_7 = arith.constant 0.000000e+00 : f32
    %8 = vector.broadcast %cst_7 : f32 to vector<32x128xf32>
    %9 = arith.maximumf %7, %8 : vector<32x128xf32>
    %10 = arith.truncf %9 : vector<32x128xf32> to vector<32x128xbf16>
    %c0_8 = arith.constant 0 : index
    %c0_9 = arith.constant 0 : index
    %c0_10 = arith.constant 0 : index
    %11 = vector.load %arg5[%c0_8, %c0_9, %c0_10] : memref<1x32x128xbf16, #tpu.memory_space<vmem>>, vector<1x32x128xbf16>
    %12 = vector.shape_cast %11 : vector<1x32x128xbf16> to vector<32x128xbf16>
    %13 = vector.shape_cast %10 : vector<32x128xbf16> to vector<1x32x128xbf16>
    tpu.vector_store %arg5[%c0_8, %c0_9, %c0_10], %13 {strides = array<i32>} : memref<1x32x128xbf16, #tpu.memory_space<vmem>>, vector<1x32x128xbf16>,
    return
  }
  func.func @transform_0(%arg0: i32, %arg1: i32) -> (i32, i32, i32) {
    %c0_i32 = arith.constant 0 : i32
    %c0_i32_0 = arith.constant 0 : i32
    %c0_i32_1 = arith.constant 0 : i32
    return %arg0, %c0_i32, %c0_i32_0 : i32, i32, i32
  }
  func.func @transform_1(%arg0: i32, %arg1: i32) -> (i32, i32, i32) {
    %c0_i32 = arith.constant 0 : i32
    %c0_i32_0 = arith.constant 0 : i32
    return %arg0, %c0_i32, %arg1 : i32, i32, i32
  }
  func.func @transform_2(%arg0: i32, %arg1: i32) -> (i32, i32) {
    %c0_i32 = arith.constant 0 : i32
    %c0_i32_0 = arith.constant 0 : i32
    %c0_i32_1 = arith.constant 0 : i32
    return %c0_i32, %c0_i32_0 : i32, i32
  }
  func.func @transform_3(%arg0: i32, %arg1: i32) -> (i32, i32, i32) {
    %c0_i32 = arith.constant 0 : i32
    %c0_i32_0 = arith.constant 0 : i32
    return %arg0, %c0_i32, %arg1 : i32, i32, i32
  }
}

module attributes {stable_mosaic.version = 11 : i64} {
  func.func @_conv_gemm_kernel(%arg0: i32, %arg1: i32, %arg2: memref<1x32x128xbf16, #tpu.memory_space<vmem>>, %arg3: memref<1x128x512xbf16, #tpu.memory_space<vmem>>, %arg4: memref<32x1xf32, #tpu.memory_space<vmem>>, %arg5: memref<1x32x512xbf16, #tpu.memory_space<vmem>>) attributes {dimension_semantics = [#tpu.dimension_semantics<parallel>, #tpu.dimension_semantics<parallel>], iteration_bounds = array<i64: 4, 1>, scalar_prefetch = 0 : i64, scratch_operands = 0 : i64, tpu.core_type = #tpu.core_type<tc>, window_params = [{transform_indices = @transform_0, window_bounds = array<i64: 1, 32, 128>}, {transform_indices = @transform_1, window_bounds = array<i64: 1, 128, 512>}, {pipeline_mode = #tpu.pipeline_mode<synchronous>, transform_indices = @transform_2, window_bounds = array<i64: 32, 1>}, {transform_indices = @transform_3, window_bounds = array<i64: 1, 32, 512>}]} {
    %c0 = arith.constant 0 : index
    %c0_0 = arith.constant 0 : index
    %c0_1 = arith.constant 0 : index
    %0 = vector.load %arg2[%c0, %c0_0, %c0_1] : memref<1x32x128xbf16, #tpu.memory_space<vmem>>, vector<1x32x128xbf16>
    %1 = vector.shape_cast %0 : vector<1x32x128xbf16> to vector<32x128xbf16>
    %c0_2 = arith.constant 0 : index
    %c0_3 = arith.constant 0 : index
    %c0_4 = arith.constant 0 : index
    %2 = vector.load %arg3[%c0_2, %c0_3, %c0_4] : memref<1x128x512xbf16, #tpu.memory_space<vmem>>, vector<1x128x512xbf16>
    %3 = vector.shape_cast %2 : vector<1x128x512xbf16> to vector<128x512xbf16>
    %cst = arith.constant dense<0.000000e+00> : vector<32x512xf32>
    %4 = tpu.matmul %1, %3, %cst {dimension_numbers = #tpu.dot_dimension_numbers<[1], [0], [0], [1], [0, 0, 1, 1], [], []>} : vector<32x128xbf16>, vector<128x512xbf16>, vector<32x512xf32> -> vector<32x512xf32>
    %c0_5 = arith.constant 0 : index
    %c0_6 = arith.constant 0 : index
    %5 = vector.load %arg4[%c0_5, %c0_6] : memref<32x1xf32, #tpu.memory_space<vmem>>, vector<32x1xf32>
    %6 = vector.broadcast %5 : vector<32x1xf32> to vector<32x512xf32>
    %7 = arith.addf %4, %6 : vector<32x512xf32>
    %cst_7 = arith.constant 0.000000e+00 : f32
    %8 = vector.broadcast %cst_7 : f32 to vector<32x512xf32>
    %9 = arith.maximumf %7, %8 : vector<32x512xf32>
    %10 = arith.truncf %9 : vector<32x512xf32> to vector<32x512xbf16>
    %c0_8 = arith.constant 0 : index
    %c0_9 = arith.constant 0 : index
    %c0_10 = arith.constant 0 : index
    %11 = vector.load %arg5[%c0_8, %c0_9, %c0_10] : memref<1x32x512xbf16, #tpu.memory_space<vmem>>, vector<1x32x512xbf16>
    %12 = vector.shape_cast %11 : vector<1x32x512xbf16> to vector<32x512xbf16>
    %13 = vector.shape_cast %10 : vector<32x512xbf16> to vector<1x32x512xbf16>
    tpu.vector_store %arg5[%c0_8, %c0_9, %c0_10], %13 {strides = array<i32>} : memref<1x32x512xbf16, #tpu.memory_space<vmem>>, vector<1x32x512xbf16>,
    return
  }
  func.func @transform_0(%arg0: i32, %arg1: i32) -> (i32, i32, i32) {
    %c0_i32 = arith.constant 0 : i32
    %c0_i32_0 = arith.constant 0 : i32
    %c0_i32_1 = arith.constant 0 : i32
    return %arg0, %c0_i32, %c0_i32_0 : i32, i32, i32
  }
  func.func @transform_1(%arg0: i32, %arg1: i32) -> (i32, i32, i32) {
    %c0_i32 = arith.constant 0 : i32
    %c0_i32_0 = arith.constant 0 : i32
    return %arg0, %c0_i32, %arg1 : i32, i32, i32
  }
  func.func @transform_2(%arg0: i32, %arg1: i32) -> (i32, i32) {
    %c0_i32 = arith.constant 0 : i32
    %c0_i32_0 = arith.constant 0 : i32
    %c0_i32_1 = arith.constant 0 : i32
    return %c0_i32, %c0_i32_0 : i32, i32
  }
  func.func @transform_3(%arg0: i32, %arg1: i32) -> (i32, i32, i32) {
    %c0_i32 = arith.constant 0 : i32
    %c0_i32_0 = arith.constant 0 : i32
    return %arg0, %c0_i32, %arg1 : i32, i32, i32
  }
}

module attributes {stable_mosaic.version = 11 : i64} {
  func.func @_conv_gemm_kernel(%arg0: i32, %arg1: i32, %arg2: memref<1x1x128xbf16, #tpu.memory_space<vmem>>, %arg3: memref<1x128x512xbf16, #tpu.memory_space<vmem>>, %arg4: memref<1x1xf32, #tpu.memory_space<vmem>>, %arg5: memref<1x1x512xf32, #tpu.memory_space<vmem>>) attributes {dimension_semantics = [#tpu.dimension_semantics<parallel>, #tpu.dimension_semantics<parallel>], iteration_bounds = array<i64: 4, 4>, scalar_prefetch = 0 : i64, scratch_operands = 0 : i64, tpu.core_type = #tpu.core_type<tc>, window_params = [{transform_indices = @transform_0, window_bounds = array<i64: 1, 1, 128>}, {transform_indices = @transform_1, window_bounds = array<i64: 1, 128, 512>}, {pipeline_mode = #tpu.pipeline_mode<synchronous>, transform_indices = @transform_2, window_bounds = array<i64: 1, 1>}, {transform_indices = @transform_3, window_bounds = array<i64: 1, 1, 512>}]} {
    %c0 = arith.constant 0 : index
    %c0_0 = arith.constant 0 : index
    %c0_1 = arith.constant 0 : index
    %0 = vector.load %arg2[%c0, %c0_0, %c0_1] : memref<1x1x128xbf16, #tpu.memory_space<vmem>>, vector<1x1x128xbf16>
    %1 = vector.shape_cast %0 : vector<1x1x128xbf16> to vector<1x128xbf16>
    %c0_2 = arith.constant 0 : index
    %c0_3 = arith.constant 0 : index
    %c0_4 = arith.constant 0 : index
    %2 = vector.load %arg3[%c0_2, %c0_3, %c0_4] : memref<1x128x512xbf16, #tpu.memory_space<vmem>>, vector<1x128x512xbf16>
    %3 = vector.shape_cast %2 : vector<1x128x512xbf16> to vector<128x512xbf16>
    %cst = arith.constant dense<0.000000e+00> : vector<1x512xf32>
    %4 = tpu.matmul %1, %3, %cst {dimension_numbers = #tpu.dot_dimension_numbers<[1], [0], [0], [1], [0, 0, 1, 1], [], []>} : vector<1x128xbf16>, vector<128x512xbf16>, vector<1x512xf32> -> vector<1x512xf32>
    %c0_5 = arith.constant 0 : index
    %c0_6 = arith.constant 0 : index
    %5 = vector.load %arg4[%c0_5, %c0_6] : memref<1x1xf32, #tpu.memory_space<vmem>>, vector<1x1xf32>
    %6 = vector.broadcast %5 : vector<1x1xf32> to vector<1x512xf32>
    %7 = arith.addf %4, %6 : vector<1x512xf32>
    %c0_7 = arith.constant 0 : index
    %c0_8 = arith.constant 0 : index
    %c0_9 = arith.constant 0 : index
    %8 = vector.load %arg5[%c0_7, %c0_8, %c0_9] : memref<1x1x512xf32, #tpu.memory_space<vmem>>, vector<1x1x512xf32>
    %9 = vector.shape_cast %8 : vector<1x1x512xf32> to vector<1x512xf32>
    %10 = vector.shape_cast %7 : vector<1x512xf32> to vector<1x1x512xf32>
    tpu.vector_store %arg5[%c0_7, %c0_8, %c0_9], %10 {strides = array<i32>} : memref<1x1x512xf32, #tpu.memory_space<vmem>>, vector<1x1x512xf32>,
    return
  }
  func.func @transform_0(%arg0: i32, %arg1: i32) -> (i32, i32, i32) {
    %c0_i32 = arith.constant 0 : i32
    %c0_i32_0 = arith.constant 0 : i32
    %c0_i32_1 = arith.constant 0 : i32
    return %arg0, %c0_i32, %c0_i32_0 : i32, i32, i32
  }
  func.func @transform_1(%arg0: i32, %arg1: i32) -> (i32, i32, i32) {
    %c0_i32 = arith.constant 0 : i32
    %c0_i32_0 = arith.constant 0 : i32
    return %arg0, %c0_i32, %arg1 : i32, i32, i32
  }
  func.func @transform_2(%arg0: i32, %arg1: i32) -> (i32, i32) {
    %c0_i32 = arith.constant 0 : i32
    %c0_i32_0 = arith.constant 0 : i32
    %c0_i32_1 = arith.constant 0 : i32
    return %c0_i32, %c0_i32_0 : i32, i32
  }
  func.func @transform_3(%arg0: i32, %arg1: i32) -> (i32, i32, i32) {
    %c0_i32 = arith.constant 0 : i32
    %c0_i32_0 = arith.constant 0 : i32
    return %arg0, %c0_i32, %arg1 : i32, i32, i32
  }
}

module attributes {stable_mosaic.version = 11 : i64} {
  func.func @_loss_kernel(%arg0: i32, %arg1: memref<64x128xf32, #tpu.memory_space<vmem>>, %arg2: memref<64x128xf32, #tpu.memory_space<vmem>>, %arg3: memref<2x5xf32, #tpu.memory_space<vmem>>, %arg4: memref<2x5xf32, #tpu.memory_space<vmem>>, %arg5: memref<1x1xf32, #tpu.memory_space<vmem>>, %arg6: memref<1x1xf32, #tpu.memory_space<vmem>>, %arg7: memref<1x1xf32, #tpu.memory_space<vmem>>) attributes {dimension_semantics = [#tpu.dimension_semantics<arbitrary>], iteration_bounds = array<i64: 1>, scalar_prefetch = 0 : i64, scratch_operands = 1 : i64, tpu.core_type = #tpu.core_type<tc>, window_params = [{transform_indices = @transform_0, window_bounds = array<i64: 64, 128>}, {transform_indices = @transform_1, window_bounds = array<i64: 64, 128>}, {pipeline_mode = #tpu.pipeline_mode<synchronous>, transform_indices = @transform_2, window_bounds = array<i64: 2, 5>}, {pipeline_mode = #tpu.pipeline_mode<synchronous>, transform_indices = @transform_3, window_bounds = array<i64: 2, 5>}, {pipeline_mode = #tpu.pipeline_mode<synchronous>, transform_indices = @transform_4, window_bounds = array<i64: 1, 1>}, {pipeline_mode = #tpu.pipeline_mode<synchronous>, transform_indices = @transform_5, window_bounds = array<i64: 1, 1>}]} {
    %c0_i32 = arith.constant 0 : i32
    %0 = arith.cmpi eq, %arg0, %c0_i32 : i32
    %1 = arith.extui %0 : i1 to i32
    %c0_i32_0 = arith.constant 0 : i32
    %2 = arith.cmpi ne, %1, %c0_i32_0 : i32
    scf.if %2 {
      %cst_13 = arith.constant 0.000000e+00 : f32
      %28 = vector.broadcast %cst_13 : f32 to vector<1x1xf32>
      %c0_14 = arith.constant 0 : index
      %c0_15 = arith.constant 0 : index
      %29 = vector.load %arg7[%c0_14, %c0_15] : memref<1x1xf32, #tpu.memory_space<vmem>>, vector<1x1xf32>
      tpu.vector_store %arg7[%c0_14, %c0_15], %28 {strides = array<i32>} : memref<1x1xf32, #tpu.memory_space<vmem>>, vector<1x1xf32>,
    } else {
    }
    %c0 = arith.constant 0 : index
    %c0_1 = arith.constant 0 : index
    %3 = vector.load %arg1[%c0, %c0_1] : memref<64x128xf32, #tpu.memory_space<vmem>>, vector<64x128xf32>
    %c0_2 = arith.constant 0 : index
    %c0_3 = arith.constant 0 : index
    %4 = vector.load %arg2[%c0_2, %c0_3] : memref<64x128xf32, #tpu.memory_space<vmem>>, vector<64x128xf32>
    %cst = arith.constant 0.000000e+00 : f32
    %5 = vector.broadcast %cst : f32 to vector<64x128xf32>
    %6 = arith.maximumf %3, %5 : vector<64x128xf32>
    %7 = arith.mulf %3, %4 : vector<64x128xf32>
    %8 = arith.subf %6, %7 : vector<64x128xf32>
    %9 = math.absf %3 : vector<64x128xf32>
    %cst_4 = arith.constant 0.000000e+00 : f32
    %10 = vector.broadcast %cst_4 : f32 to vector<64x128xf32>
    %11 = arith.subf %10, %9 : vector<64x128xf32>
    %12 = math.exp %11 : vector<64x128xf32>
    %cst_5 = arith.constant 1.000000e+00 : f32
    %13 = vector.broadcast %cst_5 : f32 to vector<64x128xf32>
    %14 = arith.addf %13, %12 : vector<64x128xf32>
    %15 = math.log %14 : vector<64x128xf32>
    %16 = arith.addf %8, %15 : vector<64x128xf32>
    %c0_6 = arith.constant 0 : index
    %c0_7 = arith.constant 0 : index
    %17 = vector.load %arg7[%c0_6, %c0_7] : memref<1x1xf32, #tpu.memory_space<vmem>>, vector<1x1xf32>
    %18 = vector.shape_cast %16 : vector<64x128xf32> to vector<1x64x128xf32>
    %cst_8 = arith.constant dense<0.000000e+00> : vector<1xf32>
    %19 = vector.multi_reduction <add>, %18, %cst_8 [1, 2] : vector<1x64x128xf32> to vector<1xf32>
    %20 = vector.shape_cast %19 : vector<1xf32> to vector<1x1x1xf32>
    %21 = vector.extract %20[0, 0, 0] : f32 from vector<1x1x1xf32>
    %22 = vector.broadcast %21 : f32 to vector<1x1xf32>
    %23 = arith.addf %17, %22 : vector<1x1xf32>
    %c0_9 = arith.constant 0 : index
    %c0_10 = arith.constant 0 : index
    %24 = vector.load %arg7[%c0_9, %c0_10] : memref<1x1xf32, #tpu.memory_space<vmem>>, vector<1x1xf32>
    tpu.vector_store %arg7[%c0_9, %c0_10], %23 {strides = array<i32>} : memref<1x1xf32, #tpu.memory_space<vmem>>, vector<1x1xf32>,
    %c0_i32_11 = arith.constant 0 : i32
    %25 = arith.cmpi eq, %arg0, %c0_i32_11 : i32
    %26 = arith.extui %25 : i1 to i32
    %c0_i32_12 = arith.constant 0 : i32
    %27 = arith.cmpi ne, %26, %c0_i32_12 : i32
    scf.if %27 {
      %c0_13 = arith.constant 0 : index
      %c0_14 = arith.constant 0 : index
      %28 = vector.load %arg7[%c0_13, %c0_14] : memref<1x1xf32, #tpu.memory_space<vmem>>, vector<1x1xf32>
      %c0_15 = arith.constant 0 : index
      %c0_16 = arith.constant 0 : index
      %29 = vector.load %arg5[%c0_15, %c0_16] : memref<1x1xf32, #tpu.memory_space<vmem>>, vector<1x1xf32>
      tpu.vector_store %arg5[%c0_15, %c0_16], %28 {strides = array<i32>} : memref<1x1xf32, #tpu.memory_space<vmem>>, vector<1x1xf32>,
      %c0_17 = arith.constant 0 : index
      %c0_18 = arith.constant 0 : index
      %30 = vector.load %arg3[%c0_17, %c0_18] : memref<2x5xf32, #tpu.memory_space<vmem>>, vector<2x5xf32>
      %c0_19 = arith.constant 0 : index
      %c0_20 = arith.constant 0 : index
      %31 = vector.load %arg4[%c0_19, %c0_20] : memref<2x5xf32, #tpu.memory_space<vmem>>, vector<2x5xf32>
      %cst_21 = arith.constant 1.000000e+00 : f32
      %32 = vector.broadcast %cst_21 : f32 to vector<2x5xf32>
      %33 = arith.addf %32, %31 : vector<2x5xf32>
      %34 = arith.mulf %30, %30 : vector<2x5xf32>
      %35 = arith.subf %33, %34 : vector<2x5xf32>
      %36 = math.exp %31 : vector<2x5xf32>
      %37 = arith.subf %35, %36 : vector<2x5xf32>
      %38 = vector.shape_cast %37 : vector<2x5xf32> to vector<1x2x5xf32>
      %cst_22 = arith.constant dense<0.000000e+00> : vector<1xf32>
      %39 = vector.multi_reduction <add>, %38, %cst_22 [1, 2] : vector<1x2x5xf32> to vector<1xf32>
      %40 = vector.shape_cast %39 : vector<1xf32> to vector<1x1x1xf32>
      %41 = vector.extract %40[0, 0, 0] : f32 from vector<1x1x1xf32>
      %42 = vector.broadcast %41 : f32 to vector<1x1xf32>
      %cst_23 = arith.constant -5.000000e-01 : f32
      %43 = vector.broadcast %cst_23 : f32 to vector<1x1xf32>
      %44 = arith.mulf %43, %42 : vector<1x1xf32>
      %c0_24 = arith.constant 0 : index
      %c0_25 = arith.constant 0 : index
      %45 = vector.load %arg6[%c0_24, %c0_25] : memref<1x1xf32, #tpu.memory_space<vmem>>, vector<1x1xf32>
      tpu.vector_store %arg6[%c0_24, %c0_25], %44 {strides = array<i32>} : memref<1x1xf32, #tpu.memory_space<vmem>>, vector<1x1xf32>,
    } else {
    }
    return
  }
  func.func @transform_0(%arg0: i32) -> (i32, i32) {
    %c0_i32 = arith.constant 0 : i32
    %c0_i32_0 = arith.constant 0 : i32
    return %arg0, %c0_i32 : i32, i32
  }
  func.func @transform_1(%arg0: i32) -> (i32, i32) {
    %c0_i32 = arith.constant 0 : i32
    %c0_i32_0 = arith.constant 0 : i32
    return %arg0, %c0_i32 : i32, i32
  }
  func.func @transform_2(%arg0: i32) -> (i32, i32) {
    %c0_i32 = arith.constant 0 : i32
    %c0_i32_0 = arith.constant 0 : i32
    %c0_i32_1 = arith.constant 0 : i32
    return %c0_i32, %c0_i32_0 : i32, i32
  }
  func.func @transform_3(%arg0: i32) -> (i32, i32) {
    %c0_i32 = arith.constant 0 : i32
    %c0_i32_0 = arith.constant 0 : i32
    %c0_i32_1 = arith.constant 0 : i32
    return %c0_i32, %c0_i32_0 : i32, i32
  }
  func.func @transform_4(%arg0: i32) -> (i32, i32) {
    %c0_i32 = arith.constant 0 : i32
    %c0_i32_0 = arith.constant 0 : i32
    %c0_i32_1 = arith.constant 0 : i32
    return %c0_i32, %c0_i32_0 : i32, i32
  }
  func.func @transform_5(%arg0: i32) -> (i32, i32) {
    %c0_i32 = arith.constant 0 : i32
    %c0_i32_0 = arith.constant 0 : i32
    %c0_i32_1 = arith.constant 0 : i32
    return %c0_i32, %c0_i32_0 : i32, i32
  }
}

</mosaic_0001>

<llo_original>
// kernel: vae_forward.11
$region0: #{vae_forward.11}
  #allocation0 [shape = 'u32[]', space=smem, size = 0x4, offset = 0x4, fixed_abs, tag = 'smem constant byte address 0x4 - core index']
  #allocation1 [shape = 'u32[72,128]{1,0:T(1,128)}', space=vmem, size = 0x9000, scoped, tag = 'internal scratch']
  %s0 = inlined_call_operand.vmem [shape: bf16[1,32,16], index: 0, kind: input, shape index: {}]
  %s1 = inlined_call_operand.vmem [shape: bf16[1,16,2048], index: 1, kind: input, shape index: {}]
  %s2 = inlined_call_operand.vmem [shape: f32[32,1], index: 2, kind: input, shape index: {}]
  %s3 = inlined_call_operand.vmem [shape: bf16[1,32,2048], index: 3, kind: output, shape index: {}]
  %s4 = sld [smem:[#allocation0]]
  $region87: #{vae_forward.11} parent=0
    _
  %s6 = ssub.s32 1, %s4
  %s7 = scalar_select 0, %s6, %s4
  $region1: #{vae_forward.11} parent=0
    #allocation2 [shape = 'u8[32768]{0}', space=vmem, size = 0x8000, scoped, tag = 'input window, operand 1']
    #allocation3 [shape = 'u8[65536]{0}', space=vmem, size = 0x10000, scoped, tag = 'output window, operand 0']
    loop: start=0, step=1, limit=6
    $region2: #{vae_forward.11} parent=1 // loop_pre_header
      _
    $region3: #{vae_forward.11} parent=1 // loop_header
      %s9 = sphi 0, %s13
      %p10 = scmp.ge.s32.totalorder %s9, 6
      %s16 = sphi 0, %s28
      %s17 = sphi 0, %s24
      %s18 = sphi 0, %s16
      %s19 = sphi 0, %s17
      %s20 = sphi 0, %s18
      %s21 = sphi 0, %s19
      %s31 = sphi 0, %s33
      %s34 = sphi 0, %s31
      %s35 = sphi 0, %s34
      %s51 = sphi 0, %s35
      %s59 = sphi 0, %s61
      %s62 = sphi 0, %s59
      %s63 = sphi 0, %s62
      %s79 = sphi 0, %s63
      %s83 = sphi 0, %s83
      %s85 = sphi 0, %s83
      %s86 = sphi 0, %s85
      %s100 = sphi 0, %s86
      %s108 = sphi 0, %s110
      %s111 = sphi 0, %s108
      %s112 = sphi 0, %s111
      %s128 = sphi 0, %s112
    $region4: #{vae_forward.11} parent=1 // loop_header_branch
      %12 = sbr.rel (%p10) target = $region8
    $region5: #{vae_forward.11} parent=1 // loop_body
      %s14 = ssub.s32 %s9, 1
      %s15 = ssub.s32 %s9, 2
      %s22 = sadd.s32 1, %s17
      %p23 = scmp.ge.s32.totalorder %s22, 4
      %s24 = scalar_select %p23, 0, %s22
      %s25 = sadd.s32 1, %s16
      %s26 = scalar_select %p23, %s25, %s16
      %p27 = scmp.ge.s32.totalorder %s26, 1
      %s28 = scalar_select %p27, 0, %s26
      %s29 = ssub.s32 %s16, %s28
      %p30 = scmp.eq.s32.totalorder %s29, 0
      %s32 = sadd.s32 %s31, 1
      %s33 = scalar_select %p30, %s31, %s32
      %p36 = pneg %p30
      %p37 = scmp.eq.s32.totalorder %s9, 3
      %p38 = por %p36, %p37
      %p39 = scmp.ne.s32.totalorder %s31, %s34
      %p40 = scmp.eq.s32.totalorder %s9, 0
      %p41 = por %p39, %p40
      %p42 = scmp.ne.s32.totalorder %s31, %s34
      %p43 = scmp.eq.s32.totalorder %s14, 3
      %p44 = por %p42, %p43
      %p45 = scmp.ne.s32.totalorder %s34, %s35
      %p46 = scmp.eq.s32.totalorder %s14, 0
      %p47 = por %p45, %p46
      %p48 = scmp.ne.s32.totalorder %s34, %s35
      %p49 = scmp.eq.s32.totalorder %s15, 3
      %p50 = por %p48, %p49
      %p52 = scmp.ne.s32.totalorder %s35, %s51
      %p53 = scmp.eq.s32.totalorder %s15, 0
      %p54 = por %p52, %p53
      %s55 = ssub.s32 %s16, %s28
      %s56 = ssub.s32 %s17, %s24
      %s57 = sor.u32 %s55, %s56
      %p58 = scmp.eq.s32.totalorder %s57, 0
      %s60 = sadd.s32 %s59, 1
      %s61 = scalar_select %p58, %s59, %s60
      %p64 = pneg %p58
      %p65 = scmp.eq.s32.totalorder %s9, 3
      %p66 = por %p64, %p65
      %p67 = scmp.ne.s32.totalorder %s59, %s62
      %p68 = scmp.eq.s32.totalorder %s9, 0
      %p69 = por %p67, %p68
      %p70 = scmp.ne.s32.totalorder %s59, %s62
      %p71 = scmp.eq.s32.totalorder %s14, 3
      %p72 = por %p70, %p71
      %p73 = scmp.ne.s32.totalorder %s62, %s63
      %p74 = scmp.eq.s32.totalorder %s14, 0
      %p75 = por %p73, %p74
      %p76 = scmp.ne.s32.totalorder %s62, %s63
      %p77 = scmp.eq.s32.totalorder %s15, 3
      %p78 = por %p76, %p77
      %p80 = scmp.ne.s32.totalorder %s63, %s79
      %p81 = scmp.eq.s32.totalorder %s15, 0
      %p82 = por %p80, %p81
      %s84 = sadd.s32 %s83, 1
      %p87 = scmp.eq.s32.totalorder %s9, 3
      %p88 = scmp.ne.s32.totalorder %s83, %s85
      %p89 = scmp.eq.s32.totalorder %s9, 0
      %p90 = por %p88, %p89
      %p91 = scmp.ne.s32.totalorder %s83, %s85
      %p92 = scmp.eq.s32.totalorder %s14, 3
      %p93 = por %p91, %p92
      %p94 = scmp.ne.s32.totalorder %s85, %s86
      %p95 = scmp.eq.s32.totalorder %s14, 0
      %p96 = por %p94, %p95
      %p97 = scmp.ne.s32.totalorder %s85, %s86
      %p98 = scmp.eq.s32.totalorder %s15, 3
      %p99 = por %p97, %p98
      %p101 = scmp.ne.s32.totalorder %s86, %s100
      %p102 = scmp.eq.s32.totalorder %s15, 0
      %p103 = por %p101, %p102
      %s104 = ssub.s32 %s16, %s28
      %s105 = ssub.s32 %s17, %s24
      %s106 = sor.u32 %s104, %s105
      %p107 = scmp.eq.s32.totalorder %s106, 0
      %s109 = sadd.s32 %s108, 1
      %s110 = scalar_select %p107, %s108, %s109
      %p113 = pneg %p107
      %p114 = scmp.eq.s32.totalorder %s9, 3
      %p115 = por %p113, %p114
      %p116 = scmp.ne.s32.totalorder %s108, %s111
      %p117 = scmp.eq.s32.totalorder %s9, 0
      %p118 = por %p116, %p117
      %p119 = scmp.ne.s32.totalorder %s108, %s111
      %p120 = scmp.eq.s32.totalorder %s14, 3
      %p121 = por %p119, %p120
      %p122 = scmp.ne.s32.totalorder %s111, %s112
      %p123 = scmp.eq.s32.totalorder %s14, 0
      %p124 = por %p122, %p123
      %p125 = scmp.ne.s32.totalorder %s111, %s112
      %p126 = scmp.eq.s32.totalorder %s15, 3
      %p127 = por %p125, %p126
      %p129 = scmp.ne.s32.totalorder %s112, %s128
      %p130 = scmp.eq.s32.totalorder %s15, 0
      %p131 = por %p129, %p130
      %p132 = scmp.le.s32.totalorder 1, %s9
      %p133 = scmp.lt.s32.totalorder %s9, 5
      %p134 = pnand %p132, %p133
      %p135 = pneg %p134
      // Predicated region
      $region9: #{vae_forward.11} parent=5 // pred_check
        _
      $region10: #{vae_forward.11} parent=5 // pred_check_branch
        %137 = sbr.rel (%p134) target = $region12
      $region11: #{vae_forward.11} parent=5 // pred_region
        %s138 = ssub.s32 %s9, 1
        // Predicated region
        $region13: #{vae_forward.11} parent=11 // pred_check
          %p139 = pneg %p47
        $region14: #{vae_forward.11} parent=11 // pred_check_branch
          %141 = sbr.rel (%p139) target = $region16
        $region15: #{vae_forward.11} parent=11 // pred_region
          %p142 = scmp.lt.s32.totalorder %s18, 0
          %s143 = scalar_select %p142, %s18, 0
          %s144 = smul.addr %s143, 4
          %s145 = smul.addr %s144, 4
          %s146 = scalar_lea.vmem %s0, %s145
        $region16: #{vae_forward.11} parent=11 // pred_fallthru
          _
        // Predicated region
        $region17: #{vae_forward.11} parent=11 // pred_check
          %p147 = pneg %p96
        $region18: #{vae_forward.11} parent=11 // pred_check_branch
          %149 = sbr.rel (%p147) target = $region20
        $region19: #{vae_forward.11} parent=11 // pred_region
          _
        $region20: #{vae_forward.11} parent=11 // pred_fallthru
          _
      $region12: #{vae_forward.11} parent=5 // pred_fallthru
        _
      %p150 = scmp.lt.s32.totalorder %s9, 4
      // Predicated region
      $region21: #{vae_forward.11} parent=5 // pred_check
        %p151 = pneg %p150
      $region22: #{vae_forward.11} parent=5 // pred_check_branch
        %153 = sbr.rel (%p151) target = $region24
      $region23: #{vae_forward.11} parent=5 // pred_region
        // Predicated region
        $region25: #{vae_forward.11} parent=23 // pred_check
          %p154 = pneg %p69
        $region26: #{vae_forward.11} parent=23 // pred_check_branch
          %156 = sbr.rel (%p154) target = $region28
        $region27: #{vae_forward.11} parent=23 // pred_region
          %s157 = sand.u32 %s59, 1
          %s158 = sand.u32 %s59, 1
          %s159 = smul.addr %s158, 32
          %s160 = scalar_lea.vmem [#allocation2], %s159
          %s161 = smul.u32 4, %s17
          %s162 = smul.addr %s16, 32
          %s163 = sadd.s32 %s161, %s162
          %s164 = smul.addr %s163, 4
          %s165 = scalar_lea.vmem %s1, %s164
          // Predicated region
          $region29: #{vae_forward.11} parent=27 // pred_check
            _
          $region30: #{vae_forward.11} parent=27 // pred_check_branch
            %167 = sbr.rel (0) target = $region32
          $region31: #{vae_forward.11} parent=27 // pred_region
            // Predicated region
            $region33: #{vae_forward.11} parent=31 // pred_check
              _
            $region34: #{vae_forward.11} parent=31 // pred_check_branch
              %169 = sbr.rel (0) target = $region36
            $region35: #{vae_forward.11} parent=31 // pred_region
              loop: start=0, step=1, limit=1
              $region37: #{vae_forward.11} parent=35 // loop_pre_header
                _
              $region38: #{vae_forward.11} parent=35 // loop_header
                %s171 = sphi 0, %s175
                %p172 = scmp.ge.s32.totalorder %s171, 1
                %s176 = sphi %s165, %s165
                %s177 = sphi %s160, %s160
              $region39: #{vae_forward.11} parent=35 // loop_header_branch
                %174 = sbr.rel (%p172) target = $region43
              $region40: #{vae_forward.11} parent=35 // loop_body
                %v178 = vld [vmem:[%s176] sm:$0xff]
                %179 = vst [vmem:[%s177] sm:$0xff] %v178
                %v180 = vld [vmem:[%s176 + $0x8] sm:$0xff]
                %181 = vst [vmem:[%s177 + $0x8] sm:$0xff] %v180
                %v182 = vld [vmem:[%s176 + $0x40] sm:$0xff]
                %183 = vst [vmem:[%s177 + $0x10] sm:$0xff] %v182
                %v184 = vld [vmem:[%s176 + $0x48] sm:$0xff]
                %185 = vst [vmem:[%s177 + $0x18] sm:$0xff] %v184
              $region41: #{vae_forward.11} parent=35 // loop_footer
                %s175 = sadd.s32 1, %s171
              $region42: #{vae_forward.11} parent=35 // loop_footer_branch
                %170 = sbr.rel target = $region38
              $region43: #{vae_forward.11} parent=35 // loop_exit
                _
            $region36: #{vae_forward.11} parent=31 // pred_fallthru
              _
            // Predicated region
            $region44: #{vae_forward.11} parent=31 // pred_check
              _
            $region45: #{vae_forward.11} parent=31 // pred_check_branch
              %187 = sbr.rel target = $region47
            $region46: #{vae_forward.11} parent=31 // pred_region
              _
            $region47: #{vae_forward.11} parent=31 // pred_fallthru
              _
          $region32: #{vae_forward.11} parent=27 // pred_fallthru
            _
          %188 = vnop
        $region28: #{vae_forward.11} parent=23 // pred_fallthru
          _
      $region24: #{vae_forward.11} parent=5 // pred_fallthru
        _
      %p189 = scmp.le.s32.totalorder 1, %s9
      %p190 = scmp.lt.s32.totalorder %s9, 5
      %p191 = pnand %p189, %p190
      %p192 = pneg %p191
      // Predicated region
      $region48: #{vae_forward.11} parent=5 // pred_check
        _
      $region49: #{vae_forward.11} parent=5 // pred_check_branch
        %194 = sbr.rel (%p191) target = $region51
      $region50: #{vae_forward.11} parent=5 // pred_region
        %s195 = ssub.s32 %s9, 1
        %s196 = sand.u32 %s62, 1
        %s197 = sand.u32 %s62, 1
        %s198 = smul.addr %s197, 32
        %s199 = scalar_lea.vmem [#allocation2], %s198
        // Predicated region
        $region52: #{vae_forward.11} parent=50 // pred_check
          %p200 = pneg %p75
        $region53: #{vae_forward.11} parent=50 // pred_check_branch
          %202 = sbr.rel (%p200) target = $region55
        $region54: #{vae_forward.11} parent=50 // pred_region
          _
        $region55: #{vae_forward.11} parent=50 // pred_fallthru
          _
        %p203 = scmp.lt.s32.totalorder %s18, 0
        %s204 = scalar_select %p203, %s18, 0
        %s205 = smul.addr %s204, 4
        %s206 = smul.addr %s205, 4
        %s207 = scalar_lea.vmem %s0, %s206
        %p208 = pneg %p47
        %p209 = pneg %p44
        %s210 = sand.u32 %s62, 1
        %s211 = sand.u32 %s62, 1
        %s212 = smul.addr %s211, 32
        %s213 = scalar_lea.vmem [#allocation2], %s212
        %p214 = pneg %p75
        %p215 = pneg %p72
        %p216 = pneg %p96
        %p217 = pneg %p93
        %p218 = pneg %p124
        %p219 = pneg %p121
        %s220 = sand.u32 %s111, 1
        %s221 = sand.u32 %s111, 1
        %s222 = smul.addr %s221, 64
        %s223 = scalar_lea.vmem [#allocation3], %s222
        %p224 = scmp.lt.s32.totalorder %s18, 0
        %s225 = scalar_select %p224, %s18, 0
        %s226 = smul.addr %s225, 4
        %s227 = smul.addr %s226, 4
        %s228 = scalar_lea.vmem %s0, %s227
        %s229 = smul.u32 4, %s19
        %s230 = smul.u32 4, %s19
        %v232 = vld [vmem:[%s228] sm:$0xf]
        %v233 = vld [vmem:[%s228 + $0x4] sm:$0xf]
        %v234 = vld [vmem:[%s228 + $0x8] sm:$0xf]
        %v235 = vld [vmem:[%s228 + $0xc] sm:$0xf]
        %v236 = vld [vmem:[%s199] sm:$0xff]
        %v237 = vld [vmem:[%s199 + $0x8] sm:$0xff]
        %v238 = vld [vmem:[%s199 + $0x10] sm:$0xff]
        %v239 = vld [vmem:[%s199 + $0x18] sm:$0xff]
        %v240 = vld [vmem:[%s2] sm:$0xff]
        %v241 = vld [vmem:[%s2 + $0x8] sm:$0xff]
        %v242 = vld [vmem:[%s2 + $0x10] sm:$0xff]
        %v243 = vld [vmem:[%s2 + $0x18] sm:$0xff]
        %245 = vset.pattern.permute.xlu0 0
        %246 = vperm.xlu0 %245, %v240
        %v247 = vpop.permute.xlu0 %246
        %250 = vset.pattern.permute.xlu0 0
        %251 = vperm.xlu0 %250, %v241
        %v252 = vpop.permute.xlu0 %251
        %255 = vset.pattern.permute.xlu0 0
        %256 = vperm.xlu0 %255, %v242
        %v257 = vpop.permute.xlu0 %256
        %260 = vset.pattern.permute.xlu0 0
        %261 = vperm.xlu0 %260, %v243
        %v262 = vpop.permute.xlu0 %261
        %v268 = vunpack.c.l.b16 %v232
        %v269 = vunpack.c.l.b16 %v233
        %v270 = vunpack.c.l.b16 %v234
        %v271 = vunpack.c.l.b16 %v235
        %v272 = vpack.c.b16 %v269, %v268
        %v273 = vpack.c.b16 %v271, %v270
        %v278 = vunpack.c.l.b16 %v236
        %v279 = vunpack.c.h.b16 %v236
        %v280 = vunpack.c.l.b16 %v237
        %v281 = vunpack.c.h.b16 %v237
        %v282 = vunpack.c.l.b16 %v238
        %v283 = vunpack.c.h.b16 %v238
        %v284 = vunpack.c.l.b16 %v239
        %v285 = vunpack.c.h.b16 %v239
        %v286 = vpack.c.b16 %v282, %v278
        %v287 = vpack.c.b16 %v283, %v279
        %v288 = vpack.c.b16 %v284, %v280
        %v289 = vpack.c.b16 %v285, %v281
        %vm294 = vcmask 130048
        %v296 = vsel %vm294, %v272, 0
        %v299 = vsel %vm294, %v273, 0
        %301 = vmatpush.bf16.msra.mxu0 0
        %302 = vmatpush.bf16.msra.mxu0 0
        %303 = vmatpush.bf16.msra.mxu0 0
        %304 = vmatpush.bf16.msra.mxu0 0
        %305 = vmatpush.bf16.msra.mxu0 0
        %306 = vmatpush.bf16.msra.mxu0 0
        %307 = vmatpush.bf16.msra.mxu0 0
        %308 = vmatpush.bf16.msra.mxu0 %v286
        %309 = vmatmul.bf16.gmra.mxu0 %v296
        %v310 = vpop.f32.mrf.mxu0
        %v311 = vadd.f32 %v247, %v310
        %v312 = vpop.f32.mrf.mxu0
        %v313 = vadd.f32 %v252, %v312
        %314 = vmatmul.bf16.gmra.mxu0 %v299
        %v315 = vpop.f32.mrf.mxu0
        %v316 = vadd.f32 %v257, %v315
        %v317 = vpop.f32.mrf.mxu0
        %v318 = vadd.f32 %v262, %v317
        %319 = vdwg.mxu0
        %320 = vmatpush.bf16.msra.mxu0 0
        %321 = vmatpush.bf16.msra.mxu0 0
        %322 = vmatpush.bf16.msra.mxu0 0
        %323 = vmatpush.bf16.msra.mxu0 0
        %324 = vmatpush.bf16.msra.mxu0 0
        %325 = vmatpush.bf16.msra.mxu0 0
        %326 = vmatpush.bf16.msra.mxu0 0
        %327 = vmatpush.bf16.msra.mxu0 %v287
        %328 = vmatmul.bf16.gmra.mxu0 %v296
        %v329 = vpop.f32.mrf.mxu0
        %v330 = vadd.f32 %v247, %v329
        %v331 = vpop.f32.mrf.mxu0
        %v332 = vadd.f32 %v252, %v331
        %333 = vmatmul.bf16.gmra.mxu0 %v299
        %v334 = vpop.f32.mrf.mxu0
        %v335 = vadd.f32 %v257, %v334
        %v336 = vpop.f32.mrf.mxu0
        %v337 = vadd.f32 %v262, %v336
        %338 = vdwg.mxu0
        %339 = vmatpush.bf16.msra.mxu0 0
        %340 = vmatpush.bf16.msra.mxu0 0
        %341 = vmatpush.bf16.msra.mxu0 0
        %342 = vmatpush.bf16.msra.mxu0 0
        %343 = vmatpush.bf16.msra.mxu0 0
        %344 = vmatpush.bf16.msra.mxu0 0
        %345 = vmatpush.bf16.msra.mxu0 0
        %346 = vmatpush.bf16.msra.mxu0 %v288
        %347 = vmatmul.bf16.gmra.mxu0 %v296
        %v348 = vpop.f32.mrf.mxu0
        %v349 = vadd.f32 %v247, %v348
        %v350 = vpop.f32.mrf.mxu0
        %v351 = vadd.f32 %v252, %v350
        %352 = vmatmul.bf16.gmra.mxu0 %v299
        %v353 = vpop.f32.mrf.mxu0
        %v354 = vadd.f32 %v257, %v353
        %v355 = vpop.f32.mrf.mxu0
        %v356 = vadd.f32 %v262, %v355
        %357 = vdwg.mxu0
        %358 = vmatpush.bf16.msra.mxu0 0
        %359 = vmatpush.bf16.msra.mxu0 0
        %360 = vmatpush.bf16.msra.mxu0 0
        %361 = vmatpush.bf16.msra.mxu0 0
        %362 = vmatpush.bf16.msra.mxu0 0
        %363 = vmatpush.bf16.msra.mxu0 0
        %364 = vmatpush.bf16.msra.mxu0 0
        %365 = vmatpush.bf16.msra.mxu0 %v289
        %366 = vmatmul.bf16.gmra.mxu0 %v296
        %v367 = vpop.f32.mrf.mxu0
        %v368 = vadd.f32 %v247, %v367
        %v369 = vpop.f32.mrf.mxu0
        %v370 = vadd.f32 %v252, %v369
        %371 = vmatmul.bf16.gmra.mxu0 %v299
        %v372 = vpop.f32.mrf.mxu0
        %v373 = vadd.f32 %v257, %v372
        %v374 = vpop.f32.mrf.mxu0
        %v375 = vadd.f32 %v262, %v374
        %376 = vdwg.mxu0
        %v377 = vmax.f32 %v311, 0.0
        %v378 = vmax.f32 %v330, 0.0
        %v379 = vmax.f32 %v349, 0.0
        %v380 = vmax.f32 %v368, 0.0
        %v381 = vmax.f32 %v313, 0.0
        %v382 = vmax.f32 %v332, 0.0
        %v383 = vmax.f32 %v351, 0.0
        %v384 = vmax.f32 %v370, 0.0
        %v385 = vmax.f32 %v316, 0.0
        %v386 = vmax.f32 %v335, 0.0
        %v387 = vmax.f32 %v354, 0.0
        %v388 = vmax.f32 %v373, 0.0
        %v389 = vmax.f32 %v318, 0.0
        %v390 = vmax.f32 %v337, 0.0
        %v391 = vmax.f32 %v356, 0.0
        %v392 = vmax.f32 %v375, 0.0
        %v393 = vpack.c.bf16 %v378, %v377
        %v394 = vpack.c.bf16 %v380, %v379
        %v395 = vpack.c.bf16 %v382, %v381
        %v396 = vpack.c.bf16 %v384, %v383
        %v397 = vpack.c.bf16 %v386, %v385
        %v398 = vpack.c.bf16 %v388, %v387
        %v399 = vpack.c.bf16 %v390, %v389
        %v400 = vpack.c.bf16 %v392, %v391
        %401 = vst [vmem:[%s223] sm:$0xff] %v393
        %402 = vst [vmem:[%s223 + $0x8] sm:$0xff] %v394
        %403 = vst [vmem:[%s223 + $0x10] sm:$0xff] %v395
        %404 = vst [vmem:[%s223 + $0x18] sm:$0xff] %v396
        %405 = vst [vmem:[%s223 + $0x20] sm:$0xff] %v397
        %406 = vst [vmem:[%s223 + $0x28] sm:$0xff] %v398
        %407 = vst [vmem:[%s223 + $0x30] sm:$0xff] %v399
        %408 = vst [vmem:[%s223 + $0x38] sm:$0xff] %v400
        %s409 = sand.u32 %s111, 1
        %s410 = sand.u32 %s111, 1
        %s411 = smul.addr %s410, 64
        %s412 = scalar_lea.vmem [#allocation3], %s411
        // Predicated region
        $region56: #{vae_forward.11} parent=50 // pred_check
          %p413 = pneg %p121
        $region57: #{vae_forward.11} parent=50 // pred_check_branch
          %415 = sbr.rel (%p413) target = $region59
        $region58: #{vae_forward.11} parent=50 // pred_region
          %s416 = smul.u32 4, %s19
          %s417 = smul.addr %s18, 64
          %s418 = sadd.s32 %s416, %s417
          %s419 = smul.addr %s418, 4
          %s420 = scalar_lea.vmem %s3, %s419
          // Predicated region
          $region60: #{vae_forward.11} parent=58 // pred_check
            _
          $region61: #{vae_forward.11} parent=58 // pred_check_branch
            %422 = sbr.rel (0) target = $region63
          $region62: #{vae_forward.11} parent=58 // pred_region
            // Predicated region
            $region64: #{vae_forward.11} parent=62 // pred_check
              _
            $region65: #{vae_forward.11} parent=62 // pred_check_branch
              %424 = sbr.rel (0) target = $region67
            $region66: #{vae_forward.11} parent=62 // pred_region
              loop: start=0, step=1, limit=1
              $region68: #{vae_forward.11} parent=66 // loop_pre_header
                _
              $region69: #{vae_forward.11} parent=66 // loop_header
                %s426 = sphi 0, %s430
                %p427 = scmp.ge.s32.totalorder %s426, 1
                %s431 = sphi %s412, %s412
                %s432 = sphi %s420, %s420
              $region70: #{vae_forward.11} parent=66 // loop_header_branch
                %429 = sbr.rel (%p427) target = $region74
              $region71: #{vae_forward.11} parent=66 // loop_body
                %v433 = vld [vmem:[%s431] sm:$0xff]
                %434 = vst [vmem:[%s432] sm:$0xff] %v433
                %v435 = vld [vmem:[%s431 + $0x8] sm:$0xff]
                %436 = vst [vmem:[%s432 + $0x8] sm:$0xff] %v435
                %v437 = vld [vmem:[%s431 + $0x10] sm:$0xff]
                %438 = vst [vmem:[%s432 + $0x40] sm:$0xff] %v437
                %v439 = vld [vmem:[%s431 + $0x18] sm:$0xff]
                %440 = vst [vmem:[%s432 + $0x48] sm:$0xff] %v439
                %v441 = vld [vmem:[%s431 + $0x20] sm:$0xff]
                %442 = vst [vmem:[%s432 + $0x80] sm:$0xff] %v441
                %v443 = vld [vmem:[%s431 + $0x28] sm:$0xff]
                %444 = vst [vmem:[%s432 + $0x88] sm:$0xff] %v443
                %v445 = vld [vmem:[%s431 + $0x30] sm:$0xff]
                %446 = vst [vmem:[%s432 + $0xc0] sm:$0xff] %v445
                %v447 = vld [vmem:[%s431 + $0x38] sm:$0xff]
                %448 = vst [vmem:[%s432 + $0xc8] sm:$0xff] %v447
              $region72: #{vae_forward.11} parent=66 // loop_footer
                %s430 = sadd.s32 1, %s426
              $region73: #{vae_forward.11} parent=66 // loop_footer_branch
                %425 = sbr.rel target = $region69
              $region74: #{vae_forward.11} parent=66 // loop_exit
                _
            $region67: #{vae_forward.11} parent=62 // pred_fallthru
              _
            // Predicated region
            $region75: #{vae_forward.11} parent=62 // pred_check
              _
            $region76: #{vae_forward.11} parent=62 // pred_check_branch
              %450 = sbr.rel target = $region78
            $region77: #{vae_forward.11} parent=62 // pred_region
              _
            $region78: #{vae_forward.11} parent=62 // pred_fallthru
              _
          $region63: #{vae_forward.11} parent=58 // pred_fallthru
            _
          %451 = vnop
        $region59: #{vae_forward.11} parent=50 // pred_fallthru
          _
      $region51: #{vae_forward.11} parent=5 // pred_fallthru
        _
      %p452 = scmp.le.s32.totalorder 2, %s9
      // Predicated region
      $region79: #{vae_forward.11} parent=5 // pred_check
        %p453 = pneg %p452
      $region80: #{vae_forward.11} parent=5 // pred_check_branch
        %455 = sbr.rel (%p453) target = $region82
      $region81: #{vae_forward.11} parent=5 // pred_region
        %s456 = ssub.s32 %s9, 2
        // Predicated region
        $region83: #{vae_forward.11} parent=81 // pred_check
          %p457 = pneg %p127
        $region84: #{vae_forward.11} parent=81 // pred_check_branch
          %459 = sbr.rel (%p457) target = $region86
        $region85: #{vae_forward.11} parent=81 // pred_region
          %s460 = sand.u32 %s112, 1
          %s461 = sand.u32 %s112, 1
          %s462 = smul.addr %s461, 64
          %s463 = scalar_lea.vmem [#allocation3], %s462
        $region86: #{vae_forward.11} parent=81 // pred_fallthru
          _
      $region82: #{vae_forward.11} parent=5 // pred_fallthru
        _
    $region6: #{vae_forward.11} parent=1 // loop_footer
      %s13 = sadd.s32 1, %s9
    $region7: #{vae_forward.11} parent=1 // loop_footer_branch
      %8 = sbr.rel target = $region3
    $region8: #{vae_forward.11} parent=1 // loop_exit
      _

// kernel: vae_forward.12
$region0: #{vae_forward.12}
  #allocation0 [shape = 'u32[]', space=smem, size = 0x4, offset = 0x4, fixed_abs, tag = 'smem constant byte address 0x4 - core index']
  #allocation1 [shape = 'u32[72,128]{1,0:T(1,128)}', space=vmem, size = 0x9000, scoped, tag = 'internal scratch']
  %s0 = inlined_call_operand.vmem [shape: bf16[1,32,512], index: 0, kind: input, shape index: {}]
  %s1 = inlined_call_operand.vmem [shape: bf16[1,512,512], index: 1, kind: input, shape index: {}]
  %s2 = inlined_call_operand.vmem [shape: f32[32,1], index: 2, kind: input, shape index: {}]
  %s3 = inlined_call_operand.vmem [shape: bf16[1,32,512], index: 3, kind: output, shape index: {}]
  %s4 = sld [smem:[#allocation0]]
  $region22: #{vae_forward.12} parent=0
    _
  %s6 = ssub.s32 1, %s4
  %s7 = scalar_select 0, %s6, %s4
  // Predicated region
  $region2: #{vae_forward.12} parent=0 // pred_check
    _
  $region3: #{vae_forward.12} parent=0 // pred_check_branch
    %9 = sbr.rel (0) target = $region5
  $region4: #{vae_forward.12} parent=0 // pred_region
    _
  $region5: #{vae_forward.12} parent=0 // pred_fallthru
    _
  // Predicated region
  $region6: #{vae_forward.12} parent=0 // pred_check
    _
  $region7: #{vae_forward.12} parent=0 // pred_check_branch
    %11 = sbr.rel (0) target = $region9
  $region8: #{vae_forward.12} parent=0 // pred_region
    _
  $region9: #{vae_forward.12} parent=0 // pred_fallthru
    _
  // Predicated region
  $region10: #{vae_forward.12} parent=0 // pred_check
    _
  $region11: #{vae_forward.12} parent=0 // pred_check_branch
    %13 = sbr.rel (0) target = $region13
  $region12: #{vae_forward.12} parent=0 // pred_region
    _
  $region13: #{vae_forward.12} parent=0 // pred_fallthru
    _
  %v14 = vld [vmem:[%s0] sm:$0xff]
  %v15 = vld [vmem:[%s0 + $0x8] sm:$0xff]
  %v16 = vld [vmem:[%s0 + $0x10] sm:$0xff]
  %v17 = vld [vmem:[%s0 + $0x18] sm:$0xff]
  %v18 = vld [vmem:[%s0 + $0x20] sm:$0xff]
  %v19 = vld [vmem:[%s0 + $0x28] sm:$0xff]
  %v20 = vld [vmem:[%s0 + $0x30] sm:$0xff]
  %v21 = vld [vmem:[%s0 + $0x38] sm:$0xff]
  %v22 = vld [vmem:[%s1] sm:$0xff]
  %v23 = vld [vmem:[%s1 + $0x8] sm:$0xff]
  %v24 = vld [vmem:[%s1 + $0x10] sm:$0xff]
  %v25 = vld [vmem:[%s1 + $0x18] sm:$0xff]
  %v26 = vld [vmem:[%s1 + $0x20] sm:$0xff]
  %v27 = vld [vmem:[%s1 + $0x28] sm:$0xff]
  %v28 = vld [vmem:[%s1 + $0x30] sm:$0xff]
  %v29 = vld [vmem:[%s1 + $0x38] sm:$0xff]
  %v30 = vld [vmem:[%s1 + $0x40] sm:$0xff]
  %v31 = vld [vmem:[%s1 + $0x48] sm:$0xff]
  %v32 = vld [vmem:[%s1 + $0x50] sm:$0xff]
  %v33 = vld [vmem:[%s1 + $0x58] sm:$0xff]
  %v34 = vld [vmem:[%s1 + $0x60] sm:$0xff]
  %v35 = vld [vmem:[%s1 + $0x68] sm:$0xff]
  %v36 = vld [vmem:[%s1 + $0x70] sm:$0xff]
  %v37 = vld [vmem:[%s1 + $0x78] sm:$0xff]
  %v38 = vld [vmem:[%s1 + $0x80] sm:$0xff]
  %v39 = vld [vmem:[%s1 + $0x88] sm:$0xff]
  %v40 = vld [vmem:[%s1 + $0x90] sm:$0xff]
  %v41 = vld [vmem:[%s1 + $0x98] sm:$0xff]
  %v42 = vld [vmem:[%s1 + $0xa0] sm:$0xff]
  %v43 = vld [vmem:[%s1 + $0xa8] sm:$0xff]
  %v44 = vld [vmem:[%s1 + $0xb0] sm:$0xff]
  %v45 = vld [vmem:[%s1 + $0xb8] sm:$0xff]
  %v46 = vld [vmem:[%s1 + $0xc0] sm:$0xff]
  %v47 = vld [vmem:[%s1 + $0xc8] sm:$0xff]
  %v48 = vld [vmem:[%s1 + $0xd0] sm:$0xff]
  %v49 = vld [vmem:[%s1 + $0xd8] sm:$0xff]
  %v50 = vld [vmem:[%s1 + $0xe0] sm:$0xff]
  %v51 = vld [vmem:[%s1 + $0xe8] sm:$0xff]
  %v52 = vld [vmem:[%s1 + $0xf0] sm:$0xff]
  %v53 = vld [vmem:[%s1 + $0xf8] sm:$0xff]
  %v54 = vld [vmem:[%s1 + $0x100] sm:$0xff]
  %v55 = vld [vmem:[%s1 + $0x108] sm:$0xff]
  %v56 = vld [vmem:[%s1 + $0x110] sm:$0xff]
  %v57 = vld [vmem:[%s1 + $0x118] sm:$0xff]
  %v58 = vld [vmem:[%s1 + $0x120] sm:$0xff]
  %v59 = vld [vmem:[%s1 + $0x128] sm:$0xff]
  %v60 = vld [vmem:[%s1 + $0x130] sm:$0xff]
  %v61 = vld [vmem:[%s1 + $0x138] sm:$0xff]
  %v62 = vld [vmem:[%s1 + $0x140] sm:$0xff]
  %v63 = vld [vmem:[%s1 + $0x148] sm:$0xff]
  %v64 = vld [vmem:[%s1 + $0x150] sm:$0xff]
  %v65 = vld [vmem:[%s1 + $0x158] sm:$0xff]
  %v66 = vld [vmem:[%s1 + $0x160] sm:$0xff]
  %v67 = vld [vmem:[%s1 + $0x168] sm:$0xff]
  %v68 = vld [vmem:[%s1 + $0x170] sm:$0xff]
  %v69 = vld [vmem:[%s1 + $0x178] sm:$0xff]
  %v70 = vld [vmem:[%s1 + $0x180] sm:$0xff]
  %v71 = vld [vmem:[%s1 + $0x188] sm:$0xff]
  %v72 = vld [vmem:[%s1 + $0x190] sm:$0xff]
  %v73 = vld [vmem:[%s1 + $0x198] sm:$0xff]
  %v74 = vld [vmem:[%s1 + $0x1a0] sm:$0xff]
  %v75 = vld [vmem:[%s1 + $0x1a8] sm:$0xff]
  %v76 = vld [vmem:[%s1 + $0x1b0] sm:$0xff]
  %v77 = vld [vmem:[%s1 + $0x1b8] sm:$0xff]
  %v78 = vld [vmem:[%s1 + $0x1c0] sm:$0xff]
  %v79 = vld [vmem:[%s1 + $0x1c8] sm:$0xff]
  %v80 = vld [vmem:[%s1 + $0x1d0] sm:$0xff]
  %v81 = vld [vmem:[%s1 + $0x1d8] sm:$0xff]
  %v82 = vld [vmem:[%s1 + $0x1e0] sm:$0xff]
  %v83 = vld [vmem:[%s1 + $0x1e8] sm:$0xff]
  %v84 = vld [vmem:[%s1 + $0x1f0] sm:$0xff]
  %v85 = vld [vmem:[%s1 + $0x1f8] sm:$0xff]
  %v86 = vld [vmem:[%s1 + $0x200] sm:$0xff]
  %v87 = vld [vmem:[%s1 + $0x208] sm:$0xff]
  %v88 = vld [vmem:[%s1 + $0x210] sm:$0xff]
  %v89 = vld [vmem:[%s1 + $0x218] sm:$0xff]
  %v90 = vld [vmem:[%s1 + $0x220] sm:$0xff]
  %v91 = vld [vmem:[%s1 + $0x228] sm:$0xff]
  %v92 = vld [vmem:[%s1 + $0x230] sm:$0xff]
  %v93 = vld [vmem:[%s1 + $0x238] sm:$0xff]
  %v94 = vld [vmem:[%s1 + $0x240] sm:$0xff]
  %v95 = vld [vmem:[%s1 + $0x248] sm:$0xff]
  %v96 = vld [vmem:[%s1 + $0x250] sm:$0xff]
  %v97 = vld [vmem:[%s1 + $0x258] sm:$0xff]
  %v98 = vld [vmem:[%s1 + $0x260] sm:$0xff]
  %v99 = vld [vmem:[%s1 + $0x268] sm:$0xff]
  %v100 = vld [vmem:[%s1 + $0x270] sm:$0xff]
  %v101 = vld [vmem:[%s1 + $0x278] sm:$0xff]
  %v102 = vld [vmem:[%s1 + $0x280] sm:$0xff]
  %v103 = vld [vmem:[%s1 + $0x288] sm:$0xff]
  %v104 = vld [vmem:[%s1 + $0x290] sm:$0xff]
  %v105 = vld [vmem:[%s1 + $0x298] sm:$0xff]
  %v106 = vld [vmem:[%s1 + $0x2a0] sm:$0xff]
  %v107 = vld [vmem:[%s1 + $0x2a8] sm:$0xff]
  %v108 = vld [vmem:[%s1 + $0x2b0] sm:$0xff]
  %v109 = vld [vmem:[%s1 + $0x2b8] sm:$0xff]
  %v110 = vld [vmem:[%s1 + $0x2c0] sm:$0xff]
  %v111 = vld [vmem:[%s1 + $0x2c8] sm:$0xff]
  %v112 = vld [vmem:[%s1 + $0x2d0] sm:$0xff]
  %v113 = vld [vmem:[%s1 + $0x2d8] sm:$0xff]
  %v114 = vld [vmem:[%s1 + $0x2e0] sm:$0xff]
  %v115 = vld [vmem:[%s1 + $0x2e8] sm:$0xff]
  %v116 = vld [vmem:[%s1 + $0x2f0] sm:$0xff]
  %v117 = vld [vmem:[%s1 + $0x2f8] sm:$0xff]
  %v118 = vld [vmem:[%s1 + $0x300] sm:$0xff]
  %v119 = vld [vmem:[%s1 + $0x308] sm:$0xff]
  %v120 = vld [vmem:[%s1 + $0x310] sm:$0xff]
  %v121 = vld [vmem:[%s1 + $0x318] sm:$0xff]
  %v122 = vld [vmem:[%s1 + $0x320] sm:$0xff]
  %v123 = vld [vmem:[%s1 + $0x328] sm:$0xff]
  %v124 = vld [vmem:[%s1 + $0x330] sm:$0xff]
  %v125 = vld [vmem:[%s1 + $0x338] sm:$0xff]
  %v126 = vld [vmem:[%s1 + $0x340] sm:$0xff]
  %v127 = vld [vmem:[%s1 + $0x348] sm:$0xff]
  %v128 = vld [vmem:[%s1 + $0x350] sm:$0xff]
  %v129 = vld [vmem:[%s1 + $0x358] sm:$0xff]
  %v130 = vld [vmem:[%s1 + $0x360] sm:$0xff]
  %v131 = vld [vmem:[%s1 + $0x368] sm:$0xff]
  %v132 = vld [vmem:[%s1 + $0x370] sm:$0xff]
  %v133 = vld [vmem:[%s1 + $0x378] sm:$0xff]
  %v134 = vld [vmem:[%s1 + $0x380] sm:$0xff]
  %v135 = vld [vmem:[%s1 + $0x388] sm:$0xff]
  %v136 = vld [vmem:[%s1 + $0x390] sm:$0xff]
  %v137 = vld [vmem:[%s1 + $0x398] sm:$0xff]
  %v138 = vld [vmem:[%s1 + $0x3a0] sm:$0xff]
  %v139 = vld [vmem:[%s1 + $0x3a8] sm:$0xff]
  %v140 = vld [vmem:[%s1 + $0x3b0] sm:$0xff]
  %v141 = vld [vmem:[%s1 + $0x3b8] sm:$0xff]
  %v142 = vld [vmem:[%s1 + $0x3c0] sm:$0xff]
  %v143 = vld [vmem:[%s1 + $0x3c8] sm:$0xff]
  %v144 = vld [vmem:[%s1 + $0x3d0] sm:$0xff]
  %v145 = vld [vmem:[%s1 + $0x3d8] sm:$0xff]
  %v146 = vld [vmem:[%s1 + $0x3e0] sm:$0xff]
  %v147 = vld [vmem:[%s1 + $0x3e8] sm:$0xff]
  %v148 = vld [vmem:[%s1 + $0x3f0] sm:$0xff]
  %v149 = vld [vmem:[%s1 + $0x3f8] sm:$0xff]
  %v150 = vld [vmem:[%s2] sm:$0xff]
  %v151 = vld [vmem:[%s2 + $0x8] sm:$0xff]
  %v152 = vld [vmem:[%s2 + $0x10] sm:$0xff]
  %v153 = vld [vmem:[%s2 + $0x18] sm:$0xff]
  %155 = vset.pattern.permute.xlu0 0
  %156 = vperm.xlu0 %155, %v150
  %v157 = vpop.permute.xlu0 %156
  %160 = vset.pattern.permute.xlu0 0
  %161 = vperm.xlu0 %160, %v151
  %v162 = vpop.permute.xlu0 %161
  %165 = vset.pattern.permute.xlu0 0
  %166 = vperm.xlu0 %165, %v152
  %v167 = vpop.permute.xlu0 %166
  %170 = vset.pattern.permute.xlu0 0
  %171 = vperm.xlu0 %170, %v153
  %v172 = vpop.permute.xlu0 %171
  %v182 = vunpack.c.l.b16 %v14
  %v183 = vunpack.c.h.b16 %v14
  %v184 = vunpack.c.l.b16 %v15
  %v185 = vunpack.c.h.b16 %v15
  %v186 = vunpack.c.l.b16 %v16
  %v187 = vunpack.c.h.b16 %v16
  %v188 = vunpack.c.l.b16 %v17
  %v189 = vunpack.c.h.b16 %v17
  %v190 = vunpack.c.l.b16 %v18
  %v191 = vunpack.c.h.b16 %v18
  %v192 = vunpack.c.l.b16 %v19
  %v193 = vunpack.c.h.b16 %v19
  %v194 = vunpack.c.l.b16 %v20
  %v195 = vunpack.c.h.b16 %v20
  %v196 = vunpack.c.l.b16 %v21
  %v197 = vunpack.c.h.b16 %v21
  %v198 = vpack.c.b16 %v186, %v182
  %v199 = vpack.c.b16 %v187, %v183
  %v200 = vpack.c.b16 %v188, %v184
  %v201 = vpack.c.b16 %v189, %v185
  %v202 = vpack.c.b16 %v194, %v190
  %v203 = vpack.c.b16 %v195, %v191
  %v204 = vpack.c.b16 %v196, %v192
  %v205 = vpack.c.b16 %v197, %v193
  %v342 = vunpack.c.l.b16 %v22
  %v343 = vunpack.c.h.b16 %v22
  %v344 = vunpack.c.l.b16 %v23
  %v345 = vunpack.c.h.b16 %v23
  %v346 = vunpack.c.l.b16 %v24
  %v347 = vunpack.c.h.b16 %v24
  %v348 = vunpack.c.l.b16 %v25
  %v349 = vunpack.c.h.b16 %v25
  %v350 = vunpack.c.l.b16 %v26
  %v351 = vunpack.c.h.b16 %v26
  %v352 = vunpack.c.l.b16 %v27
  %v353 = vunpack.c.h.b16 %v27
  %v354 = vunpack.c.l.b16 %v28
  %v355 = vunpack.c.h.b16 %v28
  %v356 = vunpack.c.l.b16 %v29
  %v357 = vunpack.c.h.b16 %v29
  %v358 = vunpack.c.l.b16 %v30
  %v359 = vunpack.c.h.b16 %v30
  %v360 = vunpack.c.l.b16 %v31
  %v361 = vunpack.c.h.b16 %v31
  %v362 = vunpack.c.l.b16 %v32
  %v363 = vunpack.c.h.b16 %v32
  %v364 = vunpack.c.l.b16 %v33
  %v365 = vunpack.c.h.b16 %v33
  %v366 = vunpack.c.l.b16 %v34
  %v367 = vunpack.c.h.b16 %v34
  %v368 = vunpack.c.l.b16 %v35
  %v369 = vunpack.c.h.b16 %v35
  %v370 = vunpack.c.l.b16 %v36
  %v371 = vunpack.c.h.b16 %v36
  %v372 = vunpack.c.l.b16 %v37
  %v373 = vunpack.c.h.b16 %v37
  %v374 = vunpack.c.l.b16 %v38
  %v375 = vunpack.c.h.b16 %v38
  %v376 = vunpack.c.l.b16 %v39
  %v377 = vunpack.c.h.b16 %v39
  %v378 = vunpack.c.l.b16 %v40
  %v379 = vunpack.c.h.b16 %v40
  %v380 = vunpack.c.l.b16 %v41
  %v381 = vunpack.c.h.b16 %v41
  %v382 = vunpack.c.l.b16 %v42
  %v383 = vunpack.c.h.b16 %v42
  %v384 = vunpack.c.l.b16 %v43
  %v385 = vunpack.c.h.b16 %v43
  %v386 = vunpack.c.l.b16 %v44
  %v387 = vunpack.c.h.b16 %v44
  %v388 = vunpack.c.l.b16 %v45
  %v389 = vunpack.c.h.b16 %v45
  %v390 = vunpack.c.l.b16 %v46
  %v391 = vunpack.c.h.b16 %v46
  %v392 = vunpack.c.l.b16 %v47
  %v393 = vunpack.c.h.b16 %v47
  %v394 = vunpack.c.l.b16 %v48
  %v395 = vunpack.c.h.b16 %v48
  %v396 = vunpack.c.l.b16 %v49
  %v397 = vunpack.c.h.b16 %v49
  %v398 = vunpack.c.l.b16 %v50
  %v399 = vunpack.c.h.b16 %v50
  %v400 = vunpack.c.l.b16 %v51
  %v401 = vunpack.c.h.b16 %v51
  %v402 = vunpack.c.l.b16 %v52
  %v403 = vunpack.c.h.b16 %v52
  %v404 = vunpack.c.l.b16 %v53
  %v405 = vunpack.c.h.b16 %v53
  %v406 = vunpack.c.l.b16 %v54
  %v407 = vunpack.c.h.b16 %v54
  %v408 = vunpack.c.l.b16 %v55
  %v409 = vunpack.c.h.b16 %v55
  %v410 = vunpack.c.l.b16 %v56
  %v411 = vunpack.c.h.b16 %v56
  %v412 = vunpack.c.l.b16 %v57
  %v413 = vunpack.c.h.b16 %v57
  %v414 = vunpack.c.l.b16 %v58
  %v415 = vunpack.c.h.b16 %v58
  %v416 = vunpack.c.l.b16 %v59
  %v417 = vunpack.c.h.b16 %v59
  %v418 = vunpack.c.l.b16 %v60
  %v419 = vunpack.c.h.b16 %v60
  %v420 = vunpack.c.l.b16 %v61
  %v421 = vunpack.c.h.b16 %v61
  %v422 = vunpack.c.l.b16 %v62
  %v423 = vunpack.c.h.b16 %v62
  %v424 = vunpack.c.l.b16 %v63
  %v425 = vunpack.c.h.b16 %v63
  %v426 = vunpack.c.l.b16 %v64
  %v427 = vunpack.c.h.b16 %v64
  %v428 = vunpack.c.l.b16 %v65
  %v429 = vunpack.c.h.b16 %v65
  %v430 = vunpack.c.l.b16 %v66
  %v431 = vunpack.c.h.b16 %v66
  %v432 = vunpack.c.l.b16 %v67
  %v433 = vunpack.c.h.b16 %v67
  %v434 = vunpack.c.l.b16 %v68
  %v435 = vunpack.c.h.b16 %v68
  %v436 = vunpack.c.l.b16 %v69
  %v437 = vunpack.c.h.b16 %v69
  %v438 = vunpack.c.l.b16 %v70
  %v439 = vunpack.c.h.b16 %v70
  %v440 = vunpack.c.l.b16 %v71
  %v441 = vunpack.c.h.b16 %v71
  %v442 = vunpack.c.l.b16 %v72
  %v443 = vunpack.c.h.b16 %v72
  %v444 = vunpack.c.l.b16 %v73
  %v445 = vunpack.c.h.b16 %v73
  %v446 = vunpack.c.l.b16 %v74
  %v447 = vunpack.c.h.b16 %v74
  %v448 = vunpack.c.l.b16 %v75
  %v449 = vunpack.c.h.b16 %v75
  %v450 = vunpack.c.l.b16 %v76
  %v451 = vunpack.c.h.b16 %v76
  %v452 = vunpack.c.l.b16 %v77
  %v453 = vunpack.c.h.b16 %v77
  %v454 = vunpack.c.l.b16 %v78
  %v455 = vunpack.c.h.b16 %v78
  %v456 = vunpack.c.l.b16 %v79
  %v457 = vunpack.c.h.b16 %v79
  %v458 = vunpack.c.l.b16 %v80
  %v459 = vunpack.c.h.b16 %v80
  %v460 = vunpack.c.l.b16 %v81
  %v461 = vunpack.c.h.b16 %v81
  %v462 = vunpack.c.l.b16 %v82
  %v463 = vunpack.c.h.b16 %v82
  %v464 = vunpack.c.l.b16 %v83
  %v465 = vunpack.c.h.b16 %v83
  %v466 = vunpack.c.l.b16 %v84
  %v467 = vunpack.c.h.b16 %v84
  %v468 = vunpack.c.l.b16 %v85
  %v469 = vunpack.c.h.b16 %v85
  %v470 = vunpack.c.l.b16 %v86
  %v471 = vunpack.c.h.b16 %v86
  %v472 = vunpack.c.l.b16 %v87
  %v473 = vunpack.c.h.b16 %v87
  %v474 = vunpack.c.l.b16 %v88
  %v475 = vunpack.c.h.b16 %v88
  %v476 = vunpack.c.l.b16 %v89
  %v477 = vunpack.c.h.b16 %v89
  %v478 = vunpack.c.l.b16 %v90
  %v479 = vunpack.c.h.b16 %v90
  %v480 = vunpack.c.l.b16 %v91
  %v481 = vunpack.c.h.b16 %v91
  %v482 = vunpack.c.l.b16 %v92
  %v483 = vunpack.c.h.b16 %v92
  %v484 = vunpack.c.l.b16 %v93
  %v485 = vunpack.c.h.b16 %v93
  %v486 = vunpack.c.l.b16 %v94
  %v487 = vunpack.c.h.b16 %v94
  %v488 = vunpack.c.l.b16 %v95
  %v489 = vunpack.c.h.b16 %v95
  %v490 = vunpack.c.l.b16 %v96
  %v491 = vunpack.c.h.b16 %v96
  %v492 = vunpack.c.l.b16 %v97
  %v493 = vunpack.c.h.b16 %v97
  %v494 = vunpack.c.l.b16 %v98
  %v495 = vunpack.c.h.b16 %v98
  %v496 = vunpack.c.l.b16 %v99
  %v497 = vunpack.c.h.b16 %v99
  %v498 = vunpack.c.l.b16 %v100
  %v499 = vunpack.c.h.b16 %v100
  %v500 = vunpack.c.l.b16 %v101
  %v501 = vunpack.c.h.b16 %v101
  %v502 = vunpack.c.l.b16 %v102
  %v503 = vunpack.c.h.b16 %v102
  %v504 = vunpack.c.l.b16 %v103
  %v505 = vunpack.c.h.b16 %v103
  %v506 = vunpack.c.l.b16 %v104
  %v507 = vunpack.c.h.b16 %v104
  %v508 = vunpack.c.l.b16 %v105
  %v509 = vunpack.c.h.b16 %v105
  %v510 = vunpack.c.l.b16 %v106
  %v511 = vunpack.c.h.b16 %v106
  %v512 = vunpack.c.l.b16 %v107
  %v513 = vunpack.c.h.b16 %v107
  %v514 = vunpack.c.l.b16 %v108
  %v515 = vunpack.c.h.b16 %v108
  %v516 = vunpack.c.l.b16 %v109
  %v517 = vunpack.c.h.b16 %v109
  %v518 = vunpack.c.l.b16 %v110
  %v519 = vunpack.c.h.b16 %v110
  %v520 = vunpack.c.l.b16 %v111
  %v521 = vunpack.c.h.b16 %v111
  %v522 = vunpack.c.l.b16 %v112
  %v523 = vunpack.c.h.b16 %v112
  %v524 = vunpack.c.l.b16 %v113
  %v525 = vunpack.c.h.b16 %v113
  %v526 = vunpack.c.l.b16 %v114
  %v527 = vunpack.c.h.b16 %v114
  %v528 = vunpack.c.l.b16 %v115
  %v529 = vunpack.c.h.b16 %v115
  %v530 = vunpack.c.l.b16 %v116
  %v531 = vunpack.c.h.b16 %v116
  %v532 = vunpack.c.l.b16 %v117
  %v533 = vunpack.c.h.b16 %v117
  %v534 = vunpack.c.l.b16 %v118
  %v535 = vunpack.c.h.b16 %v118
  %v536 = vunpack.c.l.b16 %v119
  %v537 = vunpack.c.h.b16 %v119
  %v538 = vunpack.c.l.b16 %v120
  %v539 = vunpack.c.h.b16 %v120
  %v540 = vunpack.c.l.b16 %v121
  %v541 = vunpack.c.h.b16 %v121
  %v542 = vunpack.c.l.b16 %v122
  %v543 = vunpack.c.h.b16 %v122
  %v544 = vunpack.c.l.b16 %v123
  %v545 = vunpack.c.h.b16 %v123
  %v546 = vunpack.c.l.b16 %v124
  %v547 = vunpack.c.h.b16 %v124
  %v548 = vunpack.c.l.b16 %v125
  %v549 = vunpack.c.h.b16 %v125
  %v550 = vunpack.c.l.b16 %v126
  %v551 = vunpack.c.h.b16 %v126
  %v552 = vunpack.c.l.b16 %v127
  %v553 = vunpack.c.h.b16 %v127
  %v554 = vunpack.c.l.b16 %v128
  %v555 = vunpack.c.h.b16 %v128
  %v556 = vunpack.c.l.b16 %v129
  %v557 = vunpack.c.h.b16 %v129
  %v558 = vunpack.c.l.b16 %v130
  %v559 = vunpack.c.h.b16 %v130
  %v560 = vunpack.c.l.b16 %v131
  %v561 = vunpack.c.h.b16 %v131
  %v562 = vunpack.c.l.b16 %v132
  %v563 = vunpack.c.h.b16 %v132
  %v564 = vunpack.c.l.b16 %v133
  %v565 = vunpack.c.h.b16 %v133
  %v566 = vunpack.c.l.b16 %v134
  %v567 = vunpack.c.h.b16 %v134
  %v568 = vunpack.c.l.b16 %v135
  %v569 = vunpack.c.h.b16 %v135
  %v570 = vunpack.c.l.b16 %v136
  %v571 = vunpack.c.h.b16 %v136
  %v572 = vunpack.c.l.b16 %v137
  %v573 = vunpack.c.h.b16 %v137
  %v574 = vunpack.c.l.b16 %v138
  %v575 = vunpack.c.h.b16 %v138
  %v576 = vunpack.c.l.b16 %v139
  %v577 = vunpack.c.h.b16 %v139
  %v578 = vunpack.c.l.b16 %v140
  %v579 = vunpack.c.h.b16 %v140
  %v580 = vunpack.c.l.b16 %v141
  %v581 = vunpack.c.h.b16 %v141
  %v582 = vunpack.c.l.b16 %v142
  %v583 = vunpack.c.h.b16 %v142
  %v584 = vunpack.c.l.b16 %v143
  %v585 = vunpack.c.h.b16 %v143
  %v586 = vunpack.c.l.b16 %v144
  %v587 = vunpack.c.h.b16 %v144
  %v588 = vunpack.c.l.b16 %v145
  %v589 = vunpack.c.h.b16 %v145
  %v590 = vunpack.c.l.b16 %v146
  %v591 = vunpack.c.h.b16 %v146
  %v592 = vunpack.c.l.b16 %v147
  %v593 = vunpack.c.h.b16 %v147
  %v594 = vunpack.c.l.b16 %v148
  %v595 = vunpack.c.h.b16 %v148
  %v596 = vunpack.c.l.b16 %v149
  %v597 = vunpack.c.h.b16 %v149
  %v598 = vpack.c.b16 %v346, %v342
  %v599 = vpack.c.b16 %v347, %v343
  %v600 = vpack.c.b16 %v348, %v344
  %v601 = vpack.c.b16 %v349, %v345
  %v602 = vpack.c.b16 %v354, %v350
  %v603 = vpack.c.b16 %v355, %v351
  %v604 = vpack.c.b16 %v356, %v352
  %v605 = vpack.c.b16 %v357, %v353
  %v606 = vpack.c.b16 %v362, %v358
  %v607 = vpack.c.b16 %v363, %v359
  %v608 = vpack.c.b16 %v364, %v360
  %v609 = vpack.c.b16 %v365, %v361
  %v610 = vpack.c.b16 %v370, %v366
  %v611 = vpack.c.b16 %v371, %v367
  %v612 = vpack.c.b16 %v372, %v368
  %v613 = vpack.c.b16 %v373, %v369
  %v614 = vpack.c.b16 %v378, %v374
  %v615 = vpack.c.b16 %v379, %v375
  %v616 = vpack.c.b16 %v380, %v376
  %v617 = vpack.c.b16 %v381, %v377
  %v618 = vpack.c.b16 %v386, %v382
  %v619 = vpack.c.b16 %v387, %v383
  %v620 = vpack.c.b16 %v388, %v384
  %v621 = vpack.c.b16 %v389, %v385
  %v622 = vpack.c.b16 %v394, %v390
  %v623 = vpack.c.b16 %v395, %v391
  %v624 = vpack.c.b16 %v396, %v392
  %v625 = vpack.c.b16 %v397, %v393
  %v626 = vpack.c.b16 %v402, %v398
  %v627 = vpack.c.b16 %v403, %v399
  %v628 = vpack.c.b16 %v404, %v400
  %v629 = vpack.c.b16 %v405, %v401
  %v630 = vpack.c.b16 %v410, %v406
  %v631 = vpack.c.b16 %v411, %v407
  %v632 = vpack.c.b16 %v412, %v408
  %v633 = vpack.c.b16 %v413, %v409
  %v634 = vpack.c.b16 %v418, %v414
  %v635 = vpack.c.b16 %v419, %v415
  %v636 = vpack.c.b16 %v420, %v416
  %v637 = vpack.c.b16 %v421, %v417
  %v638 = vpack.c.b16 %v426, %v422
  %v639 = vpack.c.b16 %v427, %v423
  %v640 = vpack.c.b16 %v428, %v424
  %v641 = vpack.c.b16 %v429, %v425
  %v642 = vpack.c.b16 %v434, %v430
  %v643 = vpack.c.b16 %v435, %v431
  %v644 = vpack.c.b16 %v436, %v432
  %v645 = vpack.c.b16 %v437, %v433
  %v646 = vpack.c.b16 %v442, %v438
  %v647 = vpack.c.b16 %v443, %v439
  %v648 = vpack.c.b16 %v444, %v440
  %v649 = vpack.c.b16 %v445, %v441
  %v650 = vpack.c.b16 %v450, %v446
  %v651 = vpack.c.b16 %v451, %v447
  %v652 = vpack.c.b16 %v452, %v448
  %v653 = vpack.c.b16 %v453, %v449
  %v654 = vpack.c.b16 %v458, %v454
  %v655 = vpack.c.b16 %v459, %v455
  %v656 = vpack.c.b16 %v460, %v456
  %v657 = vpack.c.b16 %v461, %v457
  %v658 = vpack.c.b16 %v466, %v462
  %v659 = vpack.c.b16 %v467, %v463
  %v660 = vpack.c.b16 %v468, %v464
  %v661 = vpack.c.b16 %v469, %v465
  %v662 = vpack.c.b16 %v474, %v470
  %v663 = vpack.c.b16 %v475, %v471
  %v664 = vpack.c.b16 %v476, %v472
  %v665 = vpack.c.b16 %v477, %v473
  %v666 = vpack.c.b16 %v482, %v478
  %v667 = vpack.c.b16 %v483, %v479
  %v668 = vpack.c.b16 %v484, %v480
  %v669 = vpack.c.b16 %v485, %v481
  %v670 = vpack.c.b16 %v490, %v486
  %v671 = vpack.c.b16 %v491, %v487
  %v672 = vpack.c.b16 %v492, %v488
  %v673 = vpack.c.b16 %v493, %v489
  %v674 = vpack.c.b16 %v498, %v494
  %v675 = vpack.c.b16 %v499, %v495
  %v676 = vpack.c.b16 %v500, %v496
  %v677 = vpack.c.b16 %v501, %v497
  %v678 = vpack.c.b16 %v506, %v502
  %v679 = vpack.c.b16 %v507, %v503
  %v680 = vpack.c.b16 %v508, %v504
  %v681 = vpack.c.b16 %v509, %v505
  %v682 = vpack.c.b16 %v514, %v510
  %v683 = vpack.c.b16 %v515, %v511
  %v684 = vpack.c.b16 %v516, %v512
  %v685 = vpack.c.b16 %v517, %v513
  %v686 = vpack.c.b16 %v522, %v518
  %v687 = vpack.c.b16 %v523, %v519
  %v688 = vpack.c.b16 %v524, %v520
  %v689 = vpack.c.b16 %v525, %v521
  %v690 = vpack.c.b16 %v530, %v526
  %v691 = vpack.c.b16 %v531, %v527
  %v692 = vpack.c.b16 %v532, %v528
  %v693 = vpack.c.b16 %v533, %v529
  %v694 = vpack.c.b16 %v538, %v534
  %v695 = vpack.c.b16 %v539, %v535
  %v696 = vpack.c.b16 %v540, %v536
  %v697 = vpack.c.b16 %v541, %v537
  %v698 = vpack.c.b16 %v546, %v542
  %v699 = vpack.c.b16 %v547, %v543
  %v700 = vpack.c.b16 %v548, %v544
  %v701 = vpack.c.b16 %v549, %v545
  %v702 = vpack.c.b16 %v554, %v550
  %v703 = vpack.c.b16 %v555, %v551
  %v704 = vpack.c.b16 %v556, %v552
  %v705 = vpack.c.b16 %v557, %v553
  %v706 = vpack.c.b16 %v562, %v558
  %v707 = vpack.c.b16 %v563, %v559
  %v708 = vpack.c.b16 %v564, %v560
  %v709 = vpack.c.b16 %v565, %v561
  %v710 = vpack.c.b16 %v570, %v566
  %v711 = vpack.c.b16 %v571, %v567
  %v712 = vpack.c.b16 %v572, %v568
  %v713 = vpack.c.b16 %v573, %v569
  %v714 = vpack.c.b16 %v578, %v574
  %v715 = vpack.c.b16 %v579, %v575
  %v716 = vpack.c.b16 %v580, %v576
  %v717 = vpack.c.b16 %v581, %v577
  %v718 = vpack.c.b16 %v586, %v582
  %v719 = vpack.c.b16 %v587, %v583
  %v720 = vpack.c.b16 %v588, %v584
  %v721 = vpack.c.b16 %v589, %v585
  %v722 = vpack.c.b16 %v594, %v590
  %v723 = vpack.c.b16 %v595, %v591
  %v724 = vpack.c.b16 %v596, %v592
  %v725 = vpack.c.b16 %v597, %v593
  %854 = vmatpush.bf16.msra.mxu0 %v626
  %855 = vmatpush.bf16.msra.mxu0 %v622
  %856 = vmatpush.bf16.msra.mxu0 %v618
  %857 = vmatpush.bf16.msra.mxu0 %v614
  %858 = vmatpush.bf16.msra.mxu0 %v610
  %859 = vmatpush.bf16.msra.mxu0 %v606
  %860 = vmatpush.bf16.msra.mxu0 %v602
  %861 = vmatpush.bf16.msra.mxu0 %v598
  %862 = vmatmul.bf16.gmra.mxu0 %v198
  %v863 = vpop.f32.mrf.mxu0
  %v864 = vadd.f32 %v157, %v863
  %v865 = vpop.f32.mrf.mxu0
  %v866 = vadd.f32 %v162, %v865
  %867 = vmatmul.bf16.gmra.mxu0 %v202
  %v868 = vpop.f32.mrf.mxu0
  %v869 = vadd.f32 %v167, %v868
  %v870 = vpop.f32.mrf.mxu0
  %v871 = vadd.f32 %v172, %v870
  %872 = vdwg.mxu0
  %873 = vmatpush.bf16.msra.mxu0 %v658
  %874 = vmatpush.bf16.msra.mxu0 %v654
  %875 = vmatpush.bf16.msra.mxu0 %v650
  %876 = vmatpush.bf16.msra.mxu0 %v646
  %877 = vmatpush.bf16.msra.mxu0 %v642
  %878 = vmatpush.bf16.msra.mxu0 %v638
  %879 = vmatpush.bf16.msra.mxu0 %v634
  %880 = vmatpush.bf16.msra.mxu0 %v630
  %881 = vmatmul.bf16.gmra.mxu0 %v199
  %v882 = vpop.f32.mrf.mxu0
  %v883 = vadd.f32 %v864, %v882
  %v884 = vpop.f32.mrf.mxu0
  %v885 = vadd.f32 %v866, %v884
  %886 = vmatmul.bf16.gmra.mxu0 %v203
  %v887 = vpop.f32.mrf.mxu0
  %v888 = vadd.f32 %v869, %v887
  %v889 = vpop.f32.mrf.mxu0
  %v890 = vadd.f32 %v871, %v889
  %891 = vdwg.mxu0
  %892 = vmatpush.bf16.msra.mxu0 %v690
  %893 = vmatpush.bf16.msra.mxu0 %v686
  %894 = vmatpush.bf16.msra.mxu0 %v682
  %895 = vmatpush.bf16.msra.mxu0 %v678
  %896 = vmatpush.bf16.msra.mxu0 %v674
  %897 = vmatpush.bf16.msra.mxu0 %v670
  %898 = vmatpush.bf16.msra.mxu0 %v666
  %899 = vmatpush.bf16.msra.mxu0 %v662
  %900 = vmatmul.bf16.gmra.mxu0 %v200
  %v901 = vpop.f32.mrf.mxu0
  %v902 = vadd.f32 %v883, %v901
  %v903 = vpop.f32.mrf.mxu0
  %v904 = vadd.f32 %v885, %v903
  %905 = vmatmul.bf16.gmra.mxu0 %v204
  %v906 = vpop.f32.mrf.mxu0
  %v907 = vadd.f32 %v888, %v906
  %v908 = vpop.f32.mrf.mxu0
  %v909 = vadd.f32 %v890, %v908
  %910 = vdwg.mxu0
  %911 = vmatpush.bf16.msra.mxu0 %v722
  %912 = vmatpush.bf16.msra.mxu0 %v718
  %913 = vmatpush.bf16.msra.mxu0 %v714
  %914 = vmatpush.bf16.msra.mxu0 %v710
  %915 = vmatpush.bf16.msra.mxu0 %v706
  %916 = vmatpush.bf16.msra.mxu0 %v702
  %917 = vmatpush.bf16.msra.mxu0 %v698
  %918 = vmatpush.bf16.msra.mxu0 %v694
  %919 = vmatmul.bf16.gmra.mxu0 %v201
  %v920 = vpop.f32.mrf.mxu0
  %v921 = vadd.f32 %v902, %v920
  %v922 = vpop.f32.mrf.mxu0
  %v923 = vadd.f32 %v904, %v922
  %924 = vmatmul.bf16.gmra.mxu0 %v205
  %v925 = vpop.f32.mrf.mxu0
  %v926 = vadd.f32 %v907, %v925
  %v927 = vpop.f32.mrf.mxu0
  %v928 = vadd.f32 %v909, %v927
  %929 = vdwg.mxu0
  %930 = vmatpush.bf16.msra.mxu0 %v627
  %931 = vmatpush.bf16.msra.mxu0 %v623
  %932 = vmatpush.bf16.msra.mxu0 %v619
  %933 = vmatpush.bf16.msra.mxu0 %v615
  %934 = vmatpush.bf16.msra.mxu0 %v611
  %935 = vmatpush.bf16.msra.mxu0 %v607
  %936 = vmatpush.bf16.msra.mxu0 %v603
  %937 = vmatpush.bf16.msra.mxu0 %v599
  %938 = vmatmul.bf16.gmra.mxu0 %v198
  %v939 = vpop.f32.mrf.mxu0
  %v940 = vadd.f32 %v157, %v939
  %v941 = vpop.f32.mrf.mxu0
  %v942 = vadd.f32 %v162, %v941
  %943 = vmatmul.bf16.gmra.mxu0 %v202
  %v944 = vpop.f32.mrf.mxu0
  %v945 = vadd.f32 %v167, %v944
  %v946 = vpop.f32.mrf.mxu0
  %v947 = vadd.f32 %v172, %v946
  %948 = vdwg.mxu0
  %949 = vmatpush.bf16.msra.mxu0 %v659
  %950 = vmatpush.bf16.msra.mxu0 %v655
  %951 = vmatpush.bf16.msra.mxu0 %v651
  %952 = vmatpush.bf16.msra.mxu0 %v647
  %953 = vmatpush.bf16.msra.mxu0 %v643
  %954 = vmatpush.bf16.msra.mxu0 %v639
  %955 = vmatpush.bf16.msra.mxu0 %v635
  %956 = vmatpush.bf16.msra.mxu0 %v631
  %957 = vmatmul.bf16.gmra.mxu0 %v199
  %v958 = vpop.f32.mrf.mxu0
  %v959 = vadd.f32 %v940, %v958
  %v960 = vpop.f32.mrf.mxu0
  %v961 = vadd.f32 %v942, %v960
  %962 = vmatmul.bf16.gmra.mxu0 %v203
  %v963 = vpop.f32.mrf.mxu0
  %v964 = vadd.f32 %v945, %v963
  %v965 = vpop.f32.mrf.mxu0
  %v966 = vadd.f32 %v947, %v965
  %967 = vdwg.mxu0
  %968 = vmatpush.bf16.msra.mxu0 %v691
  %969 = vmatpush.bf16.msra.mxu0 %v687
  %970 = vmatpush.bf16.msra.mxu0 %v683
  %971 = vmatpush.bf16.msra.mxu0 %v679
  %972 = vmatpush.bf16.msra.mxu0 %v675
  %973 = vmatpush.bf16.msra.mxu0 %v671
  %974 = vmatpush.bf16.msra.mxu0 %v667
  %975 = vmatpush.bf16.msra.mxu0 %v663
  %976 = vmatmul.bf16.gmra.mxu0 %v200
  %v977 = vpop.f32.mrf.mxu0
  %v978 = vadd.f32 %v959, %v977
  %v979 = vpop.f32.mrf.mxu0
  %v980 = vadd.f32 %v961, %v979
  %981 = vmatmul.bf16.gmra.mxu0 %v204
  %v982 = vpop.f32.mrf.mxu0
  %v983 = vadd.f32 %v964, %v982
  %v984 = vpop.f32.mrf.mxu0
  %v985 = vadd.f32 %v966, %v984
  %986 = vdwg.mxu0
  %987 = vmatpush.bf16.msra.mxu0 %v723
  %988 = vmatpush.bf16.msra.mxu0 %v719
  %989 = vmatpush.bf16.msra.mxu0 %v715
  %990 = vmatpush.bf16.msra.mxu0 %v711
  %991 = vmatpush.bf16.msra.mxu0 %v707
  %992 = vmatpush.bf16.msra.mxu0 %v703
  %993 = vmatpush.bf16.msra.mxu0 %v699
  %994 = vmatpush.bf16.msra.mxu0 %v695
  %995 = vmatmul.bf16.gmra.mxu0 %v201
  %v996 = vpop.f32.mrf.mxu0
  %v997 = vadd.f32 %v978, %v996
  %v998 = vpop.f32.mrf.mxu0
  %v999 = vadd.f32 %v980, %v998
  %1000 = vmatmul.bf16.gmra.mxu0 %v205
  %v1001 = vpop.f32.mrf.mxu0
  %v1002 = vadd.f32 %v983, %v1001
  %v1003 = vpop.f32.mrf.mxu0
  %v1004 = vadd.f32 %v985, %v1003
  %1005 = vdwg.mxu0
  %1006 = vmatpush.bf16.msra.mxu0 %v628
  %1007 = vmatpush.bf16.msra.mxu0 %v624
  %1008 = vmatpush.bf16.msra.mxu0 %v620
  %1009 = vmatpush.bf16.msra.mxu0 %v616
  %1010 = vmatpush.bf16.msra.mxu0 %v612
  %1011 = vmatpush.bf16.msra.mxu0 %v608
  %1012 = vmatpush.bf16.msra.mxu0 %v604
  %1013 = vmatpush.bf16.msra.mxu0 %v600
  %1014 = vmatmul.bf16.gmra.mxu0 %v198
  %v1015 = vpop.f32.mrf.mxu0
  %v1016 = vadd.f32 %v157, %v1015
  %v1017 = vpop.f32.mrf.mxu0
  %v1018 = vadd.f32 %v162, %v1017
  %1019 = vmatmul.bf16.gmra.mxu0 %v202
  %v1020 = vpop.f32.mrf.mxu0
  %v1021 = vadd.f32 %v167, %v1020
  %v1022 = vpop.f32.mrf.mxu0
  %v1023 = vadd.f32 %v172, %v1022
  %1024 = vdwg.mxu0
  %1025 = vmatpush.bf16.msra.mxu0 %v660
  %1026 = vmatpush.bf16.msra.mxu0 %v656
  %1027 = vmatpush.bf16.msra.mxu0 %v652
  %1028 = vmatpush.bf16.msra.mxu0 %v648
  %1029 = vmatpush.bf16.msra.mxu0 %v644
  %1030 = vmatpush.bf16.msra.mxu0 %v640
  %1031 = vmatpush.bf16.msra.mxu0 %v636
  %1032 = vmatpush.bf16.msra.mxu0 %v632
  %1033 = vmatmul.bf16.gmra.mxu0 %v199
  %v1034 = vpop.f32.mrf.mxu0
  %v1035 = vadd.f32 %v1016, %v1034
  %v1036 = vpop.f32.mrf.mxu0
  %v1037 = vadd.f32 %v1018, %v1036
  %1038 = vmatmul.bf16.gmra.mxu0 %v203
  %v1039 = vpop.f32.mrf.mxu0
  %v1040 = vadd.f32 %v1021, %v1039
  %v1041 = vpop.f32.mrf.mxu0
  %v1042 = vadd.f32 %v1023, %v1041
  %1043 = vdwg.mxu0
  %1044 = vmatpush.bf16.msra.mxu0 %v692
  %1045 = vmatpush.bf16.msra.mxu0 %v688
  %1046 = vmatpush.bf16.msra.mxu0 %v684
  %1047 = vmatpush.bf16.msra.mxu0 %v680
  %1048 = vmatpush.bf16.msra.mxu0 %v676
  %1049 = vmatpush.bf16.msra.mxu0 %v672
  %1050 = vmatpush.bf16.msra.mxu0 %v668
  %1051 = vmatpush.bf16.msra.mxu0 %v664
  %1052 = vmatmul.bf16.gmra.mxu0 %v200
  %v1053 = vpop.f32.mrf.mxu0
  %v1054 = vadd.f32 %v1035, %v1053
  %v1055 = vpop.f32.mrf.mxu0
  %v1056 = vadd.f32 %v1037, %v1055
  %1057 = vmatmul.bf16.gmra.mxu0 %v204
  %v1058 = vpop.f32.mrf.mxu0
  %v1059 = vadd.f32 %v1040, %v1058
  %v1060 = vpop.f32.mrf.mxu0
  %v1061 = vadd.f32 %v1042, %v1060
  %1062 = vdwg.mxu0
  %1063 = vmatpush.bf16.msra.mxu0 %v724
  %1064 = vmatpush.bf16.msra.mxu0 %v720
  %1065 = vmatpush.bf16.msra.mxu0 %v716
  %1066 = vmatpush.bf16.msra.mxu0 %v712
  %1067 = vmatpush.bf16.msra.mxu0 %v708
  %1068 = vmatpush.bf16.msra.mxu0 %v704
  %1069 = vmatpush.bf16.msra.mxu0 %v700
  %1070 = vmatpush.bf16.msra.mxu0 %v696
  %1071 = vmatmul.bf16.gmra.mxu0 %v201
  %v1072 = vpop.f32.mrf.mxu0
  %v1073 = vadd.f32 %v1054, %v1072
  %v1074 = vpop.f32.mrf.mxu0
  %v1075 = vadd.f32 %v1056, %v1074
  %1076 = vmatmul.bf16.gmra.mxu0 %v205
  %v1077 = vpop.f32.mrf.mxu0
  %v1078 = vadd.f32 %v1059, %v1077
  %v1079 = vpop.f32.mrf.mxu0
  %v1080 = vadd.f32 %v1061, %v1079
  %1081 = vdwg.mxu0
  %1082 = vmatpush.bf16.msra.mxu0 %v629
  %1083 = vmatpush.bf16.msra.mxu0 %v625
  %1084 = vmatpush.bf16.msra.mxu0 %v621
  %1085 = vmatpush.bf16.msra.mxu0 %v617
  %1086 = vmatpush.bf16.msra.mxu0 %v613
  %1087 = vmatpush.bf16.msra.mxu0 %v609
  %1088 = vmatpush.bf16.msra.mxu0 %v605
  %1089 = vmatpush.bf16.msra.mxu0 %v601
  %1090 = vmatmul.bf16.gmra.mxu0 %v198
  %v1091 = vpop.f32.mrf.mxu0
  %v1092 = vadd.f32 %v157, %v1091
  %v1093 = vpop.f32.mrf.mxu0
  %v1094 = vadd.f32 %v162, %v1093
  %1095 = vmatmul.bf16.gmra.mxu0 %v202
  %v1096 = vpop.f32.mrf.mxu0
  %v1097 = vadd.f32 %v167, %v1096
  %v1098 = vpop.f32.mrf.mxu0
  %v1099 = vadd.f32 %v172, %v1098
  %1100 = vdwg.mxu0
  %1101 = vmatpush.bf16.msra.mxu0 %v661
  %1102 = vmatpush.bf16.msra.mxu0 %v657
  %1103 = vmatpush.bf16.msra.mxu0 %v653
  %1104 = vmatpush.bf16.msra.mxu0 %v649
  %1105 = vmatpush.bf16.msra.mxu0 %v645
  %1106 = vmatpush.bf16.msra.mxu0 %v641
  %1107 = vmatpush.bf16.msra.mxu0 %v637
  %1108 = vmatpush.bf16.msra.mxu0 %v633
  %1109 = vmatmul.bf16.gmra.mxu0 %v199
  %v1110 = vpop.f32.mrf.mxu0
  %v1111 = vadd.f32 %v1092, %v1110
  %v1112 = vpop.f32.mrf.mxu0
  %v1113 = vadd.f32 %v1094, %v1112
  %1114 = vmatmul.bf16.gmra.mxu0 %v203
  %v1115 = vpop.f32.mrf.mxu0
  %v1116 = vadd.f32 %v1097, %v1115
  %v1117 = vpop.f32.mrf.mxu0
  %v1118 = vadd.f32 %v1099, %v1117
  %1119 = vdwg.mxu0
  %1120 = vmatpush.bf16.msra.mxu0 %v693
  %1121 = vmatpush.bf16.msra.mxu0 %v689
  %1122 = vmatpush.bf16.msra.mxu0 %v685
  %1123 = vmatpush.bf16.msra.mxu0 %v681
  %1124 = vmatpush.bf16.msra.mxu0 %v677
  %1125 = vmatpush.bf16.msra.mxu0 %v673
  %1126 = vmatpush.bf16.msra.mxu0 %v669
  %1127 = vmatpush.bf16.msra.mxu0 %v665
  %1128 = vmatmul.bf16.gmra.mxu0 %v200
  %v1129 = vpop.f32.mrf.mxu0
  %v1130 = vadd.f32 %v1111, %v1129
  %v1131 = vpop.f32.mrf.mxu0
  %v1132 = vadd.f32 %v1113, %v1131
  %1133 = vmatmul.bf16.gmra.mxu0 %v204
  %v1134 = vpop.f32.mrf.mxu0
  %v1135 = vadd.f32 %v1116, %v1134
  %v1136 = vpop.f32.mrf.mxu0
  %v1137 = vadd.f32 %v1118, %v1136
  %1138 = vdwg.mxu0
  %1139 = vmatpush.bf16.msra.mxu0 %v725
  %1140 = vmatpush.bf16.msra.mxu0 %v721
  %1141 = vmatpush.bf16.msra.mxu0 %v717
  %1142 = vmatpush.bf16.msra.mxu0 %v713
  %1143 = vmatpush.bf16.msra.mxu0 %v709
  %1144 = vmatpush.bf16.msra.mxu0 %v705
  %1145 = vmatpush.bf16.msra.mxu0 %v701
  %1146 = vmatpush.bf16.msra.mxu0 %v697
  %1147 = vmatmul.bf16.gmra.mxu0 %v201
  %v1148 = vpop.f32.mrf.mxu0
  %v1149 = vadd.f32 %v1130, %v1148
  %v1150 = vpop.f32.mrf.mxu0
  %v1151 = vadd.f32 %v1132, %v1150
  %1152 = vmatmul.bf16.gmra.mxu0 %v205
  %v1153 = vpop.f32.mrf.mxu0
  %v1154 = vadd.f32 %v1135, %v1153
  %v1155 = vpop.f32.mrf.mxu0
  %v1156 = vadd.f32 %v1137, %v1155
  %1157 = vdwg.mxu0
  %v1158 = vmax.f32 %v921, 0.0
  %v1159 = vmax.f32 %v997, 0.0
  %v1160 = vmax.f32 %v1073, 0.0
  %v1161 = vmax.f32 %v1149, 0.0
  %v1162 = vmax.f32 %v923, 0.0
  %v1163 = vmax.f32 %v999, 0.0
  %v1164 = vmax.f32 %v1075, 0.0
  %v1165 = vmax.f32 %v1151, 0.0
  %v1166 = vmax.f32 %v926, 0.0
  %v1167 = vmax.f32 %v1002, 0.0
  %v1168 = vmax.f32 %v1078, 0.0
  %v1169 = vmax.f32 %v1154, 0.0
  %v1170 = vmax.f32 %v928, 0.0
  %v1171 = vmax.f32 %v1004, 0.0
  %v1172 = vmax.f32 %v1080, 0.0
  %v1173 = vmax.f32 %v1156, 0.0
  %v1174 = vpack.c.bf16 %v1159, %v1158
  %v1175 = vpack.c.bf16 %v1161, %v1160
  %v1176 = vpack.c.bf16 %v1163, %v1162
  %v1177 = vpack.c.bf16 %v1165, %v1164
  %v1178 = vpack.c.bf16 %v1167, %v1166
  %v1179 = vpack.c.bf16 %v1169, %v1168
  %v1180 = vpack.c.bf16 %v1171, %v1170
  %v1181 = vpack.c.bf16 %v1173, %v1172
  %1182 = vst [vmem:[%s3] sm:$0xff] %v1174
  %1183 = vst [vmem:[%s3 + $0x8] sm:$0xff] %v1175
  %1184 = vst [vmem:[%s3 + $0x10] sm:$0xff] %v1176
  %1185 = vst [vmem:[%s3 + $0x18] sm:$0xff] %v1177
  %1186 = vst [vmem:[%s3 + $0x20] sm:$0xff] %v1178
  %1187 = vst [vmem:[%s3 + $0x28] sm:$0xff] %v1179
  %1188 = vst [vmem:[%s3 + $0x30] sm:$0xff] %v1180
  %1189 = vst [vmem:[%s3 + $0x38] sm:$0xff] %v1181
  // Predicated region
  $region14: #{vae_forward.12} parent=0 // pred_check
    _
  $region15: #{vae_forward.12} parent=0 // pred_check_branch
    %1191 = sbr.rel (0) target = $region17
  $region16: #{vae_forward.12} parent=0 // pred_region
    _
  $region17: #{vae_forward.12} parent=0 // pred_fallthru
    _
  // Predicated region
  $region18: #{vae_forward.12} parent=0 // pred_check
    _
  $region19: #{vae_forward.12} parent=0 // pred_check_branch
    %1193 = sbr.rel (0) target = $region21
  $region20: #{vae_forward.12} parent=0 // pred_region
    _
  $region21: #{vae_forward.12} parent=0 // pred_fallthru
    _

// kernel: vae_forward.13
$region0: #{vae_forward.13}
  #allocation0 [shape = 'u32[]', space=smem, size = 0x4, offset = 0x4, fixed_abs, tag = 'smem constant byte address 0x4 - core index']
  #allocation1 [shape = 'u32[72,128]{1,0:T(1,128)}', space=vmem, size = 0x9000, scoped, tag = 'internal scratch']
  %s0 = inlined_call_operand.vmem [shape: bf16[1,32,512], index: 0, kind: input, shape index: {}]
  %s1 = inlined_call_operand.vmem [shape: bf16[1,512,128], index: 1, kind: input, shape index: {}]
  %s2 = inlined_call_operand.vmem [shape: f32[32,1], index: 2, kind: input, shape index: {}]
  %s3 = inlined_call_operand.vmem [shape: bf16[1,32,128], index: 3, kind: output, shape index: {}]
  %s4 = sld [smem:[#allocation0]]
  $region22: #{vae_forward.13} parent=0
    _
  %s6 = ssub.s32 1, %s4
  %s7 = scalar_select 0, %s6, %s4
  // Predicated region
  $region2: #{vae_forward.13} parent=0 // pred_check
    _
  $region3: #{vae_forward.13} parent=0 // pred_check_branch
    %9 = sbr.rel (0) target = $region5
  $region4: #{vae_forward.13} parent=0 // pred_region
    _
  $region5: #{vae_forward.13} parent=0 // pred_fallthru
    _
  // Predicated region
  $region6: #{vae_forward.13} parent=0 // pred_check
    _
  $region7: #{vae_forward.13} parent=0 // pred_check_branch
    %11 = sbr.rel (0) target = $region9
  $region8: #{vae_forward.13} parent=0 // pred_region
    _
  $region9: #{vae_forward.13} parent=0 // pred_fallthru
    _
  // Predicated region
  $region10: #{vae_forward.13} parent=0 // pred_check
    _
  $region11: #{vae_forward.13} parent=0 // pred_check_branch
    %13 = sbr.rel (0) target = $region13
  $region12: #{vae_forward.13} parent=0 // pred_region
    _
  $region13: #{vae_forward.13} parent=0 // pred_fallthru
    _
  %v14 = vld [vmem:[%s0] sm:$0xff]
  %v15 = vld [vmem:[%s0 + $0x8] sm:$0xff]
  %v16 = vld [vmem:[%s0 + $0x10] sm:$0xff]
  %v17 = vld [vmem:[%s0 + $0x18] sm:$0xff]
  %v18 = vld [vmem:[%s0 + $0x20] sm:$0xff]
  %v19 = vld [vmem:[%s0 + $0x28] sm:$0xff]
  %v20 = vld [vmem:[%s0 + $0x30] sm:$0xff]
  %v21 = vld [vmem:[%s0 + $0x38] sm:$0xff]
  %v22 = vld [vmem:[%s1] sm:$0xf]
  %v23 = vld [vmem:[%s1 + $0x4] sm:$0xf]
  %v24 = vld [vmem:[%s1 + $0x8] sm:$0xf]
  %v25 = vld [vmem:[%s1 + $0xc] sm:$0xf]
  %v26 = vld [vmem:[%s1 + $0x10] sm:$0xf]
  %v27 = vld [vmem:[%s1 + $0x14] sm:$0xf]
  %v28 = vld [vmem:[%s1 + $0x18] sm:$0xf]
  %v29 = vld [vmem:[%s1 + $0x1c] sm:$0xf]
  %v30 = vld [vmem:[%s1 + $0x20] sm:$0xf]
  %v31 = vld [vmem:[%s1 + $0x24] sm:$0xf]
  %v32 = vld [vmem:[%s1 + $0x28] sm:$0xf]
  %v33 = vld [vmem:[%s1 + $0x2c] sm:$0xf]
  %v34 = vld [vmem:[%s1 + $0x30] sm:$0xf]
  %v35 = vld [vmem:[%s1 + $0x34] sm:$0xf]
  %v36 = vld [vmem:[%s1 + $0x38] sm:$0xf]
  %v37 = vld [vmem:[%s1 + $0x3c] sm:$0xf]
  %v38 = vld [vmem:[%s1 + $0x40] sm:$0xf]
  %v39 = vld [vmem:[%s1 + $0x44] sm:$0xf]
  %v40 = vld [vmem:[%s1 + $0x48] sm:$0xf]
  %v41 = vld [vmem:[%s1 + $0x4c] sm:$0xf]
  %v42 = vld [vmem:[%s1 + $0x50] sm:$0xf]
  %v43 = vld [vmem:[%s1 + $0x54] sm:$0xf]
  %v44 = vld [vmem:[%s1 + $0x58] sm:$0xf]
  %v45 = vld [vmem:[%s1 + $0x5c] sm:$0xf]
  %v46 = vld [vmem:[%s1 + $0x60] sm:$0xf]
  %v47 = vld [vmem:[%s1 + $0x64] sm:$0xf]
  %v48 = vld [vmem:[%s1 + $0x68] sm:$0xf]
  %v49 = vld [vmem:[%s1 + $0x6c] sm:$0xf]
  %v50 = vld [vmem:[%s1 + $0x70] sm:$0xf]
  %v51 = vld [vmem:[%s1 + $0x74] sm:$0xf]
  %v52 = vld [vmem:[%s1 + $0x78] sm:$0xf]
  %v53 = vld [vmem:[%s1 + $0x7c] sm:$0xf]
  %v54 = vld [vmem:[%s1 + $0x80] sm:$0xf]
  %v55 = vld [vmem:[%s1 + $0x84] sm:$0xf]
  %v56 = vld [vmem:[%s1 + $0x88] sm:$0xf]
  %v57 = vld [vmem:[%s1 + $0x8c] sm:$0xf]
  %v58 = vld [vmem:[%s1 + $0x90] sm:$0xf]
  %v59 = vld [vmem:[%s1 + $0x94] sm:$0xf]
  %v60 = vld [vmem:[%s1 + $0x98] sm:$0xf]
  %v61 = vld [vmem:[%s1 + $0x9c] sm:$0xf]
  %v62 = vld [vmem:[%s1 + $0xa0] sm:$0xf]
  %v63 = vld [vmem:[%s1 + $0xa4] sm:$0xf]
  %v64 = vld [vmem:[%s1 + $0xa8] sm:$0xf]
  %v65 = vld [vmem:[%s1 + $0xac] sm:$0xf]
  %v66 = vld [vmem:[%s1 + $0xb0] sm:$0xf]
  %v67 = vld [vmem:[%s1 + $0xb4] sm:$0xf]
  %v68 = vld [vmem:[%s1 + $0xb8] sm:$0xf]
  %v69 = vld [vmem:[%s1 + $0xbc] sm:$0xf]
  %v70 = vld [vmem:[%s1 + $0xc0] sm:$0xf]
  %v71 = vld [vmem:[%s1 + $0xc4] sm:$0xf]
  %v72 = vld [vmem:[%s1 + $0xc8] sm:$0xf]
  %v73 = vld [vmem:[%s1 + $0xcc] sm:$0xf]
  %v74 = vld [vmem:[%s1 + $0xd0] sm:$0xf]
  %v75 = vld [vmem:[%s1 + $0xd4] sm:$0xf]
  %v76 = vld [vmem:[%s1 + $0xd8] sm:$0xf]
  %v77 = vld [vmem:[%s1 + $0xdc] sm:$0xf]
  %v78 = vld [vmem:[%s1 + $0xe0] sm:$0xf]
  %v79 = vld [vmem:[%s1 + $0xe4] sm:$0xf]
  %v80 = vld [vmem:[%s1 + $0xe8] sm:$0xf]
  %v81 = vld [vmem:[%s1 + $0xec] sm:$0xf]
  %v82 = vld [vmem:[%s1 + $0xf0] sm:$0xf]
  %v83 = vld [vmem:[%s1 + $0xf4] sm:$0xf]
  %v84 = vld [vmem:[%s1 + $0xf8] sm:$0xf]
  %v85 = vld [vmem:[%s1 + $0xfc] sm:$0xf]
  %v86 = vld [vmem:[%s2] sm:$0xff]
  %v87 = vld [vmem:[%s2 + $0x8] sm:$0xff]
  %v88 = vld [vmem:[%s2 + $0x10] sm:$0xff]
  %v89 = vld [vmem:[%s2 + $0x18] sm:$0xff]
  %91 = vset.pattern.permute.xlu0 0
  %92 = vperm.xlu0 %91, %v86
  %v93 = vpop.permute.xlu0 %92
  %96 = vset.pattern.permute.xlu0 0
  %97 = vperm.xlu0 %96, %v87
  %v98 = vpop.permute.xlu0 %97
  %101 = vset.pattern.permute.xlu0 0
  %102 = vperm.xlu0 %101, %v88
  %v103 = vpop.permute.xlu0 %102
  %106 = vset.pattern.permute.xlu0 0
  %107 = vperm.xlu0 %106, %v89
  %v108 = vpop.permute.xlu0 %107
  %v118 = vunpack.c.l.b16 %v14
  %v119 = vunpack.c.h.b16 %v14
  %v120 = vunpack.c.l.b16 %v15
  %v121 = vunpack.c.h.b16 %v15
  %v122 = vunpack.c.l.b16 %v16
  %v123 = vunpack.c.h.b16 %v16
  %v124 = vunpack.c.l.b16 %v17
  %v125 = vunpack.c.h.b16 %v17
  %v126 = vunpack.c.l.b16 %v18
  %v127 = vunpack.c.h.b16 %v18
  %v128 = vunpack.c.l.b16 %v19
  %v129 = vunpack.c.h.b16 %v19
  %v130 = vunpack.c.l.b16 %v20
  %v131 = vunpack.c.h.b16 %v20
  %v132 = vunpack.c.l.b16 %v21
  %v133 = vunpack.c.h.b16 %v21
  %v134 = vpack.c.b16 %v122, %v118
  %v135 = vpack.c.b16 %v123, %v119
  %v136 = vpack.c.b16 %v124, %v120
  %v137 = vpack.c.b16 %v125, %v121
  %v138 = vpack.c.b16 %v130, %v126
  %v139 = vpack.c.b16 %v131, %v127
  %v140 = vpack.c.b16 %v132, %v128
  %v141 = vpack.c.b16 %v133, %v129
  %v214 = vunpack.c.l.b16 %v22
  %v215 = vunpack.c.l.b16 %v23
  %v216 = vunpack.c.l.b16 %v24
  %v217 = vunpack.c.l.b16 %v25
  %v218 = vunpack.c.l.b16 %v26
  %v219 = vunpack.c.l.b16 %v27
  %v220 = vunpack.c.l.b16 %v28
  %v221 = vunpack.c.l.b16 %v29
  %v222 = vunpack.c.l.b16 %v30
  %v223 = vunpack.c.l.b16 %v31
  %v224 = vunpack.c.l.b16 %v32
  %v225 = vunpack.c.l.b16 %v33
  %v226 = vunpack.c.l.b16 %v34
  %v227 = vunpack.c.l.b16 %v35
  %v228 = vunpack.c.l.b16 %v36
  %v229 = vunpack.c.l.b16 %v37
  %v230 = vunpack.c.l.b16 %v38
  %v231 = vunpack.c.l.b16 %v39
  %v232 = vunpack.c.l.b16 %v40
  %v233 = vunpack.c.l.b16 %v41
  %v234 = vunpack.c.l.b16 %v42
  %v235 = vunpack.c.l.b16 %v43
  %v236 = vunpack.c.l.b16 %v44
  %v237 = vunpack.c.l.b16 %v45
  %v238 = vunpack.c.l.b16 %v46
  %v239 = vunpack.c.l.b16 %v47
  %v240 = vunpack.c.l.b16 %v48
  %v241 = vunpack.c.l.b16 %v49
  %v242 = vunpack.c.l.b16 %v50
  %v243 = vunpack.c.l.b16 %v51
  %v244 = vunpack.c.l.b16 %v52
  %v245 = vunpack.c.l.b16 %v53
  %v246 = vunpack.c.l.b16 %v54
  %v247 = vunpack.c.l.b16 %v55
  %v248 = vunpack.c.l.b16 %v56
  %v249 = vunpack.c.l.b16 %v57
  %v250 = vunpack.c.l.b16 %v58
  %v251 = vunpack.c.l.b16 %v59
  %v252 = vunpack.c.l.b16 %v60
  %v253 = vunpack.c.l.b16 %v61
  %v254 = vunpack.c.l.b16 %v62
  %v255 = vunpack.c.l.b16 %v63
  %v256 = vunpack.c.l.b16 %v64
  %v257 = vunpack.c.l.b16 %v65
  %v258 = vunpack.c.l.b16 %v66
  %v259 = vunpack.c.l.b16 %v67
  %v260 = vunpack.c.l.b16 %v68
  %v261 = vunpack.c.l.b16 %v69
  %v262 = vunpack.c.l.b16 %v70
  %v263 = vunpack.c.l.b16 %v71
  %v264 = vunpack.c.l.b16 %v72
  %v265 = vunpack.c.l.b16 %v73
  %v266 = vunpack.c.l.b16 %v74
  %v267 = vunpack.c.l.b16 %v75
  %v268 = vunpack.c.l.b16 %v76
  %v269 = vunpack.c.l.b16 %v77
  %v270 = vunpack.c.l.b16 %v78
  %v271 = vunpack.c.l.b16 %v79
  %v272 = vunpack.c.l.b16 %v80
  %v273 = vunpack.c.l.b16 %v81
  %v274 = vunpack.c.l.b16 %v82
  %v275 = vunpack.c.l.b16 %v83
  %v276 = vunpack.c.l.b16 %v84
  %v277 = vunpack.c.l.b16 %v85
  %v278 = vpack.c.b16 %v215, %v214
  %v279 = vpack.c.b16 %v217, %v216
  %v280 = vpack.c.b16 %v219, %v218
  %v281 = vpack.c.b16 %v221, %v220
  %v282 = vpack.c.b16 %v223, %v222
  %v283 = vpack.c.b16 %v225, %v224
  %v284 = vpack.c.b16 %v227, %v226
  %v285 = vpack.c.b16 %v229, %v228
  %v286 = vpack.c.b16 %v231, %v230
  %v287 = vpack.c.b16 %v233, %v232
  %v288 = vpack.c.b16 %v235, %v234
  %v289 = vpack.c.b16 %v237, %v236
  %v290 = vpack.c.b16 %v239, %v238
  %v291 = vpack.c.b16 %v241, %v240
  %v292 = vpack.c.b16 %v243, %v242
  %v293 = vpack.c.b16 %v245, %v244
  %v294 = vpack.c.b16 %v247, %v246
  %v295 = vpack.c.b16 %v249, %v248
  %v296 = vpack.c.b16 %v251, %v250
  %v297 = vpack.c.b16 %v253, %v252
  %v298 = vpack.c.b16 %v255, %v254
  %v299 = vpack.c.b16 %v257, %v256
  %v300 = vpack.c.b16 %v259, %v258
  %v301 = vpack.c.b16 %v261, %v260
  %v302 = vpack.c.b16 %v263, %v262
  %v303 = vpack.c.b16 %v265, %v264
  %v304 = vpack.c.b16 %v267, %v266
  %v305 = vpack.c.b16 %v269, %v268
  %v306 = vpack.c.b16 %v271, %v270
  %v307 = vpack.c.b16 %v273, %v272
  %v308 = vpack.c.b16 %v275, %v274
  %v309 = vpack.c.b16 %v277, %v276
  %342 = vmatpush.bf16.msra.mxu0 %v285
  %343 = vmatpush.bf16.msra.mxu0 %v284
  %344 = vmatpush.bf16.msra.mxu0 %v283
  %345 = vmatpush.bf16.msra.mxu0 %v282
  %346 = vmatpush.bf16.msra.mxu0 %v281
  %347 = vmatpush.bf16.msra.mxu0 %v280
  %348 = vmatpush.bf16.msra.mxu0 %v279
  %349 = vmatpush.bf16.msra.mxu0 %v278
  %350 = vmatmul.bf16.gmra.mxu0 %v134
  %v351 = vpop.f32.mrf.mxu0
  %v352 = vadd.f32 %v93, %v351
  %v353 = vpop.f32.mrf.mxu0
  %v354 = vadd.f32 %v98, %v353
  %355 = vmatmul.bf16.gmra.mxu0 %v138
  %v356 = vpop.f32.mrf.mxu0
  %v357 = vadd.f32 %v103, %v356
  %v358 = vpop.f32.mrf.mxu0
  %v359 = vadd.f32 %v108, %v358
  %360 = vdwg.mxu0
  %361 = vmatpush.bf16.msra.mxu0 %v293
  %362 = vmatpush.bf16.msra.mxu0 %v292
  %363 = vmatpush.bf16.msra.mxu0 %v291
  %364 = vmatpush.bf16.msra.mxu0 %v290
  %365 = vmatpush.bf16.msra.mxu0 %v289
  %366 = vmatpush.bf16.msra.mxu0 %v288
  %367 = vmatpush.bf16.msra.mxu0 %v287
  %368 = vmatpush.bf16.msra.mxu0 %v286
  %369 = vmatmul.bf16.gmra.mxu0 %v135
  %v370 = vpop.f32.mrf.mxu0
  %v371 = vadd.f32 %v352, %v370
  %v372 = vpop.f32.mrf.mxu0
  %v373 = vadd.f32 %v354, %v372
  %374 = vmatmul.bf16.gmra.mxu0 %v139
  %v375 = vpop.f32.mrf.mxu0
  %v376 = vadd.f32 %v357, %v375
  %v377 = vpop.f32.mrf.mxu0
  %v378 = vadd.f32 %v359, %v377
  %379 = vdwg.mxu0
  %380 = vmatpush.bf16.msra.mxu0 %v301
  %381 = vmatpush.bf16.msra.mxu0 %v300
  %382 = vmatpush.bf16.msra.mxu0 %v299
  %383 = vmatpush.bf16.msra.mxu0 %v298
  %384 = vmatpush.bf16.msra.mxu0 %v297
  %385 = vmatpush.bf16.msra.mxu0 %v296
  %386 = vmatpush.bf16.msra.mxu0 %v295
  %387 = vmatpush.bf16.msra.mxu0 %v294
  %388 = vmatmul.bf16.gmra.mxu0 %v136
  %v389 = vpop.f32.mrf.mxu0
  %v390 = vadd.f32 %v371, %v389
  %v391 = vpop.f32.mrf.mxu0
  %v392 = vadd.f32 %v373, %v391
  %393 = vmatmul.bf16.gmra.mxu0 %v140
  %v394 = vpop.f32.mrf.mxu0
  %v395 = vadd.f32 %v376, %v394
  %v396 = vpop.f32.mrf.mxu0
  %v397 = vadd.f32 %v378, %v396
  %398 = vdwg.mxu0
  %399 = vmatpush.bf16.msra.mxu0 %v309
  %400 = vmatpush.bf16.msra.mxu0 %v308
  %401 = vmatpush.bf16.msra.mxu0 %v307
  %402 = vmatpush.bf16.msra.mxu0 %v306
  %403 = vmatpush.bf16.msra.mxu0 %v305
  %404 = vmatpush.bf16.msra.mxu0 %v304
  %405 = vmatpush.bf16.msra.mxu0 %v303
  %406 = vmatpush.bf16.msra.mxu0 %v302
  %407 = vmatmul.bf16.gmra.mxu0 %v137
  %v408 = vpop.f32.mrf.mxu0
  %v409 = vadd.f32 %v390, %v408
  %v410 = vpop.f32.mrf.mxu0
  %v411 = vadd.f32 %v392, %v410
  %412 = vmatmul.bf16.gmra.mxu0 %v141
  %v413 = vpop.f32.mrf.mxu0
  %v414 = vadd.f32 %v395, %v413
  %v415 = vpop.f32.mrf.mxu0
  %v416 = vadd.f32 %v397, %v415
  %417 = vdwg.mxu0
  %v418 = vmax.f32 %v409, 0.0
  %v419 = vmax.f32 %v411, 0.0
  %v420 = vmax.f32 %v414, 0.0
  %v421 = vmax.f32 %v416, 0.0
  %v422 = vpack.c.bf16 %v418, %v418
  %v423 = vpack.c.bf16 %v419, %v419
  %v424 = vpack.c.bf16 %v420, %v420
  %v425 = vpack.c.bf16 %v421, %v421
  %426 = vst [vmem:[%s3] sm:$0xf] %v422
  %427 = vst [vmem:[%s3 + $0x4] sm:$0xf] %v423
  %428 = vst [vmem:[%s3 + $0x8] sm:$0xf] %v424
  %429 = vst [vmem:[%s3 + $0xc] sm:$0xf] %v425
  // Predicated region
  $region14: #{vae_forward.13} parent=0 // pred_check
    _
  $region15: #{vae_forward.13} parent=0 // pred_check_branch
    %431 = sbr.rel (0) target = $region17
  $region16: #{vae_forward.13} parent=0 // pred_region
    _
  $region17: #{vae_forward.13} parent=0 // pred_fallthru
    _
  // Predicated region
  $region18: #{vae_forward.13} parent=0 // pred_check
    _
  $region19: #{vae_forward.13} parent=0 // pred_check_branch
    %433 = sbr.rel (0) target = $region21
  $region20: #{vae_forward.13} parent=0 // pred_region
    _
  $region21: #{vae_forward.13} parent=0 // pred_fallthru
    _

// kernel: vae_forward.15
$region0: #{vae_forward.15}
  #allocation0 [shape = 'u32[]', space=smem, size = 0x4, offset = 0x4, fixed_abs, tag = 'smem constant byte address 0x4 - core index']
  #allocation1 [shape = 'u32[72,128]{1,0:T(1,128)}', space=vmem, size = 0x9000, scoped, tag = 'internal scratch']
  %s0 = inlined_call_operand.vmem [shape: bf16[8,512], index: 0, kind: input, shape index: {}]
  %s1 = inlined_call_operand.vmem [shape: bf16[512,256], index: 1, kind: input, shape index: {}]
  %s2 = inlined_call_operand.vmem [shape: f32[1,256], index: 2, kind: input, shape index: {}]
  %s3 = inlined_call_operand.vmem [shape: bf16[256,256], index: 3, kind: input, shape index: {}]
  %s4 = inlined_call_operand.vmem [shape: f32[1,256], index: 4, kind: input, shape index: {}]
  %s5 = inlined_call_operand.vmem [shape: bf16[256,10], index: 5, kind: input, shape index: {}]
  %s6 = inlined_call_operand.vmem [shape: f32[1,10], index: 6, kind: input, shape index: {}]
  %s7 = inlined_call_operand.vmem [shape: f32[8,10], index: 7, kind: output, shape index: {}]
  %s8 = sld [smem:[#allocation0]]
  $region38: #{vae_forward.15} parent=0
    _
  %s10 = ssub.s32 1, %s8
  %s11 = scalar_select 0, %s10, %s8
  // Predicated region
  $region2: #{vae_forward.15} parent=0 // pred_check
    _
  $region3: #{vae_forward.15} parent=0 // pred_check_branch
    %13 = sbr.rel (0) target = $region5
  $region4: #{vae_forward.15} parent=0 // pred_region
    _
  $region5: #{vae_forward.15} parent=0 // pred_fallthru
    _
  // Predicated region
  $region6: #{vae_forward.15} parent=0 // pred_check
    _
  $region7: #{vae_forward.15} parent=0 // pred_check_branch
    %15 = sbr.rel (0) target = $region9
  $region8: #{vae_forward.15} parent=0 // pred_region
    _
  $region9: #{vae_forward.15} parent=0 // pred_fallthru
    _
  // Predicated region
  $region10: #{vae_forward.15} parent=0 // pred_check
    _
  $region11: #{vae_forward.15} parent=0 // pred_check_branch
    %17 = sbr.rel (0) target = $region13
  $region12: #{vae_forward.15} parent=0 // pred_region
    _
  $region13: #{vae_forward.15} parent=0 // pred_fallthru
    _
  // Predicated region
  $region14: #{vae_forward.15} parent=0 // pred_check
    _
  $region15: #{vae_forward.15} parent=0 // pred_check_branch
    %19 = sbr.rel (0) target = $region17
  $region16: #{vae_forward.15} parent=0 // pred_region
    _
  $region17: #{vae_forward.15} parent=0 // pred_fallthru
    _
  // Predicated region
  $region18: #{vae_forward.15} parent=0 // pred_check
    _
  $region19: #{vae_forward.15} parent=0 // pred_check_branch
    %21 = sbr.rel (0) target = $region21
  $region20: #{vae_forward.15} parent=0 // pred_region
    _
  $region21: #{vae_forward.15} parent=0 // pred_fallthru
    _
  // Predicated region
  $region22: #{vae_forward.15} parent=0 // pred_check
    _
  $region23: #{vae_forward.15} parent=0 // pred_check_branch
    %23 = sbr.rel (0) target = $region25
  $region24: #{vae_forward.15} parent=0 // pred_region
    _
  $region25: #{vae_forward.15} parent=0 // pred_fallthru
    _
  // Predicated region
  $region26: #{vae_forward.15} parent=0 // pred_check
    _
  $region27: #{vae_forward.15} parent=0 // pred_check_branch
    %25 = sbr.rel (0) target = $region29
  $region28: #{vae_forward.15} parent=0 // pred_region
    _
  $region29: #{vae_forward.15} parent=0 // pred_fallthru
    _
  %v26 = vld [vmem:[%s0] sm:$0xff]
  %v27 = vld [vmem:[%s0 + $0x8] sm:$0xff]
  %v28 = vld [vmem:[%s1] sm:$0xff]
  %v29 = vld [vmem:[%s1 + $0x8] sm:$0xff]
  %v30 = vld [vmem:[%s1 + $0x10] sm:$0xff]
  %v31 = vld [vmem:[%s1 + $0x18] sm:$0xff]
  %v32 = vld [vmem:[%s1 + $0x20] sm:$0xff]
  %v33 = vld [vmem:[%s1 + $0x28] sm:$0xff]
  %v34 = vld [vmem:[%s1 + $0x30] sm:$0xff]
  %v35 = vld [vmem:[%s1 + $0x38] sm:$0xff]
  %v36 = vld [vmem:[%s1 + $0x40] sm:$0xff]
  %v37 = vld [vmem:[%s1 + $0x48] sm:$0xff]
  %v38 = vld [vmem:[%s1 + $0x50] sm:$0xff]
  %v39 = vld [vmem:[%s1 + $0x58] sm:$0xff]
  %v40 = vld [vmem:[%s1 + $0x60] sm:$0xff]
  %v41 = vld [vmem:[%s1 + $0x68] sm:$0xff]
  %v42 = vld [vmem:[%s1 + $0x70] sm:$0xff]
  %v43 = vld [vmem:[%s1 + $0x78] sm:$0xff]
  %v44 = vld [vmem:[%s1 + $0x80] sm:$0xff]
  %v45 = vld [vmem:[%s1 + $0x88] sm:$0xff]
  %v46 = vld [vmem:[%s1 + $0x90] sm:$0xff]
  %v47 = vld [vmem:[%s1 + $0x98] sm:$0xff]
  %v48 = vld [vmem:[%s1 + $0xa0] sm:$0xff]
  %v49 = vld [vmem:[%s1 + $0xa8] sm:$0xff]
  %v50 = vld [vmem:[%s1 + $0xb0] sm:$0xff]
  %v51 = vld [vmem:[%s1 + $0xb8] sm:$0xff]
  %v52 = vld [vmem:[%s1 + $0xc0] sm:$0xff]
  %v53 = vld [vmem:[%s1 + $0xc8] sm:$0xff]
  %v54 = vld [vmem:[%s1 + $0xd0] sm:$0xff]
  %v55 = vld [vmem:[%s1 + $0xd8] sm:$0xff]
  %v56 = vld [vmem:[%s1 + $0xe0] sm:$0xff]
  %v57 = vld [vmem:[%s1 + $0xe8] sm:$0xff]
  %v58 = vld [vmem:[%s1 + $0xf0] sm:$0xff]
  %v59 = vld [vmem:[%s1 + $0xf8] sm:$0xff]
  %v60 = vld [vmem:[%s1 + $0x100] sm:$0xff]
  %v61 = vld [vmem:[%s1 + $0x108] sm:$0xff]
  %v62 = vld [vmem:[%s1 + $0x110] sm:$0xff]
  %v63 = vld [vmem:[%s1 + $0x118] sm:$0xff]
  %v64 = vld [vmem:[%s1 + $0x120] sm:$0xff]
  %v65 = vld [vmem:[%s1 + $0x128] sm:$0xff]
  %v66 = vld [vmem:[%s1 + $0x130] sm:$0xff]
  %v67 = vld [vmem:[%s1 + $0x138] sm:$0xff]
  %v68 = vld [vmem:[%s1 + $0x140] sm:$0xff]
  %v69 = vld [vmem:[%s1 + $0x148] sm:$0xff]
  %v70 = vld [vmem:[%s1 + $0x150] sm:$0xff]
  %v71 = vld [vmem:[%s1 + $0x158] sm:$0xff]
  %v72 = vld [vmem:[%s1 + $0x160] sm:$0xff]
  %v73 = vld [vmem:[%s1 + $0x168] sm:$0xff]
  %v74 = vld [vmem:[%s1 + $0x170] sm:$0xff]
  %v75 = vld [vmem:[%s1 + $0x178] sm:$0xff]
  %v76 = vld [vmem:[%s1 + $0x180] sm:$0xff]
  %v77 = vld [vmem:[%s1 + $0x188] sm:$0xff]
  %v78 = vld [vmem:[%s1 + $0x190] sm:$0xff]
  %v79 = vld [vmem:[%s1 + $0x198] sm:$0xff]
  %v80 = vld [vmem:[%s1 + $0x1a0] sm:$0xff]
  %v81 = vld [vmem:[%s1 + $0x1a8] sm:$0xff]
  %v82 = vld [vmem:[%s1 + $0x1b0] sm:$0xff]
  %v83 = vld [vmem:[%s1 + $0x1b8] sm:$0xff]
  %v84 = vld [vmem:[%s1 + $0x1c0] sm:$0xff]
  %v85 = vld [vmem:[%s1 + $0x1c8] sm:$0xff]
  %v86 = vld [vmem:[%s1 + $0x1d0] sm:$0xff]
  %v87 = vld [vmem:[%s1 + $0x1d8] sm:$0xff]
  %v88 = vld [vmem:[%s1 + $0x1e0] sm:$0xff]
  %v89 = vld [vmem:[%s1 + $0x1e8] sm:$0xff]
  %v90 = vld [vmem:[%s1 + $0x1f0] sm:$0xff]
  %v91 = vld [vmem:[%s1 + $0x1f8] sm:$0xff]
  %v92 = vld [vmem:[%s2] sm:$0x3]
  %v94 = vperm.slane %v92, 0
  %v95 = vperm.slane %v92, 1
  %v100 = vunpack.c.l.b16 %v26
  %v101 = vunpack.c.h.b16 %v26
  %v102 = vunpack.c.l.b16 %v27
  %v103 = vunpack.c.h.b16 %v27
  %v104 = vpack.c.b16 %v100, %v100
  %v105 = vpack.c.b16 %v101, %v101
  %v106 = vpack.c.b16 %v102, %v102
  %v107 = vpack.c.b16 %v103, %v103
  %v176 = vunpack.c.l.b16 %v28
  %v177 = vunpack.c.h.b16 %v28
  %v178 = vunpack.c.l.b16 %v29
  %v179 = vunpack.c.h.b16 %v29
  %v180 = vunpack.c.l.b16 %v30
  %v181 = vunpack.c.h.b16 %v30
  %v182 = vunpack.c.l.b16 %v31
  %v183 = vunpack.c.h.b16 %v31
  %v184 = vunpack.c.l.b16 %v32
  %v185 = vunpack.c.h.b16 %v32
  %v186 = vunpack.c.l.b16 %v33
  %v187 = vunpack.c.h.b16 %v33
  %v188 = vunpack.c.l.b16 %v34
  %v189 = vunpack.c.h.b16 %v34
  %v190 = vunpack.c.l.b16 %v35
  %v191 = vunpack.c.h.b16 %v35
  %v192 = vunpack.c.l.b16 %v36
  %v193 = vunpack.c.h.b16 %v36
  %v194 = vunpack.c.l.b16 %v37
  %v195 = vunpack.c.h.b16 %v37
  %v196 = vunpack.c.l.b16 %v38
  %v197 = vunpack.c.h.b16 %v38
  %v198 = vunpack.c.l.b16 %v39
  %v199 = vunpack.c.h.b16 %v39
  %v200 = vunpack.c.l.b16 %v40
  %v201 = vunpack.c.h.b16 %v40
  %v202 = vunpack.c.l.b16 %v41
  %v203 = vunpack.c.h.b16 %v41
  %v204 = vunpack.c.l.b16 %v42
  %v205 = vunpack.c.h.b16 %v42
  %v206 = vunpack.c.l.b16 %v43
  %v207 = vunpack.c.h.b16 %v43
  %v208 = vunpack.c.l.b16 %v44
  %v209 = vunpack.c.h.b16 %v44
  %v210 = vunpack.c.l.b16 %v45
  %v211 = vunpack.c.h.b16 %v45
  %v212 = vunpack.c.l.b16 %v46
  %v213 = vunpack.c.h.b16 %v46
  %v214 = vunpack.c.l.b16 %v47
  %v215 = vunpack.c.h.b16 %v47
  %v216 = vunpack.c.l.b16 %v48
  %v217 = vunpack.c.h.b16 %v48
  %v218 = vunpack.c.l.b16 %v49
  %v219 = vunpack.c.h.b16 %v49
  %v220 = vunpack.c.l.b16 %v50
  %v221 = vunpack.c.h.b16 %v50
  %v222 = vunpack.c.l.b16 %v51
  %v223 = vunpack.c.h.b16 %v51
  %v224 = vunpack.c.l.b16 %v52
  %v225 = vunpack.c.h.b16 %v52
  %v226 = vunpack.c.l.b16 %v53
  %v227 = vunpack.c.h.b16 %v53
  %v228 = vunpack.c.l.b16 %v54
  %v229 = vunpack.c.h.b16 %v54
  %v230 = vunpack.c.l.b16 %v55
  %v231 = vunpack.c.h.b16 %v55
  %v232 = vunpack.c.l.b16 %v56
  %v233 = vunpack.c.h.b16 %v56
  %v234 = vunpack.c.l.b16 %v57
  %v235 = vunpack.c.h.b16 %v57
  %v236 = vunpack.c.l.b16 %v58
  %v237 = vunpack.c.h.b16 %v58
  %v238 = vunpack.c.l.b16 %v59
  %v239 = vunpack.c.h.b16 %v59
  %v240 = vunpack.c.l.b16 %v60
  %v241 = vunpack.c.h.b16 %v60
  %v242 = vunpack.c.l.b16 %v61
  %v243 = vunpack.c.h.b16 %v61
  %v244 = vunpack.c.l.b16 %v62
  %v245 = vunpack.c.h.b16 %v62
  %v246 = vunpack.c.l.b16 %v63
  %v247 = vunpack.c.h.b16 %v63
  %v248 = vunpack.c.l.b16 %v64
  %v249 = vunpack.c.h.b16 %v64
  %v250 = vunpack.c.l.b16 %v65
  %v251 = vunpack.c.h.b16 %v65
  %v252 = vunpack.c.l.b16 %v66
  %v253 = vunpack.c.h.b16 %v66
  %v254 = vunpack.c.l.b16 %v67
  %v255 = vunpack.c.h.b16 %v67
  %v256 = vunpack.c.l.b16 %v68
  %v257 = vunpack.c.h.b16 %v68
  %v258 = vunpack.c.l.b16 %v69
  %v259 = vunpack.c.h.b16 %v69
  %v260 = vunpack.c.l.b16 %v70
  %v261 = vunpack.c.h.b16 %v70
  %v262 = vunpack.c.l.b16 %v71
  %v263 = vunpack.c.h.b16 %v71
  %v264 = vunpack.c.l.b16 %v72
  %v265 = vunpack.c.h.b16 %v72
  %v266 = vunpack.c.l.b16 %v73
  %v267 = vunpack.c.h.b16 %v73
  %v268 = vunpack.c.l.b16 %v74
  %v269 = vunpack.c.h.b16 %v74
  %v270 = vunpack.c.l.b16 %v75
  %v271 = vunpack.c.h.b16 %v75
  %v272 = vunpack.c.l.b16 %v76
  %v273 = vunpack.c.h.b16 %v76
  %v274 = vunpack.c.l.b16 %v77
  %v275 = vunpack.c.h.b16 %v77
  %v276 = vunpack.c.l.b16 %v78
  %v277 = vunpack.c.h.b16 %v78
  %v278 = vunpack.c.l.b16 %v79
  %v279 = vunpack.c.h.b16 %v79
  %v280 = vunpack.c.l.b16 %v80
  %v281 = vunpack.c.h.b16 %v80
  %v282 = vunpack.c.l.b16 %v81
  %v283 = vunpack.c.h.b16 %v81
  %v284 = vunpack.c.l.b16 %v82
  %v285 = vunpack.c.h.b16 %v82
  %v286 = vunpack.c.l.b16 %v83
  %v287 = vunpack.c.h.b16 %v83
  %v288 = vunpack.c.l.b16 %v84
  %v289 = vunpack.c.h.b16 %v84
  %v290 = vunpack.c.l.b16 %v85
  %v291 = vunpack.c.h.b16 %v85
  %v292 = vunpack.c.l.b16 %v86
  %v293 = vunpack.c.h.b16 %v86
  %v294 = vunpack.c.l.b16 %v87
  %v295 = vunpack.c.h.b16 %v87
  %v296 = vunpack.c.l.b16 %v88
  %v297 = vunpack.c.h.b16 %v88
  %v298 = vunpack.c.l.b16 %v89
  %v299 = vunpack.c.h.b16 %v89
  %v300 = vunpack.c.l.b16 %v90
  %v301 = vunpack.c.h.b16 %v90
  %v302 = vunpack.c.l.b16 %v91
  %v303 = vunpack.c.h.b16 %v91
  %v304 = vpack.c.b16 %v178, %v176
  %v305 = vpack.c.b16 %v179, %v177
  %v306 = vpack.c.b16 %v182, %v180
  %v307 = vpack.c.b16 %v183, %v181
  %v308 = vpack.c.b16 %v186, %v184
  %v309 = vpack.c.b16 %v187, %v185
  %v310 = vpack.c.b16 %v190, %v188
  %v311 = vpack.c.b16 %v191, %v189
  %v312 = vpack.c.b16 %v194, %v192
  %v313 = vpack.c.b16 %v195, %v193
  %v314 = vpack.c.b16 %v198, %v196
  %v315 = vpack.c.b16 %v199, %v197
  %v316 = vpack.c.b16 %v202, %v200
  %v317 = vpack.c.b16 %v203, %v201
  %v318 = vpack.c.b16 %v206, %v204
  %v319 = vpack.c.b16 %v207, %v205
  %v320 = vpack.c.b16 %v210, %v208
  %v321 = vpack.c.b16 %v211, %v209
  %v322 = vpack.c.b16 %v214, %v212
  %v323 = vpack.c.b16 %v215, %v213
  %v324 = vpack.c.b16 %v218, %v216
  %v325 = vpack.c.b16 %v219, %v217
  %v326 = vpack.c.b16 %v222, %v220
  %v327 = vpack.c.b16 %v223, %v221
  %v328 = vpack.c.b16 %v226, %v224
  %v329 = vpack.c.b16 %v227, %v225
  %v330 = vpack.c.b16 %v230, %v228
  %v331 = vpack.c.b16 %v231, %v229
  %v332 = vpack.c.b16 %v234, %v232
  %v333 = vpack.c.b16 %v235, %v233
  %v334 = vpack.c.b16 %v238, %v236
  %v335 = vpack.c.b16 %v239, %v237
  %v336 = vpack.c.b16 %v242, %v240
  %v337 = vpack.c.b16 %v243, %v241
  %v338 = vpack.c.b16 %v246, %v244
  %v339 = vpack.c.b16 %v247, %v245
  %v340 = vpack.c.b16 %v250, %v248
  %v341 = vpack.c.b16 %v251, %v249
  %v342 = vpack.c.b16 %v254, %v252
  %v343 = vpack.c.b16 %v255, %v253
  %v344 = vpack.c.b16 %v258, %v256
  %v345 = vpack.c.b16 %v259, %v257
  %v346 = vpack.c.b16 %v262, %v260
  %v347 = vpack.c.b16 %v263, %v261
  %v348 = vpack.c.b16 %v266, %v264
  %v349 = vpack.c.b16 %v267, %v265
  %v350 = vpack.c.b16 %v270, %v268
  %v351 = vpack.c.b16 %v271, %v269
  %v352 = vpack.c.b16 %v274, %v272
  %v353 = vpack.c.b16 %v275, %v273
  %v354 = vpack.c.b16 %v278, %v276
  %v355 = vpack.c.b16 %v279, %v277
  %v356 = vpack.c.b16 %v282, %v280
  %v357 = vpack.c.b16 %v283, %v281
  %v358 = vpack.c.b16 %v286, %v284
  %v359 = vpack.c.b16 %v287, %v285
  %v360 = vpack.c.b16 %v290, %v288
  %v361 = vpack.c.b16 %v291, %v289
  %v362 = vpack.c.b16 %v294, %v292
  %v363 = vpack.c.b16 %v295, %v293
  %v364 = vpack.c.b16 %v298, %v296
  %v365 = vpack.c.b16 %v299, %v297
  %v366 = vpack.c.b16 %v302, %v300
  %v367 = vpack.c.b16 %v303, %v301
  %432 = vmatpush.bf16.msra.mxu0 %v318
  %433 = vmatpush.bf16.msra.mxu0 %v316
  %434 = vmatpush.bf16.msra.mxu0 %v314
  %435 = vmatpush.bf16.msra.mxu0 %v312
  %436 = vmatpush.bf16.msra.mxu0 %v310
  %437 = vmatpush.bf16.msra.mxu0 %v308
  %438 = vmatpush.bf16.msra.mxu0 %v306
  %439 = vmatpush.bf16.msra.mxu0 %v304
  %440 = vmatmul.bf16.gmra.mxu0 %v104
  %v441 = vpop.f32.mrf.mxu0
  %v442 = vadd.f32 %v94, %v441
  %v443 = vpop.f32.mrf.mxu0
  %444 = vdwg.mxu0
  %445 = vmatpush.bf16.msra.mxu0 %v334
  %446 = vmatpush.bf16.msra.mxu0 %v332
  %447 = vmatpush.bf16.msra.mxu0 %v330
  %448 = vmatpush.bf16.msra.mxu0 %v328
  %449 = vmatpush.bf16.msra.mxu0 %v326
  %450 = vmatpush.bf16.msra.mxu0 %v324
  %451 = vmatpush.bf16.msra.mxu0 %v322
  %452 = vmatpush.bf16.msra.mxu0 %v320
  %453 = vmatmul.bf16.gmra.mxu0 %v105
  %v454 = vpop.f32.mrf.mxu0
  %v455 = vadd.f32 %v442, %v454
  %v456 = vpop.f32.mrf.mxu0
  %457 = vdwg.mxu0
  %458 = vmatpush.bf16.msra.mxu0 %v350
  %459 = vmatpush.bf16.msra.mxu0 %v348
  %460 = vmatpush.bf16.msra.mxu0 %v346
  %461 = vmatpush.bf16.msra.mxu0 %v344
  %462 = vmatpush.bf16.msra.mxu0 %v342
  %463 = vmatpush.bf16.msra.mxu0 %v340
  %464 = vmatpush.bf16.msra.mxu0 %v338
  %465 = vmatpush.bf16.msra.mxu0 %v336
  %466 = vmatmul.bf16.gmra.mxu0 %v106
  %v467 = vpop.f32.mrf.mxu0
  %v468 = vadd.f32 %v455, %v467
  %v469 = vpop.f32.mrf.mxu0
  %470 = vdwg.mxu0
  %471 = vmatpush.bf16.msra.mxu0 %v366
  %472 = vmatpush.bf16.msra.mxu0 %v364
  %473 = vmatpush.bf16.msra.mxu0 %v362
  %474 = vmatpush.bf16.msra.mxu0 %v360
  %475 = vmatpush.bf16.msra.mxu0 %v358
  %476 = vmatpush.bf16.msra.mxu0 %v356
  %477 = vmatpush.bf16.msra.mxu0 %v354
  %478 = vmatpush.bf16.msra.mxu0 %v352
  %479 = vmatmul.bf16.gmra.mxu0 %v107
  %v480 = vpop.f32.mrf.mxu0
  %v481 = vadd.f32 %v468, %v480
  %v482 = vpop.f32.mrf.mxu0
  %483 = vdwg.mxu0
  %484 = vmatpush.bf16.msra.mxu0 %v319
  %485 = vmatpush.bf16.msra.mxu0 %v317
  %486 = vmatpush.bf16.msra.mxu0 %v315
  %487 = vmatpush.bf16.msra.mxu0 %v313
  %488 = vmatpush.bf16.msra.mxu0 %v311
  %489 = vmatpush.bf16.msra.mxu0 %v309
  %490 = vmatpush.bf16.msra.mxu0 %v307
  %491 = vmatpush.bf16.msra.mxu0 %v305
  %492 = vmatmul.bf16.gmra.mxu0 %v104
  %v493 = vpop.f32.mrf.mxu0
  %v494 = vadd.f32 %v95, %v493
  %v495 = vpop.f32.mrf.mxu0
  %496 = vdwg.mxu0
  %497 = vmatpush.bf16.msra.mxu0 %v335
  %498 = vmatpush.bf16.msra.mxu0 %v333
  %499 = vmatpush.bf16.msra.mxu0 %v331
  %500 = vmatpush.bf16.msra.mxu0 %v329
  %501 = vmatpush.bf16.msra.mxu0 %v327
  %502 = vmatpush.bf16.msra.mxu0 %v325
  %503 = vmatpush.bf16.msra.mxu0 %v323
  %504 = vmatpush.bf16.msra.mxu0 %v321
  %505 = vmatmul.bf16.gmra.mxu0 %v105
  %v506 = vpop.f32.mrf.mxu0
  %v507 = vadd.f32 %v494, %v506
  %v508 = vpop.f32.mrf.mxu0
  %509 = vdwg.mxu0
  %510 = vmatpush.bf16.msra.mxu0 %v351
  %511 = vmatpush.bf16.msra.mxu0 %v349
  %512 = vmatpush.bf16.msra.mxu0 %v347
  %513 = vmatpush.bf16.msra.mxu0 %v345
  %514 = vmatpush.bf16.msra.mxu0 %v343
  %515 = vmatpush.bf16.msra.mxu0 %v341
  %516 = vmatpush.bf16.msra.mxu0 %v339
  %517 = vmatpush.bf16.msra.mxu0 %v337
  %518 = vmatmul.bf16.gmra.mxu0 %v106
  %v519 = vpop.f32.mrf.mxu0
  %v520 = vadd.f32 %v507, %v519
  %v521 = vpop.f32.mrf.mxu0
  %522 = vdwg.mxu0
  %523 = vmatpush.bf16.msra.mxu0 %v367
  %524 = vmatpush.bf16.msra.mxu0 %v365
  %525 = vmatpush.bf16.msra.mxu0 %v363
  %526 = vmatpush.bf16.msra.mxu0 %v361
  %527 = vmatpush.bf16.msra.mxu0 %v359
  %528 = vmatpush.bf16.msra.mxu0 %v357
  %529 = vmatpush.bf16.msra.mxu0 %v355
  %530 = vmatpush.bf16.msra.mxu0 %v353
  %531 = vmatmul.bf16.gmra.mxu0 %v107
  %v532 = vpop.f32.mrf.mxu0
  %v533 = vadd.f32 %v520, %v532
  %v534 = vpop.f32.mrf.mxu0
  %535 = vdwg.mxu0
  %v536 = vmax.f32 %v481, 0.0
  %v537 = vmax.f32 %v533, 0.0
  %v538 = vpack.c.bf16 %v536, %v536
  %v539 = vpack.c.bf16 %v537, %v537
  %v540 = vld [vmem:[%s3] sm:$0xff]
  %v541 = vld [vmem:[%s3 + $0x8] sm:$0xff]
  %v542 = vld [vmem:[%s3 + $0x10] sm:$0xff]
  %v543 = vld [vmem:[%s3 + $0x18] sm:$0xff]
  %v544 = vld [vmem:[%s3 + $0x20] sm:$0xff]
  %v545 = vld [vmem:[%s3 + $0x28] sm:$0xff]
  %v546 = vld [vmem:[%s3 + $0x30] sm:$0xff]
  %v547 = vld [vmem:[%s3 + $0x38] sm:$0xff]
  %v548 = vld [vmem:[%s3 + $0x40] sm:$0xff]
  %v549 = vld [vmem:[%s3 + $0x48] sm:$0xff]
  %v550 = vld [vmem:[%s3 + $0x50] sm:$0xff]
  %v551 = vld [vmem:[%s3 + $0x58] sm:$0xff]
  %v552 = vld [vmem:[%s3 + $0x60] sm:$0xff]
  %v553 = vld [vmem:[%s3 + $0x68] sm:$0xff]
  %v554 = vld [vmem:[%s3 + $0x70] sm:$0xff]
  %v555 = vld [vmem:[%s3 + $0x78] sm:$0xff]
  %v556 = vld [vmem:[%s3 + $0x80] sm:$0xff]
  %v557 = vld [vmem:[%s3 + $0x88] sm:$0xff]
  %v558 = vld [vmem:[%s3 + $0x90] sm:$0xff]
  %v559 = vld [vmem:[%s3 + $0x98] sm:$0xff]
  %v560 = vld [vmem:[%s3 + $0xa0] sm:$0xff]
  %v561 = vld [vmem:[%s3 + $0xa8] sm:$0xff]
  %v562 = vld [vmem:[%s3 + $0xb0] sm:$0xff]
  %v563 = vld [vmem:[%s3 + $0xb8] sm:$0xff]
  %v564 = vld [vmem:[%s3 + $0xc0] sm:$0xff]
  %v565 = vld [vmem:[%s3 + $0xc8] sm:$0xff]
  %v566 = vld [vmem:[%s3 + $0xd0] sm:$0xff]
  %v567 = vld [vmem:[%s3 + $0xd8] sm:$0xff]
  %v568 = vld [vmem:[%s3 + $0xe0] sm:$0xff]
  %v569 = vld [vmem:[%s3 + $0xe8] sm:$0xff]
  %v570 = vld [vmem:[%s3 + $0xf0] sm:$0xff]
  %v571 = vld [vmem:[%s3 + $0xf8] sm:$0xff]
  %v572 = vld [vmem:[%s4] sm:$0x3]
  %v574 = vperm.slane %v572, 0
  %v575 = vperm.slane %v572, 1
  %v610 = vunpack.c.l.b16 %v540
  %v611 = vunpack.c.h.b16 %v540
  %v612 = vunpack.c.l.b16 %v541
  %v613 = vunpack.c.h.b16 %v541
  %v614 = vunpack.c.l.b16 %v542
  %v615 = vunpack.c.h.b16 %v542
  %v616 = vunpack.c.l.b16 %v543
  %v617 = vunpack.c.h.b16 %v543
  %v618 = vunpack.c.l.b16 %v544
  %v619 = vunpack.c.h.b16 %v544
  %v620 = vunpack.c.l.b16 %v545
  %v621 = vunpack.c.h.b16 %v545
  %v622 = vunpack.c.l.b16 %v546
  %v623 = vunpack.c.h.b16 %v546
  %v624 = vunpack.c.l.b16 %v547
  %v625 = vunpack.c.h.b16 %v547
  %v626 = vunpack.c.l.b16 %v548
  %v627 = vunpack.c.h.b16 %v548
  %v628 = vunpack.c.l.b16 %v549
  %v629 = vunpack.c.h.b16 %v549
  %v630 = vunpack.c.l.b16 %v550
  %v631 = vunpack.c.h.b16 %v550
  %v632 = vunpack.c.l.b16 %v551
  %v633 = vunpack.c.h.b16 %v551
  %v634 = vunpack.c.l.b16 %v552
  %v635 = vunpack.c.h.b16 %v552
  %v636 = vunpack.c.l.b16 %v553
  %v637 = vunpack.c.h.b16 %v553
  %v638 = vunpack.c.l.b16 %v554
  %v639 = vunpack.c.h.b16 %v554
  %v640 = vunpack.c.l.b16 %v555
  %v641 = vunpack.c.h.b16 %v555
  %v642 = vunpack.c.l.b16 %v556
  %v643 = vunpack.c.h.b16 %v556
  %v644 = vunpack.c.l.b16 %v557
  %v645 = vunpack.c.h.b16 %v557
  %v646 = vunpack.c.l.b16 %v558
  %v647 = vunpack.c.h.b16 %v558
  %v648 = vunpack.c.l.b16 %v559
  %v649 = vunpack.c.h.b16 %v559
  %v650 = vunpack.c.l.b16 %v560
  %v651 = vunpack.c.h.b16 %v560
  %v652 = vunpack.c.l.b16 %v561
  %v653 = vunpack.c.h.b16 %v561
  %v654 = vunpack.c.l.b16 %v562
  %v655 = vunpack.c.h.b16 %v562
  %v656 = vunpack.c.l.b16 %v563
  %v657 = vunpack.c.h.b16 %v563
  %v658 = vunpack.c.l.b16 %v564
  %v659 = vunpack.c.h.b16 %v564
  %v660 = vunpack.c.l.b16 %v565
  %v661 = vunpack.c.h.b16 %v565
  %v662 = vunpack.c.l.b16 %v566
  %v663 = vunpack.c.h.b16 %v566
  %v664 = vunpack.c.l.b16 %v567
  %v665 = vunpack.c.h.b16 %v567
  %v666 = vunpack.c.l.b16 %v568
  %v667 = vunpack.c.h.b16 %v568
  %v668 = vunpack.c.l.b16 %v569
  %v669 = vunpack.c.h.b16 %v569
  %v670 = vunpack.c.l.b16 %v570
  %v671 = vunpack.c.h.b16 %v570
  %v672 = vunpack.c.l.b16 %v571
  %v673 = vunpack.c.h.b16 %v571
  %v674 = vpack.c.b16 %v612, %v610
  %v675 = vpack.c.b16 %v613, %v611
  %v676 = vpack.c.b16 %v616, %v614
  %v677 = vpack.c.b16 %v617, %v615
  %v678 = vpack.c.b16 %v620, %v618
  %v679 = vpack.c.b16 %v621, %v619
  %v680 = vpack.c.b16 %v624, %v622
  %v681 = vpack.c.b16 %v625, %v623
  %v682 = vpack.c.b16 %v628, %v626
  %v683 = vpack.c.b16 %v629, %v627
  %v684 = vpack.c.b16 %v632, %v630
  %v685 = vpack.c.b16 %v633, %v631
  %v686 = vpack.c.b16 %v636, %v634
  %v687 = vpack.c.b16 %v637, %v635
  %v688 = vpack.c.b16 %v640, %v638
  %v689 = vpack.c.b16 %v641, %v639
  %v690 = vpack.c.b16 %v644, %v642
  %v691 = vpack.c.b16 %v645, %v643
  %v692 = vpack.c.b16 %v648, %v646
  %v693 = vpack.c.b16 %v649, %v647
  %v694 = vpack.c.b16 %v652, %v650
  %v695 = vpack.c.b16 %v653, %v651
  %v696 = vpack.c.b16 %v656, %v654
  %v697 = vpack.c.b16 %v657, %v655
  %v698 = vpack.c.b16 %v660, %v658
  %v699 = vpack.c.b16 %v661, %v659
  %v700 = vpack.c.b16 %v664, %v662
  %v701 = vpack.c.b16 %v665, %v663
  %v702 = vpack.c.b16 %v668, %v666
  %v703 = vpack.c.b16 %v669, %v667
  %v704 = vpack.c.b16 %v672, %v670
  %v705 = vpack.c.b16 %v673, %v671
  %738 = vmatpush.bf16.msra.mxu0 %v688
  %739 = vmatpush.bf16.msra.mxu0 %v686
  %740 = vmatpush.bf16.msra.mxu0 %v684
  %741 = vmatpush.bf16.msra.mxu0 %v682
  %742 = vmatpush.bf16.msra.mxu0 %v680
  %743 = vmatpush.bf16.msra.mxu0 %v678
  %744 = vmatpush.bf16.msra.mxu0 %v676
  %745 = vmatpush.bf16.msra.mxu0 %v674
  %746 = vmatmul.bf16.gmra.mxu0 %v538
  %v747 = vpop.f32.mrf.mxu0
  %v748 = vadd.f32 %v574, %v747
  %v749 = vpop.f32.mrf.mxu0
  %750 = vdwg.mxu0
  %751 = vmatpush.bf16.msra.mxu0 %v704
  %752 = vmatpush.bf16.msra.mxu0 %v702
  %753 = vmatpush.bf16.msra.mxu0 %v700
  %754 = vmatpush.bf16.msra.mxu0 %v698
  %755 = vmatpush.bf16.msra.mxu0 %v696
  %756 = vmatpush.bf16.msra.mxu0 %v694
  %757 = vmatpush.bf16.msra.mxu0 %v692
  %758 = vmatpush.bf16.msra.mxu0 %v690
  %759 = vmatmul.bf16.gmra.mxu0 %v539
  %v760 = vpop.f32.mrf.mxu0
  %v761 = vadd.f32 %v748, %v760
  %v762 = vpop.f32.mrf.mxu0
  %763 = vdwg.mxu0
  %764 = vmatpush.bf16.msra.mxu0 %v689
  %765 = vmatpush.bf16.msra.mxu0 %v687
  %766 = vmatpush.bf16.msra.mxu0 %v685
  %767 = vmatpush.bf16.msra.mxu0 %v683
  %768 = vmatpush.bf16.msra.mxu0 %v681
  %769 = vmatpush.bf16.msra.mxu0 %v679
  %770 = vmatpush.bf16.msra.mxu0 %v677
  %771 = vmatpush.bf16.msra.mxu0 %v675
  %772 = vmatmul.bf16.gmra.mxu0 %v538
  %v773 = vpop.f32.mrf.mxu0
  %v774 = vadd.f32 %v575, %v773
  %v775 = vpop.f32.mrf.mxu0
  %776 = vdwg.mxu0
  %777 = vmatpush.bf16.msra.mxu0 %v705
  %778 = vmatpush.bf16.msra.mxu0 %v703
  %779 = vmatpush.bf16.msra.mxu0 %v701
  %780 = vmatpush.bf16.msra.mxu0 %v699
  %781 = vmatpush.bf16.msra.mxu0 %v697
  %782 = vmatpush.bf16.msra.mxu0 %v695
  %783 = vmatpush.bf16.msra.mxu0 %v693
  %784 = vmatpush.bf16.msra.mxu0 %v691
  %785 = vmatmul.bf16.gmra.mxu0 %v539
  %v786 = vpop.f32.mrf.mxu0
  %v787 = vadd.f32 %v774, %v786
  %v788 = vpop.f32.mrf.mxu0
  %789 = vdwg.mxu0
  %v790 = vmax.f32 %v761, 0.0
  %v791 = vmax.f32 %v787, 0.0
  %v792 = vpack.c.bf16 %v790, %v790
  %v793 = vpack.c.bf16 %v791, %v791
  %v794 = vld [vmem:[%s5] sm:$0xf]
  %v795 = vld [vmem:[%s5 + $0x4] sm:$0xf]
  %v796 = vld [vmem:[%s5 + $0x8] sm:$0xf]
  %v797 = vld [vmem:[%s5 + $0xc] sm:$0xf]
  %v798 = vld [vmem:[%s5 + $0x10] sm:$0xf]
  %v799 = vld [vmem:[%s5 + $0x14] sm:$0xf]
  %v800 = vld [vmem:[%s5 + $0x18] sm:$0xf]
  %v801 = vld [vmem:[%s5 + $0x1c] sm:$0xf]
  %v802 = vld [vmem:[%s5 + $0x20] sm:$0xf]
  %v803 = vld [vmem:[%s5 + $0x24] sm:$0xf]
  %v804 = vld [vmem:[%s5 + $0x28] sm:$0xf]
  %v805 = vld [vmem:[%s5 + $0x2c] sm:$0xf]
  %v806 = vld [vmem:[%s5 + $0x30] sm:$0xf]
  %v807 = vld [vmem:[%s5 + $0x34] sm:$0xf]
  %v808 = vld [vmem:[%s5 + $0x38] sm:$0xf]
  %v809 = vld [vmem:[%s5 + $0x3c] sm:$0xf]
  %v810 = vld [vmem:[%s5 + $0x40] sm:$0xf]
  %v811 = vld [vmem:[%s5 + $0x44] sm:$0xf]
  %v812 = vld [vmem:[%s5 + $0x48] sm:$0xf]
  %v813 = vld [vmem:[%s5 + $0x4c] sm:$0xf]
  %v814 = vld [vmem:[%s5 + $0x50] sm:$0xf]
  %v815 = vld [vmem:[%s5 + $0x54] sm:$0xf]
  %v816 = vld [vmem:[%s5 + $0x58] sm:$0xf]
  %v817 = vld [vmem:[%s5 + $0x5c] sm:$0xf]
  %v818 = vld [vmem:[%s5 + $0x60] sm:$0xf]
  %v819 = vld [vmem:[%s5 + $0x64] sm:$0xf]
  %v820 = vld [vmem:[%s5 + $0x68] sm:$0xf]
  %v821 = vld [vmem:[%s5 + $0x6c] sm:$0xf]
  %v822 = vld [vmem:[%s5 + $0x70] sm:$0xf]
  %v823 = vld [vmem:[%s5 + $0x74] sm:$0xf]
  %v824 = vld [vmem:[%s5 + $0x78] sm:$0xf]
  %v825 = vld [vmem:[%s5 + $0x7c] sm:$0xf]
  %v826 = vld [vmem:[%s6] sm:$0x1]
  %v828 = vperm.slane %v826, 0
  %v862 = vunpack.c.l.b16 %v794
  %v863 = vunpack.c.l.b16 %v795
  %v864 = vunpack.c.l.b16 %v796
  %v865 = vunpack.c.l.b16 %v797
  %v866 = vunpack.c.l.b16 %v798
  %v867 = vunpack.c.l.b16 %v799
  %v868 = vunpack.c.l.b16 %v800
  %v869 = vunpack.c.l.b16 %v801
  %v870 = vunpack.c.l.b16 %v802
  %v871 = vunpack.c.l.b16 %v803
  %v872 = vunpack.c.l.b16 %v804
  %v873 = vunpack.c.l.b16 %v805
  %v874 = vunpack.c.l.b16 %v806
  %v875 = vunpack.c.l.b16 %v807
  %v876 = vunpack.c.l.b16 %v808
  %v877 = vunpack.c.l.b16 %v809
  %v878 = vunpack.c.l.b16 %v810
  %v879 = vunpack.c.l.b16 %v811
  %v880 = vunpack.c.l.b16 %v812
  %v881 = vunpack.c.l.b16 %v813
  %v882 = vunpack.c.l.b16 %v814
  %v883 = vunpack.c.l.b16 %v815
  %v884 = vunpack.c.l.b16 %v816
  %v885 = vunpack.c.l.b16 %v817
  %v886 = vunpack.c.l.b16 %v818
  %v887 = vunpack.c.l.b16 %v819
  %v888 = vunpack.c.l.b16 %v820
  %v889 = vunpack.c.l.b16 %v821
  %v890 = vunpack.c.l.b16 %v822
  %v891 = vunpack.c.l.b16 %v823
  %v892 = vunpack.c.l.b16 %v824
  %v893 = vunpack.c.l.b16 %v825
  %v894 = vpack.c.b16 %v863, %v862
  %v895 = vpack.c.b16 %v865, %v864
  %v896 = vpack.c.b16 %v867, %v866
  %v897 = vpack.c.b16 %v869, %v868
  %v898 = vpack.c.b16 %v871, %v870
  %v899 = vpack.c.b16 %v873, %v872
  %v900 = vpack.c.b16 %v875, %v874
  %v901 = vpack.c.b16 %v877, %v876
  %v902 = vpack.c.b16 %v879, %v878
  %v903 = vpack.c.b16 %v881, %v880
  %v904 = vpack.c.b16 %v883, %v882
  %v905 = vpack.c.b16 %v885, %v884
  %v906 = vpack.c.b16 %v887, %v886
  %v907 = vpack.c.b16 %v889, %v888
  %v908 = vpack.c.b16 %v891, %v890
  %v909 = vpack.c.b16 %v893, %v892
  %926 = vmatpush.bf16.msra.mxu0 %v901
  %927 = vmatpush.bf16.msra.mxu0 %v900
  %928 = vmatpush.bf16.msra.mxu0 %v899
  %929 = vmatpush.bf16.msra.mxu0 %v898
  %930 = vmatpush.bf16.msra.mxu0 %v897
  %931 = vmatpush.bf16.msra.mxu0 %v896
  %932 = vmatpush.bf16.msra.mxu0 %v895
  %933 = vmatpush.bf16.msra.mxu0 %v894
  %934 = vmatmul.bf16.gmra.mxu0 %v792
  %v935 = vpop.f32.mrf.mxu0
  %v936 = vadd.f32 %v828, %v935
  %v937 = vpop.f32.mrf.mxu0
  %938 = vdwg.mxu0
  %939 = vmatpush.bf16.msra.mxu0 %v909
  %940 = vmatpush.bf16.msra.mxu0 %v908
  %941 = vmatpush.bf16.msra.mxu0 %v907
  %942 = vmatpush.bf16.msra.mxu0 %v906
  %943 = vmatpush.bf16.msra.mxu0 %v905
  %944 = vmatpush.bf16.msra.mxu0 %v904
  %945 = vmatpush.bf16.msra.mxu0 %v903
  %946 = vmatpush.bf16.msra.mxu0 %v902
  %947 = vmatmul.bf16.gmra.mxu0 %v793
  %v948 = vpop.f32.mrf.mxu0
  %v949 = vadd.f32 %v936, %v948
  %v950 = vpop.f32.mrf.mxu0
  %951 = vdwg.mxu0
  %vm952 = vcmask 80896
  %953 = vst.msk [vmem:[%s7] sm:$0xff] %vm952, %v949
  // Predicated region
  $region30: #{vae_forward.15} parent=0 // pred_check
    _
  $region31: #{vae_forward.15} parent=0 // pred_check_branch
    %955 = sbr.rel (0) target = $region33
  $region32: #{vae_forward.15} parent=0 // pred_region
    _
  $region33: #{vae_forward.15} parent=0 // pred_fallthru
    _
  // Predicated region
  $region34: #{vae_forward.15} parent=0 // pred_check
    _
  $region35: #{vae_forward.15} parent=0 // pred_check_branch
    %957 = sbr.rel (0) target = $region37
  $region36: #{vae_forward.15} parent=0 // pred_region
    _
  $region37: #{vae_forward.15} parent=0 // pred_fallthru
    _

// kernel: vae_forward.16
$region0: #{vae_forward.16}
  #allocation0 [shape = 'u32[]', space=smem, size = 0x4, offset = 0x4, fixed_abs, tag = 'smem constant byte address 0x4 - core index']
  #allocation1 [shape = 'u32[72,128]{1,0:T(1,128)}', space=vmem, size = 0x9000, scoped, tag = 'internal scratch']
  %s0 = inlined_call_operand.vmem [shape: bf16[8,5], index: 0, kind: input, shape index: {}]
  %s1 = inlined_call_operand.vmem [shape: bf16[5,256], index: 1, kind: input, shape index: {}]
  %s2 = inlined_call_operand.vmem [shape: f32[1,256], index: 2, kind: input, shape index: {}]
  %s3 = inlined_call_operand.vmem [shape: bf16[256,256], index: 3, kind: input, shape index: {}]
  %s4 = inlined_call_operand.vmem [shape: f32[1,256], index: 4, kind: input, shape index: {}]
  %s5 = inlined_call_operand.vmem [shape: bf16[256,512], index: 5, kind: input, shape index: {}]
  %s6 = inlined_call_operand.vmem [shape: f32[1,512], index: 6, kind: input, shape index: {}]
  %s7 = inlined_call_operand.vmem [shape: bf16[8,512], index: 7, kind: output, shape index: {}]
  %s8 = sld [smem:[#allocation0]]
  $region38: #{vae_forward.16} parent=0
    _
  %s10 = ssub.s32 1, %s8
  %s11 = scalar_select 0, %s10, %s8
  // Predicated region
  $region2: #{vae_forward.16} parent=0 // pred_check
    _
  $region3: #{vae_forward.16} parent=0 // pred_check_branch
    %13 = sbr.rel (0) target = $region5
  $region4: #{vae_forward.16} parent=0 // pred_region
    _
  $region5: #{vae_forward.16} parent=0 // pred_fallthru
    _
  // Predicated region
  $region6: #{vae_forward.16} parent=0 // pred_check
    _
  $region7: #{vae_forward.16} parent=0 // pred_check_branch
    %15 = sbr.rel (0) target = $region9
  $region8: #{vae_forward.16} parent=0 // pred_region
    _
  $region9: #{vae_forward.16} parent=0 // pred_fallthru
    _
  // Predicated region
  $region10: #{vae_forward.16} parent=0 // pred_check
    _
  $region11: #{vae_forward.16} parent=0 // pred_check_branch
    %17 = sbr.rel (0) target = $region13
  $region12: #{vae_forward.16} parent=0 // pred_region
    _
  $region13: #{vae_forward.16} parent=0 // pred_fallthru
    _
  // Predicated region
  $region14: #{vae_forward.16} parent=0 // pred_check
    _
  $region15: #{vae_forward.16} parent=0 // pred_check_branch
    %19 = sbr.rel (0) target = $region17
  $region16: #{vae_forward.16} parent=0 // pred_region
    _
  $region17: #{vae_forward.16} parent=0 // pred_fallthru
    _
  // Predicated region
  $region18: #{vae_forward.16} parent=0 // pred_check
    _
  $region19: #{vae_forward.16} parent=0 // pred_check_branch
    %21 = sbr.rel (0) target = $region21
  $region20: #{vae_forward.16} parent=0 // pred_region
    _
  $region21: #{vae_forward.16} parent=0 // pred_fallthru
    _
  // Predicated region
  $region22: #{vae_forward.16} parent=0 // pred_check
    _
  $region23: #{vae_forward.16} parent=0 // pred_check_branch
    %23 = sbr.rel (0) target = $region25
  $region24: #{vae_forward.16} parent=0 // pred_region
    _
  $region25: #{vae_forward.16} parent=0 // pred_fallthru
    _
  // Predicated region
  $region26: #{vae_forward.16} parent=0 // pred_check
    _
  $region27: #{vae_forward.16} parent=0 // pred_check_branch
    %25 = sbr.rel (0) target = $region29
  $region28: #{vae_forward.16} parent=0 // pred_region
    _
  $region29: #{vae_forward.16} parent=0 // pred_fallthru
    _
  %v27 = vld [vmem:[%s0] sm:$0xf]
  %v28 = vld [vmem:[%s1] sm:$0x77]
  %v29 = vld [vmem:[%s2] sm:$0x3]
  %v31 = vperm.slane %v29, 0
  %v32 = vperm.slane %v29, 1
  %v36 = vunpack.c.l.b16 %v28
  %v37 = vunpack.c.h.b16 %v28
  %v38 = vpack.c.b16 %v36, %v36
  %v39 = vpack.c.b16 %v37, %v37
  %vm40 = vcmask 39936
  %v42 = vsel %vm40, %v27, 0
  %vm44 = vcmask 1041408
  %vm45 = vcmask 1042432
  %v46 = vsel %vm44, 4294967295, 65535
  %v47 = vsel %vm45, %v46, 0
  %v49 = vand.u32 %v38, %v47
  %v52 = vand.u32 %v39, %v47
  %54 = vmatpush.bf16.msra.mxu0 0
  %55 = vmatpush.bf16.msra.mxu0 0
  %56 = vmatpush.bf16.msra.mxu0 0
  %57 = vmatpush.bf16.msra.mxu0 0
  %58 = vmatpush.bf16.msra.mxu0 0
  %59 = vmatpush.bf16.msra.mxu0 0
  %60 = vmatpush.bf16.msra.mxu0 0
  %61 = vmatpush.bf16.msra.mxu0 %v49
  %62 = vmatmul.bf16.gmra.mxu0 %v42
  %v63 = vpop.f32.mrf.mxu0
  %v64 = vadd.f32 %v31, %v63
  %v65 = vpop.f32.mrf.mxu0
  %66 = vdwg.mxu0
  %67 = vmatpush.bf16.msra.mxu0 0
  %68 = vmatpush.bf16.msra.mxu0 0
  %69 = vmatpush.bf16.msra.mxu0 0
  %70 = vmatpush.bf16.msra.mxu0 0
  %71 = vmatpush.bf16.msra.mxu0 0
  %72 = vmatpush.bf16.msra.mxu0 0
  %73 = vmatpush.bf16.msra.mxu0 0
  %74 = vmatpush.bf16.msra.mxu0 %v52
  %75 = vmatmul.bf16.gmra.mxu0 %v42
  %v76 = vpop.f32.mrf.mxu0
  %v77 = vadd.f32 %v32, %v76
  %v78 = vpop.f32.mrf.mxu0
  %79 = vdwg.mxu0
  %v80 = vmax.f32 %v64, 0.0
  %v81 = vmax.f32 %v77, 0.0
  %v82 = vpack.c.bf16 %v80, %v80
  %v83 = vpack.c.bf16 %v81, %v81
  %v84 = vld [vmem:[%s3] sm:$0xff]
  %v85 = vld [vmem:[%s3 + $0x8] sm:$0xff]
  %v86 = vld [vmem:[%s3 + $0x10] sm:$0xff]
  %v87 = vld [vmem:[%s3 + $0x18] sm:$0xff]
  %v88 = vld [vmem:[%s3 + $0x20] sm:$0xff]
  %v89 = vld [vmem:[%s3 + $0x28] sm:$0xff]
  %v90 = vld [vmem:[%s3 + $0x30] sm:$0xff]
  %v91 = vld [vmem:[%s3 + $0x38] sm:$0xff]
  %v92 = vld [vmem:[%s3 + $0x40] sm:$0xff]
  %v93 = vld [vmem:[%s3 + $0x48] sm:$0xff]
  %v94 = vld [vmem:[%s3 + $0x50] sm:$0xff]
  %v95 = vld [vmem:[%s3 + $0x58] sm:$0xff]
  %v96 = vld [vmem:[%s3 + $0x60] sm:$0xff]
  %v97 = vld [vmem:[%s3 + $0x68] sm:$0xff]
  %v98 = vld [vmem:[%s3 + $0x70] sm:$0xff]
  %v99 = vld [vmem:[%s3 + $0x78] sm:$0xff]
  %v100 = vld [vmem:[%s3 + $0x80] sm:$0xff]
  %v101 = vld [vmem:[%s3 + $0x88] sm:$0xff]
  %v102 = vld [vmem:[%s3 + $0x90] sm:$0xff]
  %v103 = vld [vmem:[%s3 + $0x98] sm:$0xff]
  %v104 = vld [vmem:[%s3 + $0xa0] sm:$0xff]
  %v105 = vld [vmem:[%s3 + $0xa8] sm:$0xff]
  %v106 = vld [vmem:[%s3 + $0xb0] sm:$0xff]
  %v107 = vld [vmem:[%s3 + $0xb8] sm:$0xff]
  %v108 = vld [vmem:[%s3 + $0xc0] sm:$0xff]
  %v109 = vld [vmem:[%s3 + $0xc8] sm:$0xff]
  %v110 = vld [vmem:[%s3 + $0xd0] sm:$0xff]
  %v111 = vld [vmem:[%s3 + $0xd8] sm:$0xff]
  %v112 = vld [vmem:[%s3 + $0xe0] sm:$0xff]
  %v113 = vld [vmem:[%s3 + $0xe8] sm:$0xff]
  %v114 = vld [vmem:[%s3 + $0xf0] sm:$0xff]
  %v115 = vld [vmem:[%s3 + $0xf8] sm:$0xff]
  %v116 = vld [vmem:[%s4] sm:$0x3]
  %v118 = vperm.slane %v116, 0
  %v119 = vperm.slane %v116, 1
  %v154 = vunpack.c.l.b16 %v84
  %v155 = vunpack.c.h.b16 %v84
  %v156 = vunpack.c.l.b16 %v85
  %v157 = vunpack.c.h.b16 %v85
  %v158 = vunpack.c.l.b16 %v86
  %v159 = vunpack.c.h.b16 %v86
  %v160 = vunpack.c.l.b16 %v87
  %v161 = vunpack.c.h.b16 %v87
  %v162 = vunpack.c.l.b16 %v88
  %v163 = vunpack.c.h.b16 %v88
  %v164 = vunpack.c.l.b16 %v89
  %v165 = vunpack.c.h.b16 %v89
  %v166 = vunpack.c.l.b16 %v90
  %v167 = vunpack.c.h.b16 %v90
  %v168 = vunpack.c.l.b16 %v91
  %v169 = vunpack.c.h.b16 %v91
  %v170 = vunpack.c.l.b16 %v92
  %v171 = vunpack.c.h.b16 %v92
  %v172 = vunpack.c.l.b16 %v93
  %v173 = vunpack.c.h.b16 %v93
  %v174 = vunpack.c.l.b16 %v94
  %v175 = vunpack.c.h.b16 %v94
  %v176 = vunpack.c.l.b16 %v95
  %v177 = vunpack.c.h.b16 %v95
  %v178 = vunpack.c.l.b16 %v96
  %v179 = vunpack.c.h.b16 %v96
  %v180 = vunpack.c.l.b16 %v97
  %v181 = vunpack.c.h.b16 %v97
  %v182 = vunpack.c.l.b16 %v98
  %v183 = vunpack.c.h.b16 %v98
  %v184 = vunpack.c.l.b16 %v99
  %v185 = vunpack.c.h.b16 %v99
  %v186 = vunpack.c.l.b16 %v100
  %v187 = vunpack.c.h.b16 %v100
  %v188 = vunpack.c.l.b16 %v101
  %v189 = vunpack.c.h.b16 %v101
  %v190 = vunpack.c.l.b16 %v102
  %v191 = vunpack.c.h.b16 %v102
  %v192 = vunpack.c.l.b16 %v103
  %v193 = vunpack.c.h.b16 %v103
  %v194 = vunpack.c.l.b16 %v104
  %v195 = vunpack.c.h.b16 %v104
  %v196 = vunpack.c.l.b16 %v105
  %v197 = vunpack.c.h.b16 %v105
  %v198 = vunpack.c.l.b16 %v106
  %v199 = vunpack.c.h.b16 %v106
  %v200 = vunpack.c.l.b16 %v107
  %v201 = vunpack.c.h.b16 %v107
  %v202 = vunpack.c.l.b16 %v108
  %v203 = vunpack.c.h.b16 %v108
  %v204 = vunpack.c.l.b16 %v109
  %v205 = vunpack.c.h.b16 %v109
  %v206 = vunpack.c.l.b16 %v110
  %v207 = vunpack.c.h.b16 %v110
  %v208 = vunpack.c.l.b16 %v111
  %v209 = vunpack.c.h.b16 %v111
  %v210 = vunpack.c.l.b16 %v112
  %v211 = vunpack.c.h.b16 %v112
  %v212 = vunpack.c.l.b16 %v113
  %v213 = vunpack.c.h.b16 %v113
  %v214 = vunpack.c.l.b16 %v114
  %v215 = vunpack.c.h.b16 %v114
  %v216 = vunpack.c.l.b16 %v115
  %v217 = vunpack.c.h.b16 %v115
  %v218 = vpack.c.b16 %v156, %v154
  %v219 = vpack.c.b16 %v157, %v155
  %v220 = vpack.c.b16 %v160, %v158
  %v221 = vpack.c.b16 %v161, %v159
  %v222 = vpack.c.b16 %v164, %v162
  %v223 = vpack.c.b16 %v165, %v163
  %v224 = vpack.c.b16 %v168, %v166
  %v225 = vpack.c.b16 %v169, %v167
  %v226 = vpack.c.b16 %v172, %v170
  %v227 = vpack.c.b16 %v173, %v171
  %v228 = vpack.c.b16 %v176, %v174
  %v229 = vpack.c.b16 %v177, %v175
  %v230 = vpack.c.b16 %v180, %v178
  %v231 = vpack.c.b16 %v181, %v179
  %v232 = vpack.c.b16 %v184, %v182
  %v233 = vpack.c.b16 %v185, %v183
  %v234 = vpack.c.b16 %v188, %v186
  %v235 = vpack.c.b16 %v189, %v187
  %v236 = vpack.c.b16 %v192, %v190
  %v237 = vpack.c.b16 %v193, %v191
  %v238 = vpack.c.b16 %v196, %v194
  %v239 = vpack.c.b16 %v197, %v195
  %v240 = vpack.c.b16 %v200, %v198
  %v241 = vpack.c.b16 %v201, %v199
  %v242 = vpack.c.b16 %v204, %v202
  %v243 = vpack.c.b16 %v205, %v203
  %v244 = vpack.c.b16 %v208, %v206
  %v245 = vpack.c.b16 %v209, %v207
  %v246 = vpack.c.b16 %v212, %v210
  %v247 = vpack.c.b16 %v213, %v211
  %v248 = vpack.c.b16 %v216, %v214
  %v249 = vpack.c.b16 %v217, %v215
  %282 = vmatpush.bf16.msra.mxu0 %v232
  %283 = vmatpush.bf16.msra.mxu0 %v230
  %284 = vmatpush.bf16.msra.mxu0 %v228
  %285 = vmatpush.bf16.msra.mxu0 %v226
  %286 = vmatpush.bf16.msra.mxu0 %v224
  %287 = vmatpush.bf16.msra.mxu0 %v222
  %288 = vmatpush.bf16.msra.mxu0 %v220
  %289 = vmatpush.bf16.msra.mxu0 %v218
  %290 = vmatmul.bf16.gmra.mxu0 %v82
  %v291 = vpop.f32.mrf.mxu0
  %v292 = vadd.f32 %v118, %v291
  %v293 = vpop.f32.mrf.mxu0
  %294 = vdwg.mxu0
  %295 = vmatpush.bf16.msra.mxu0 %v248
  %296 = vmatpush.bf16.msra.mxu0 %v246
  %297 = vmatpush.bf16.msra.mxu0 %v244
  %298 = vmatpush.bf16.msra.mxu0 %v242
  %299 = vmatpush.bf16.msra.mxu0 %v240
  %300 = vmatpush.bf16.msra.mxu0 %v238
  %301 = vmatpush.bf16.msra.mxu0 %v236
  %302 = vmatpush.bf16.msra.mxu0 %v234
  %303 = vmatmul.bf16.gmra.mxu0 %v83
  %v304 = vpop.f32.mrf.mxu0
  %v305 = vadd.f32 %v292, %v304
  %v306 = vpop.f32.mrf.mxu0
  %307 = vdwg.mxu0
  %308 = vmatpush.bf16.msra.mxu0 %v233
  %309 = vmatpush.bf16.msra.mxu0 %v231
  %310 = vmatpush.bf16.msra.mxu0 %v229
  %311 = vmatpush.bf16.msra.mxu0 %v227
  %312 = vmatpush.bf16.msra.mxu0 %v225
  %313 = vmatpush.bf16.msra.mxu0 %v223
  %314 = vmatpush.bf16.msra.mxu0 %v221
  %315 = vmatpush.bf16.msra.mxu0 %v219
  %316 = vmatmul.bf16.gmra.mxu0 %v82
  %v317 = vpop.f32.mrf.mxu0
  %v318 = vadd.f32 %v119, %v317
  %v319 = vpop.f32.mrf.mxu0
  %320 = vdwg.mxu0
  %321 = vmatpush.bf16.msra.mxu0 %v249
  %322 = vmatpush.bf16.msra.mxu0 %v247
  %323 = vmatpush.bf16.msra.mxu0 %v245
  %324 = vmatpush.bf16.msra.mxu0 %v243
  %325 = vmatpush.bf16.msra.mxu0 %v241
  %326 = vmatpush.bf16.msra.mxu0 %v239
  %327 = vmatpush.bf16.msra.mxu0 %v237
  %328 = vmatpush.bf16.msra.mxu0 %v235
  %329 = vmatmul.bf16.gmra.mxu0 %v83
  %v330 = vpop.f32.mrf.mxu0
  %v331 = vadd.f32 %v318, %v330
  %v332 = vpop.f32.mrf.mxu0
  %333 = vdwg.mxu0
  %v334 = vmax.f32 %v305, 0.0
  %v335 = vmax.f32 %v331, 0.0
  %v336 = vpack.c.bf16 %v334, %v334
  %v337 = vpack.c.bf16 %v335, %v335
  %v338 = vld [vmem:[%s5] sm:$0xff]
  %v339 = vld [vmem:[%s5 + $0x8] sm:$0xff]
  %v340 = vld [vmem:[%s5 + $0x10] sm:$0xff]
  %v341 = vld [vmem:[%s5 + $0x18] sm:$0xff]
  %v342 = vld [vmem:[%s5 + $0x20] sm:$0xff]
  %v343 = vld [vmem:[%s5 + $0x28] sm:$0xff]
  %v344 = vld [vmem:[%s5 + $0x30] sm:$0xff]
  %v345 = vld [vmem:[%s5 + $0x38] sm:$0xff]
  %v346 = vld [vmem:[%s5 + $0x40] sm:$0xff]
  %v347 = vld [vmem:[%s5 + $0x48] sm:$0xff]
  %v348 = vld [vmem:[%s5 + $0x50] sm:$0xff]
  %v349 = vld [vmem:[%s5 + $0x58] sm:$0xff]
  %v350 = vld [vmem:[%s5 + $0x60] sm:$0xff]
  %v351 = vld [vmem:[%s5 + $0x68] sm:$0xff]
  %v352 = vld [vmem:[%s5 + $0x70] sm:$0xff]
  %v353 = vld [vmem:[%s5 + $0x78] sm:$0xff]
  %v354 = vld [vmem:[%s5 + $0x80] sm:$0xff]
  %v355 = vld [vmem:[%s5 + $0x88] sm:$0xff]
  %v356 = vld [vmem:[%s5 + $0x90] sm:$0xff]
  %v357 = vld [vmem:[%s5 + $0x98] sm:$0xff]
  %v358 = vld [vmem:[%s5 + $0xa0] sm:$0xff]
  %v359 = vld [vmem:[%s5 + $0xa8] sm:$0xff]
  %v360 = vld [vmem:[%s5 + $0xb0] sm:$0xff]
  %v361 = vld [vmem:[%s5 + $0xb8] sm:$0xff]
  %v362 = vld [vmem:[%s5 + $0xc0] sm:$0xff]
  %v363 = vld [vmem:[%s5 + $0xc8] sm:$0xff]
  %v364 = vld [vmem:[%s5 + $0xd0] sm:$0xff]
  %v365 = vld [vmem:[%s5 + $0xd8] sm:$0xff]
  %v366 = vld [vmem:[%s5 + $0xe0] sm:$0xff]
  %v367 = vld [vmem:[%s5 + $0xe8] sm:$0xff]
  %v368 = vld [vmem:[%s5 + $0xf0] sm:$0xff]
  %v369 = vld [vmem:[%s5 + $0xf8] sm:$0xff]
  %v370 = vld [vmem:[%s5 + $0x100] sm:$0xff]
  %v371 = vld [vmem:[%s5 + $0x108] sm:$0xff]
  %v372 = vld [vmem:[%s5 + $0x110] sm:$0xff]
  %v373 = vld [vmem:[%s5 + $0x118] sm:$0xff]
  %v374 = vld [vmem:[%s5 + $0x120] sm:$0xff]
  %v375 = vld [vmem:[%s5 + $0x128] sm:$0xff]
  %v376 = vld [vmem:[%s5 + $0x130] sm:$0xff]
  %v377 = vld [vmem:[%s5 + $0x138] sm:$0xff]
  %v378 = vld [vmem:[%s5 + $0x140] sm:$0xff]
  %v379 = vld [vmem:[%s5 + $0x148] sm:$0xff]
  %v380 = vld [vmem:[%s5 + $0x150] sm:$0xff]
  %v381 = vld [vmem:[%s5 + $0x158] sm:$0xff]
  %v382 = vld [vmem:[%s5 + $0x160] sm:$0xff]
  %v383 = vld [vmem:[%s5 + $0x168] sm:$0xff]
  %v384 = vld [vmem:[%s5 + $0x170] sm:$0xff]
  %v385 = vld [vmem:[%s5 + $0x178] sm:$0xff]
  %v386 = vld [vmem:[%s5 + $0x180] sm:$0xff]
  %v387 = vld [vmem:[%s5 + $0x188] sm:$0xff]
  %v388 = vld [vmem:[%s5 + $0x190] sm:$0xff]
  %v389 = vld [vmem:[%s5 + $0x198] sm:$0xff]
  %v390 = vld [vmem:[%s5 + $0x1a0] sm:$0xff]
  %v391 = vld [vmem:[%s5 + $0x1a8] sm:$0xff]
  %v392 = vld [vmem:[%s5 + $0x1b0] sm:$0xff]
  %v393 = vld [vmem:[%s5 + $0x1b8] sm:$0xff]
  %v394 = vld [vmem:[%s5 + $0x1c0] sm:$0xff]
  %v395 = vld [vmem:[%s5 + $0x1c8] sm:$0xff]
  %v396 = vld [vmem:[%s5 + $0x1d0] sm:$0xff]
  %v397 = vld [vmem:[%s5 + $0x1d8] sm:$0xff]
  %v398 = vld [vmem:[%s5 + $0x1e0] sm:$0xff]
  %v399 = vld [vmem:[%s5 + $0x1e8] sm:$0xff]
  %v400 = vld [vmem:[%s5 + $0x1f0] sm:$0xff]
  %v401 = vld [vmem:[%s5 + $0x1f8] sm:$0xff]
  %v402 = vld [vmem:[%s6] sm:$0xf]
  %v404 = vperm.slane %v402, 0
  %v405 = vperm.slane %v402, 1
  %v406 = vperm.slane %v402, 2
  %v407 = vperm.slane %v402, 3
  %v476 = vunpack.c.l.b16 %v338
  %v477 = vunpack.c.h.b16 %v338
  %v478 = vunpack.c.l.b16 %v339
  %v479 = vunpack.c.h.b16 %v339
  %v480 = vunpack.c.l.b16 %v340
  %v481 = vunpack.c.h.b16 %v340
  %v482 = vunpack.c.l.b16 %v341
  %v483 = vunpack.c.h.b16 %v341
  %v484 = vunpack.c.l.b16 %v342
  %v485 = vunpack.c.h.b16 %v342
  %v486 = vunpack.c.l.b16 %v343
  %v487 = vunpack.c.h.b16 %v343
  %v488 = vunpack.c.l.b16 %v344
  %v489 = vunpack.c.h.b16 %v344
  %v490 = vunpack.c.l.b16 %v345
  %v491 = vunpack.c.h.b16 %v345
  %v492 = vunpack.c.l.b16 %v346
  %v493 = vunpack.c.h.b16 %v346
  %v494 = vunpack.c.l.b16 %v347
  %v495 = vunpack.c.h.b16 %v347
  %v496 = vunpack.c.l.b16 %v348
  %v497 = vunpack.c.h.b16 %v348
  %v498 = vunpack.c.l.b16 %v349
  %v499 = vunpack.c.h.b16 %v349
  %v500 = vunpack.c.l.b16 %v350
  %v501 = vunpack.c.h.b16 %v350
  %v502 = vunpack.c.l.b16 %v351
  %v503 = vunpack.c.h.b16 %v351
  %v504 = vunpack.c.l.b16 %v352
  %v505 = vunpack.c.h.b16 %v352
  %v506 = vunpack.c.l.b16 %v353
  %v507 = vunpack.c.h.b16 %v353
  %v508 = vunpack.c.l.b16 %v354
  %v509 = vunpack.c.h.b16 %v354
  %v510 = vunpack.c.l.b16 %v355
  %v511 = vunpack.c.h.b16 %v355
  %v512 = vunpack.c.l.b16 %v356
  %v513 = vunpack.c.h.b16 %v356
  %v514 = vunpack.c.l.b16 %v357
  %v515 = vunpack.c.h.b16 %v357
  %v516 = vunpack.c.l.b16 %v358
  %v517 = vunpack.c.h.b16 %v358
  %v518 = vunpack.c.l.b16 %v359
  %v519 = vunpack.c.h.b16 %v359
  %v520 = vunpack.c.l.b16 %v360
  %v521 = vunpack.c.h.b16 %v360
  %v522 = vunpack.c.l.b16 %v361
  %v523 = vunpack.c.h.b16 %v361
  %v524 = vunpack.c.l.b16 %v362
  %v525 = vunpack.c.h.b16 %v362
  %v526 = vunpack.c.l.b16 %v363
  %v527 = vunpack.c.h.b16 %v363
  %v528 = vunpack.c.l.b16 %v364
  %v529 = vunpack.c.h.b16 %v364
  %v530 = vunpack.c.l.b16 %v365
  %v531 = vunpack.c.h.b16 %v365
  %v532 = vunpack.c.l.b16 %v366
  %v533 = vunpack.c.h.b16 %v366
  %v534 = vunpack.c.l.b16 %v367
  %v535 = vunpack.c.h.b16 %v367
  %v536 = vunpack.c.l.b16 %v368
  %v537 = vunpack.c.h.b16 %v368
  %v538 = vunpack.c.l.b16 %v369
  %v539 = vunpack.c.h.b16 %v369
  %v540 = vunpack.c.l.b16 %v370
  %v541 = vunpack.c.h.b16 %v370
  %v542 = vunpack.c.l.b16 %v371
  %v543 = vunpack.c.h.b16 %v371
  %v544 = vunpack.c.l.b16 %v372
  %v545 = vunpack.c.h.b16 %v372
  %v546 = vunpack.c.l.b16 %v373
  %v547 = vunpack.c.h.b16 %v373
  %v548 = vunpack.c.l.b16 %v374
  %v549 = vunpack.c.h.b16 %v374
  %v550 = vunpack.c.l.b16 %v375
  %v551 = vunpack.c.h.b16 %v375
  %v552 = vunpack.c.l.b16 %v376
  %v553 = vunpack.c.h.b16 %v376
  %v554 = vunpack.c.l.b16 %v377
  %v555 = vunpack.c.h.b16 %v377
  %v556 = vunpack.c.l.b16 %v378
  %v557 = vunpack.c.h.b16 %v378
  %v558 = vunpack.c.l.b16 %v379
  %v559 = vunpack.c.h.b16 %v379
  %v560 = vunpack.c.l.b16 %v380
  %v561 = vunpack.c.h.b16 %v380
  %v562 = vunpack.c.l.b16 %v381
  %v563 = vunpack.c.h.b16 %v381
  %v564 = vunpack.c.l.b16 %v382
  %v565 = vunpack.c.h.b16 %v382
  %v566 = vunpack.c.l.b16 %v383
  %v567 = vunpack.c.h.b16 %v383
  %v568 = vunpack.c.l.b16 %v384
  %v569 = vunpack.c.h.b16 %v384
  %v570 = vunpack.c.l.b16 %v385
  %v571 = vunpack.c.h.b16 %v385
  %v572 = vunpack.c.l.b16 %v386
  %v573 = vunpack.c.h.b16 %v386
  %v574 = vunpack.c.l.b16 %v387
  %v575 = vunpack.c.h.b16 %v387
  %v576 = vunpack.c.l.b16 %v388
  %v577 = vunpack.c.h.b16 %v388
  %v578 = vunpack.c.l.b16 %v389
  %v579 = vunpack.c.h.b16 %v389
  %v580 = vunpack.c.l.b16 %v390
  %v581 = vunpack.c.h.b16 %v390
  %v582 = vunpack.c.l.b16 %v391
  %v583 = vunpack.c.h.b16 %v391
  %v584 = vunpack.c.l.b16 %v392
  %v585 = vunpack.c.h.b16 %v392
  %v586 = vunpack.c.l.b16 %v393
  %v587 = vunpack.c.h.b16 %v393
  %v588 = vunpack.c.l.b16 %v394
  %v589 = vunpack.c.h.b16 %v394
  %v590 = vunpack.c.l.b16 %v395
  %v591 = vunpack.c.h.b16 %v395
  %v592 = vunpack.c.l.b16 %v396
  %v593 = vunpack.c.h.b16 %v396
  %v594 = vunpack.c.l.b16 %v397
  %v595 = vunpack.c.h.b16 %v397
  %v596 = vunpack.c.l.b16 %v398
  %v597 = vunpack.c.h.b16 %v398
  %v598 = vunpack.c.l.b16 %v399
  %v599 = vunpack.c.h.b16 %v399
  %v600 = vunpack.c.l.b16 %v400
  %v601 = vunpack.c.h.b16 %v400
  %v602 = vunpack.c.l.b16 %v401
  %v603 = vunpack.c.h.b16 %v401
  %v604 = vpack.c.b16 %v480, %v476
  %v605 = vpack.c.b16 %v481, %v477
  %v606 = vpack.c.b16 %v482, %v478
  %v607 = vpack.c.b16 %v483, %v479
  %v608 = vpack.c.b16 %v488, %v484
  %v609 = vpack.c.b16 %v489, %v485
  %v610 = vpack.c.b16 %v490, %v486
  %v611 = vpack.c.b16 %v491, %v487
  %v612 = vpack.c.b16 %v496, %v492
  %v613 = vpack.c.b16 %v497, %v493
  %v614 = vpack.c.b16 %v498, %v494
  %v615 = vpack.c.b16 %v499, %v495
  %v616 = vpack.c.b16 %v504, %v500
  %v617 = vpack.c.b16 %v505, %v501
  %v618 = vpack.c.b16 %v506, %v502
  %v619 = vpack.c.b16 %v507, %v503
  %v620 = vpack.c.b16 %v512, %v508
  %v621 = vpack.c.b16 %v513, %v509
  %v622 = vpack.c.b16 %v514, %v510
  %v623 = vpack.c.b16 %v515, %v511
  %v624 = vpack.c.b16 %v520, %v516
  %v625 = vpack.c.b16 %v521, %v517
  %v626 = vpack.c.b16 %v522, %v518
  %v627 = vpack.c.b16 %v523, %v519
  %v628 = vpack.c.b16 %v528, %v524
  %v629 = vpack.c.b16 %v529, %v525
  %v630 = vpack.c.b16 %v530, %v526
  %v631 = vpack.c.b16 %v531, %v527
  %v632 = vpack.c.b16 %v536, %v532
  %v633 = vpack.c.b16 %v537, %v533
  %v634 = vpack.c.b16 %v538, %v534
  %v635 = vpack.c.b16 %v539, %v535
  %v636 = vpack.c.b16 %v544, %v540
  %v637 = vpack.c.b16 %v545, %v541
  %v638 = vpack.c.b16 %v546, %v542
  %v639 = vpack.c.b16 %v547, %v543
  %v640 = vpack.c.b16 %v552, %v548
  %v641 = vpack.c.b16 %v553, %v549
  %v642 = vpack.c.b16 %v554, %v550
  %v643 = vpack.c.b16 %v555, %v551
  %v644 = vpack.c.b16 %v560, %v556
  %v645 = vpack.c.b16 %v561, %v557
  %v646 = vpack.c.b16 %v562, %v558
  %v647 = vpack.c.b16 %v563, %v559
  %v648 = vpack.c.b16 %v568, %v564
  %v649 = vpack.c.b16 %v569, %v565
  %v650 = vpack.c.b16 %v570, %v566
  %v651 = vpack.c.b16 %v571, %v567
  %v652 = vpack.c.b16 %v576, %v572
  %v653 = vpack.c.b16 %v577, %v573
  %v654 = vpack.c.b16 %v578, %v574
  %v655 = vpack.c.b16 %v579, %v575
  %v656 = vpack.c.b16 %v584, %v580
  %v657 = vpack.c.b16 %v585, %v581
  %v658 = vpack.c.b16 %v586, %v582
  %v659 = vpack.c.b16 %v587, %v583
  %v660 = vpack.c.b16 %v592, %v588
  %v661 = vpack.c.b16 %v593, %v589
  %v662 = vpack.c.b16 %v594, %v590
  %v663 = vpack.c.b16 %v595, %v591
  %v664 = vpack.c.b16 %v600, %v596
  %v665 = vpack.c.b16 %v601, %v597
  %v666 = vpack.c.b16 %v602, %v598
  %v667 = vpack.c.b16 %v603, %v599
  %732 = vmatpush.bf16.msra.mxu0 %v632
  %733 = vmatpush.bf16.msra.mxu0 %v628
  %734 = vmatpush.bf16.msra.mxu0 %v624
  %735 = vmatpush.bf16.msra.mxu0 %v620
  %736 = vmatpush.bf16.msra.mxu0 %v616
  %737 = vmatpush.bf16.msra.mxu0 %v612
  %738 = vmatpush.bf16.msra.mxu0 %v608
  %739 = vmatpush.bf16.msra.mxu0 %v604
  %740 = vmatmul.bf16.gmra.mxu0 %v336
  %v741 = vpop.f32.mrf.mxu0
  %v742 = vadd.f32 %v404, %v741
  %v743 = vpop.f32.mrf.mxu0
  %744 = vdwg.mxu0
  %745 = vmatpush.bf16.msra.mxu0 %v664
  %746 = vmatpush.bf16.msra.mxu0 %v660
  %747 = vmatpush.bf16.msra.mxu0 %v656
  %748 = vmatpush.bf16.msra.mxu0 %v652
  %749 = vmatpush.bf16.msra.mxu0 %v648
  %750 = vmatpush.bf16.msra.mxu0 %v644
  %751 = vmatpush.bf16.msra.mxu0 %v640
  %752 = vmatpush.bf16.msra.mxu0 %v636
  %753 = vmatmul.bf16.gmra.mxu0 %v337
  %v754 = vpop.f32.mrf.mxu0
  %v755 = vadd.f32 %v742, %v754
  %v756 = vpop.f32.mrf.mxu0
  %757 = vdwg.mxu0
  %758 = vmatpush.bf16.msra.mxu0 %v633
  %759 = vmatpush.bf16.msra.mxu0 %v629
  %760 = vmatpush.bf16.msra.mxu0 %v625
  %761 = vmatpush.bf16.msra.mxu0 %v621
  %762 = vmatpush.bf16.msra.mxu0 %v617
  %763 = vmatpush.bf16.msra.mxu0 %v613
  %764 = vmatpush.bf16.msra.mxu0 %v609
  %765 = vmatpush.bf16.msra.mxu0 %v605
  %766 = vmatmul.bf16.gmra.mxu0 %v336
  %v767 = vpop.f32.mrf.mxu0
  %v768 = vadd.f32 %v405, %v767
  %v769 = vpop.f32.mrf.mxu0
  %770 = vdwg.mxu0
  %771 = vmatpush.bf16.msra.mxu0 %v665
  %772 = vmatpush.bf16.msra.mxu0 %v661
  %773 = vmatpush.bf16.msra.mxu0 %v657
  %774 = vmatpush.bf16.msra.mxu0 %v653
  %775 = vmatpush.bf16.msra.mxu0 %v649
  %776 = vmatpush.bf16.msra.mxu0 %v645
  %777 = vmatpush.bf16.msra.mxu0 %v641
  %778 = vmatpush.bf16.msra.mxu0 %v637
  %779 = vmatmul.bf16.gmra.mxu0 %v337
  %v780 = vpop.f32.mrf.mxu0
  %v781 = vadd.f32 %v768, %v780
  %v782 = vpop.f32.mrf.mxu0
  %783 = vdwg.mxu0
  %784 = vmatpush.bf16.msra.mxu0 %v634
  %785 = vmatpush.bf16.msra.mxu0 %v630
  %786 = vmatpush.bf16.msra.mxu0 %v626
  %787 = vmatpush.bf16.msra.mxu0 %v622
  %788 = vmatpush.bf16.msra.mxu0 %v618
  %789 = vmatpush.bf16.msra.mxu0 %v614
  %790 = vmatpush.bf16.msra.mxu0 %v610
  %791 = vmatpush.bf16.msra.mxu0 %v606
  %792 = vmatmul.bf16.gmra.mxu0 %v336
  %v793 = vpop.f32.mrf.mxu0
  %v794 = vadd.f32 %v406, %v793
  %v795 = vpop.f32.mrf.mxu0
  %796 = vdwg.mxu0
  %797 = vmatpush.bf16.msra.mxu0 %v666
  %798 = vmatpush.bf16.msra.mxu0 %v662
  %799 = vmatpush.bf16.msra.mxu0 %v658
  %800 = vmatpush.bf16.msra.mxu0 %v654
  %801 = vmatpush.bf16.msra.mxu0 %v650
  %802 = vmatpush.bf16.msra.mxu0 %v646
  %803 = vmatpush.bf16.msra.mxu0 %v642
  %804 = vmatpush.bf16.msra.mxu0 %v638
  %805 = vmatmul.bf16.gmra.mxu0 %v337
  %v806 = vpop.f32.mrf.mxu0
  %v807 = vadd.f32 %v794, %v806
  %v808 = vpop.f32.mrf.mxu0
  %809 = vdwg.mxu0
  %810 = vmatpush.bf16.msra.mxu0 %v635
  %811 = vmatpush.bf16.msra.mxu0 %v631
  %812 = vmatpush.bf16.msra.mxu0 %v627
  %813 = vmatpush.bf16.msra.mxu0 %v623
  %814 = vmatpush.bf16.msra.mxu0 %v619
  %815 = vmatpush.bf16.msra.mxu0 %v615
  %816 = vmatpush.bf16.msra.mxu0 %v611
  %817 = vmatpush.bf16.msra.mxu0 %v607
  %818 = vmatmul.bf16.gmra.mxu0 %v336
  %v819 = vpop.f32.mrf.mxu0
  %v820 = vadd.f32 %v407, %v819
  %v821 = vpop.f32.mrf.mxu0
  %822 = vdwg.mxu0
  %823 = vmatpush.bf16.msra.mxu0 %v667
  %824 = vmatpush.bf16.msra.mxu0 %v663
  %825 = vmatpush.bf16.msra.mxu0 %v659
  %826 = vmatpush.bf16.msra.mxu0 %v655
  %827 = vmatpush.bf16.msra.mxu0 %v651
  %828 = vmatpush.bf16.msra.mxu0 %v647
  %829 = vmatpush.bf16.msra.mxu0 %v643
  %830 = vmatpush.bf16.msra.mxu0 %v639
  %831 = vmatmul.bf16.gmra.mxu0 %v337
  %v832 = vpop.f32.mrf.mxu0
  %v833 = vadd.f32 %v820, %v832
  %v834 = vpop.f32.mrf.mxu0
  %835 = vdwg.mxu0
  %v836 = vmax.f32 %v755, 0.0
  %v837 = vmax.f32 %v781, 0.0
  %v838 = vmax.f32 %v807, 0.0
  %v839 = vmax.f32 %v833, 0.0
  %v840 = vpack.c.bf16 %v837, %v836
  %v841 = vpack.c.bf16 %v839, %v838
  %842 = vst [vmem:[%s7] sm:$0xff] %v840
  %843 = vst [vmem:[%s7 + $0x8] sm:$0xff] %v841
  // Predicated region
  $region30: #{vae_forward.16} parent=0 // pred_check
    _
  $region31: #{vae_forward.16} parent=0 // pred_check_branch
    %845 = sbr.rel (0) target = $region33
  $region32: #{vae_forward.16} parent=0 // pred_region
    _
  $region33: #{vae_forward.16} parent=0 // pred_fallthru
    _
  // Predicated region
  $region34: #{vae_forward.16} parent=0 // pred_check
    _
  $region35: #{vae_forward.16} parent=0 // pred_check_branch
    %847 = sbr.rel (0) target = $region37
  $region36: #{vae_forward.16} parent=0 // pred_region
    _
  $region37: #{vae_forward.16} parent=0 // pred_fallthru
    _

// kernel: vae_forward.17
$region0: #{vae_forward.17}
  #allocation0 [shape = 'u32[]', space=smem, size = 0x4, offset = 0x4, fixed_abs, tag = 'smem constant byte address 0x4 - core index']
  #allocation1 [shape = 'u32[72,128]{1,0:T(1,128)}', space=vmem, size = 0x9000, scoped, tag = 'internal scratch']
  %s0 = inlined_call_operand.vmem [shape: bf16[4,32,128], index: 0, kind: input, shape index: {}]
  %s1 = inlined_call_operand.vmem [shape: bf16[4,128,128], index: 1, kind: input, shape index: {}]
  %s2 = inlined_call_operand.vmem [shape: f32[32,1], index: 2, kind: input, shape index: {}]
  %s3 = inlined_call_operand.vmem [shape: bf16[4,32,128], index: 3, kind: output, shape index: {}]
  %s4 = sld [smem:[#allocation0]]
  $region45: #{vae_forward.17} parent=0
    _
  %s6 = ssub.s32 1, %s4
  %s7 = scalar_select 0, %s6, %s4
  loop: start=0, step=1, limit=6
  $region2: #{vae_forward.17} parent=0 // loop_pre_header
    _
  $region3: #{vae_forward.17} parent=0 // loop_header
    %s9 = sphi 0, %s13
    %p10 = scmp.ge.s32.totalorder %s9, 6
    %s16 = sphi 0, %s28
    %s17 = sphi 0, %s24
    %s18 = sphi 0, %s16
    %s19 = sphi 0, %s17
    %s20 = sphi 0, %s18
    %s21 = sphi 0, %s19
    %s31 = sphi 0, %s33
    %s34 = sphi 0, %s31
    %s35 = sphi 0, %s34
    %s51 = sphi 0, %s35
    %s59 = sphi 0, %s61
    %s62 = sphi 0, %s59
    %s63 = sphi 0, %s62
    %s79 = sphi 0, %s63
    %s83 = sphi 0, %s83
    %s85 = sphi 0, %s83
    %s86 = sphi 0, %s85
    %s100 = sphi 0, %s86
    %s108 = sphi 0, %s110
    %s111 = sphi 0, %s108
    %s112 = sphi 0, %s111
    %s128 = sphi 0, %s112
  $region4: #{vae_forward.17} parent=0 // loop_header_branch
    %12 = sbr.rel (%p10) target = $region8
  $region5: #{vae_forward.17} parent=0 // loop_body
    %s14 = ssub.s32 %s9, 1
    %s15 = ssub.s32 %s9, 2
    %s22 = sadd.s32 1, %s17
    %p23 = scmp.ge.s32.totalorder %s22, 1
    %s24 = scalar_select %p23, 0, %s22
    %s25 = sadd.s32 1, %s16
    %s26 = scalar_select %p23, %s25, %s16
    %p27 = scmp.ge.s32.totalorder %s26, 4
    %s28 = scalar_select %p27, 0, %s26
    %s29 = ssub.s32 %s16, %s28
    %p30 = scmp.eq.s32.totalorder %s29, 0
    %s32 = sadd.s32 %s31, 1
    %s33 = scalar_select %p30, %s31, %s32
    %p36 = pneg %p30
    %p37 = scmp.eq.s32.totalorder %s9, 3
    %p38 = por %p36, %p37
    %p39 = scmp.ne.s32.totalorder %s31, %s34
    %p40 = scmp.eq.s32.totalorder %s9, 0
    %p41 = por %p39, %p40
    %p42 = scmp.ne.s32.totalorder %s31, %s34
    %p43 = scmp.eq.s32.totalorder %s14, 3
    %p44 = por %p42, %p43
    %p45 = scmp.ne.s32.totalorder %s34, %s35
    %p46 = scmp.eq.s32.totalorder %s14, 0
    %p47 = por %p45, %p46
    %p48 = scmp.ne.s32.totalorder %s34, %s35
    %p49 = scmp.eq.s32.totalorder %s15, 3
    %p50 = por %p48, %p49
    %p52 = scmp.ne.s32.totalorder %s35, %s51
    %p53 = scmp.eq.s32.totalorder %s15, 0
    %p54 = por %p52, %p53
    %s55 = ssub.s32 %s16, %s28
    %s56 = ssub.s32 %s17, %s24
    %s57 = sor.u32 %s55, %s56
    %p58 = scmp.eq.s32.totalorder %s57, 0
    %s60 = sadd.s32 %s59, 1
    %s61 = scalar_select %p58, %s59, %s60
    %p64 = pneg %p58
    %p65 = scmp.eq.s32.totalorder %s9, 3
    %p66 = por %p64, %p65
    %p67 = scmp.ne.s32.totalorder %s59, %s62
    %p68 = scmp.eq.s32.totalorder %s9, 0
    %p69 = por %p67, %p68
    %p70 = scmp.ne.s32.totalorder %s59, %s62
    %p71 = scmp.eq.s32.totalorder %s14, 3
    %p72 = por %p70, %p71
    %p73 = scmp.ne.s32.totalorder %s62, %s63
    %p74 = scmp.eq.s32.totalorder %s14, 0
    %p75 = por %p73, %p74
    %p76 = scmp.ne.s32.totalorder %s62, %s63
    %p77 = scmp.eq.s32.totalorder %s15, 3
    %p78 = por %p76, %p77
    %p80 = scmp.ne.s32.totalorder %s63, %s79
    %p81 = scmp.eq.s32.totalorder %s15, 0
    %p82 = por %p80, %p81
    %s84 = sadd.s32 %s83, 1
    %p87 = scmp.eq.s32.totalorder %s9, 3
    %p88 = scmp.ne.s32.totalorder %s83, %s85
    %p89 = scmp.eq.s32.totalorder %s9, 0
    %p90 = por %p88, %p89
    %p91 = scmp.ne.s32.totalorder %s83, %s85
    %p92 = scmp.eq.s32.totalorder %s14, 3
    %p93 = por %p91, %p92
    %p94 = scmp.ne.s32.totalorder %s85, %s86
    %p95 = scmp.eq.s32.totalorder %s14, 0
    %p96 = por %p94, %p95
    %p97 = scmp.ne.s32.totalorder %s85, %s86
    %p98 = scmp.eq.s32.totalorder %s15, 3
    %p99 = por %p97, %p98
    %p101 = scmp.ne.s32.totalorder %s86, %s100
    %p102 = scmp.eq.s32.totalorder %s15, 0
    %p103 = por %p101, %p102
    %s104 = ssub.s32 %s16, %s28
    %s105 = ssub.s32 %s17, %s24
    %s106 = sor.u32 %s104, %s105
    %p107 = scmp.eq.s32.totalorder %s106, 0
    %s109 = sadd.s32 %s108, 1
    %s110 = scalar_select %p107, %s108, %s109
    %p113 = pneg %p107
    %p114 = scmp.eq.s32.totalorder %s9, 3
    %p115 = por %p113, %p114
    %p116 = scmp.ne.s32.totalorder %s108, %s111
    %p117 = scmp.eq.s32.totalorder %s9, 0
    %p118 = por %p116, %p117
    %p119 = scmp.ne.s32.totalorder %s108, %s111
    %p120 = scmp.eq.s32.totalorder %s14, 3
    %p121 = por %p119, %p120
    %p122 = scmp.ne.s32.totalorder %s111, %s112
    %p123 = scmp.eq.s32.totalorder %s14, 0
    %p124 = por %p122, %p123
    %p125 = scmp.ne.s32.totalorder %s111, %s112
    %p126 = scmp.eq.s32.totalorder %s15, 3
    %p127 = por %p125, %p126
    %p129 = scmp.ne.s32.totalorder %s112, %s128
    %p130 = scmp.eq.s32.totalorder %s15, 0
    %p131 = por %p129, %p130
    %p132 = scmp.le.s32.totalorder 1, %s9
    %p133 = scmp.lt.s32.totalorder %s9, 5
    %p134 = pnand %p132, %p133
    %p135 = pneg %p134
    // Predicated region
    $region9: #{vae_forward.17} parent=5 // pred_check
      _
    $region10: #{vae_forward.17} parent=5 // pred_check_branch
      %137 = sbr.rel (%p134) target = $region12
    $region11: #{vae_forward.17} parent=5 // pred_region
      %s138 = ssub.s32 %s9, 1
      // Predicated region
      $region13: #{vae_forward.17} parent=11 // pred_check
        %p139 = pneg %p96
      $region14: #{vae_forward.17} parent=11 // pred_check_branch
        %141 = sbr.rel (%p139) target = $region16
      $region15: #{vae_forward.17} parent=11 // pred_region
        _
      $region16: #{vae_forward.17} parent=11 // pred_fallthru
        _
    $region12: #{vae_forward.17} parent=5 // pred_fallthru
      _
    %p142 = scmp.lt.s32.totalorder %s9, 4
    // Predicated region
    $region17: #{vae_forward.17} parent=5 // pred_check
      %p143 = pneg %p142
    $region18: #{vae_forward.17} parent=5 // pred_check_branch
      %145 = sbr.rel (%p143) target = $region20
    $region19: #{vae_forward.17} parent=5 // pred_region
      // Predicated region
      $region21: #{vae_forward.17} parent=19 // pred_check
        %p146 = pneg %p41
      $region22: #{vae_forward.17} parent=19 // pred_check_branch
        %148 = sbr.rel (%p146) target = $region24
      $region23: #{vae_forward.17} parent=19 // pred_region
        %p149 = scmp.lt.s32.totalorder %s16, 3
        %s150 = scalar_select %p149, %s16, 3
        %s151 = smul.addr %s150, 4
        %s152 = smul.addr %s151, 4
        %s153 = scalar_lea.vmem %s0, %s152
      $region24: #{vae_forward.17} parent=19 // pred_fallthru
        _
      // Predicated region
      $region25: #{vae_forward.17} parent=19 // pred_check
        %p154 = pneg %p69
      $region26: #{vae_forward.17} parent=19 // pred_check_branch
        %156 = sbr.rel (%p154) target = $region28
      $region27: #{vae_forward.17} parent=19 // pred_region
        %p157 = scmp.lt.s32.totalorder %s16, 3
        %s158 = scalar_select %p157, %s16, 3
        %p159 = scmp.lt.s32.totalorder %s17, 0
        %s160 = scalar_select %p159, %s17, 0
        %s161 = smul.addr %s158, 16
        %s162 = sadd.s32 %s160, %s161
        %s163 = smul.addr %s162, 4
        %s164 = scalar_lea.vmem %s1, %s163
      $region28: #{vae_forward.17} parent=19 // pred_fallthru
        _
    $region20: #{vae_forward.17} parent=5 // pred_fallthru
      _
    %p165 = scmp.le.s32.totalorder 1, %s9
    %p166 = scmp.lt.s32.totalorder %s9, 5
    %p167 = pnand %p165, %p166
    %p168 = pneg %p167
    // Predicated region
    $region29: #{vae_forward.17} parent=5 // pred_check
      _
    $region30: #{vae_forward.17} parent=5 // pred_check_branch
      %170 = sbr.rel (%p167) target = $region32
    $region31: #{vae_forward.17} parent=5 // pred_region
      %s171 = ssub.s32 %s9, 1
      %p172 = scmp.lt.s32.totalorder %s18, 3
      %s173 = scalar_select %p172, %s18, 3
      %s174 = smul.addr %s173, 4
      %s175 = smul.addr %s174, 4
      %s176 = scalar_lea.vmem %s0, %s175
      %p177 = pneg %p47
      %p178 = pneg %p44
      %p179 = scmp.lt.s32.totalorder %s18, 3
      %s180 = scalar_select %p179, %s18, 3
      %p181 = scmp.lt.s32.totalorder %s19, 0
      %s182 = scalar_select %p181, %s19, 0
      %s183 = smul.addr %s180, 16
      %s184 = sadd.s32 %s182, %s183
      %s185 = smul.addr %s184, 4
      %s186 = scalar_lea.vmem %s1, %s185
      %p187 = pneg %p75
      %p188 = pneg %p72
      %p189 = pneg %p96
      %p190 = pneg %p93
      %p191 = pneg %p124
      %p192 = pneg %p121
      %p193 = scmp.lt.s32.totalorder %s18, 3
      %s194 = scalar_select %p193, %s18, 3
      %p195 = scmp.lt.s32.totalorder %s19, 0
      %s196 = scalar_select %p195, %s19, 0
      %s197 = smul.addr %s194, 4
      %s198 = sadd.s32 %s196, %s197
      %s199 = smul.addr %s198, 4
      %s200 = scalar_lea.vmem %s3, %s199
      %p201 = scmp.lt.s32.totalorder %s18, 3
      %s202 = scalar_select %p201, %s18, 3
      %s203 = smul.addr %s202, 4
      %s204 = smul.addr %s203, 4
      %s205 = scalar_lea.vmem %s0, %s204
      %p206 = scmp.lt.s32.totalorder %s18, 3
      %s207 = scalar_select %p206, %s18, 3
      %p208 = scmp.lt.s32.totalorder %s19, 0
      %s209 = scalar_select %p208, %s19, 0
      %s210 = smul.addr %s207, 16
      %s211 = sadd.s32 %s209, %s210
      %s212 = smul.addr %s211, 4
      %s213 = scalar_lea.vmem %s1, %s212
      %p214 = scmp.lt.s32.totalorder %s18, 3
      %s215 = scalar_select %p214, %s18, 3
      %p216 = scmp.lt.s32.totalorder %s19, 0
      %s217 = scalar_select %p216, %s19, 0
      %s218 = smul.addr %s215, 4
      %s219 = sadd.s32 %s217, %s218
      %s220 = smul.addr %s219, 4
      %s221 = scalar_lea.vmem %s3, %s220
      %v222 = vld [vmem:[%s205] sm:$0xf]
      %v223 = vld [vmem:[%s205 + $0x4] sm:$0xf]
      %v224 = vld [vmem:[%s205 + $0x8] sm:$0xf]
      %v225 = vld [vmem:[%s205 + $0xc] sm:$0xf]
      %v226 = vld [vmem:[%s213] sm:$0xf]
      %v227 = vld [vmem:[%s213 + $0x4] sm:$0xf]
      %v228 = vld [vmem:[%s213 + $0x8] sm:$0xf]
      %v229 = vld [vmem:[%s213 + $0xc] sm:$0xf]
      %v230 = vld [vmem:[%s213 + $0x10] sm:$0xf]
      %v231 = vld [vmem:[%s213 + $0x14] sm:$0xf]
      %v232 = vld [vmem:[%s213 + $0x18] sm:$0xf]
      %v233 = vld [vmem:[%s213 + $0x1c] sm:$0xf]
      %v234 = vld [vmem:[%s213 + $0x20] sm:$0xf]
      %v235 = vld [vmem:[%s213 + $0x24] sm:$0xf]
      %v236 = vld [vmem:[%s213 + $0x28] sm:$0xf]
      %v237 = vld [vmem:[%s213 + $0x2c] sm:$0xf]
      %v238 = vld [vmem:[%s213 + $0x30] sm:$0xf]
      %v239 = vld [vmem:[%s213 + $0x34] sm:$0xf]
      %v240 = vld [vmem:[%s213 + $0x38] sm:$0xf]
      %v241 = vld [vmem:[%s213 + $0x3c] sm:$0xf]
      %v242 = vld [vmem:[%s2] sm:$0xff]
      %v243 = vld [vmem:[%s2 + $0x8] sm:$0xff]
      %v244 = vld [vmem:[%s2 + $0x10] sm:$0xff]
      %v245 = vld [vmem:[%s2 + $0x18] sm:$0xff]
      %247 = vset.pattern.permute.xlu0 0
      %248 = vperm.xlu0 %247, %v242
      %v249 = vpop.permute.xlu0 %248
      %252 = vset.pattern.permute.xlu0 0
      %253 = vperm.xlu0 %252, %v243
      %v254 = vpop.permute.xlu0 %253
      %257 = vset.pattern.permute.xlu0 0
      %258 = vperm.xlu0 %257, %v244
      %v259 = vpop.permute.xlu0 %258
      %262 = vset.pattern.permute.xlu0 0
      %263 = vperm.xlu0 %262, %v245
      %v264 = vpop.permute.xlu0 %263
      %v270 = vunpack.c.l.b16 %v222
      %v271 = vunpack.c.l.b16 %v223
      %v272 = vunpack.c.l.b16 %v224
      %v273 = vunpack.c.l.b16 %v225
      %v274 = vpack.c.b16 %v271, %v270
      %v275 = vpack.c.b16 %v273, %v272
      %v294 = vunpack.c.l.b16 %v226
      %v295 = vunpack.c.l.b16 %v227
      %v296 = vunpack.c.l.b16 %v228
      %v297 = vunpack.c.l.b16 %v229
      %v298 = vunpack.c.l.b16 %v230
      %v299 = vunpack.c.l.b16 %v231
      %v300 = vunpack.c.l.b16 %v232
      %v301 = vunpack.c.l.b16 %v233
      %v302 = vunpack.c.l.b16 %v234
      %v303 = vunpack.c.l.b16 %v235
      %v304 = vunpack.c.l.b16 %v236
      %v305 = vunpack.c.l.b16 %v237
      %v306 = vunpack.c.l.b16 %v238
      %v307 = vunpack.c.l.b16 %v239
      %v308 = vunpack.c.l.b16 %v240
      %v309 = vunpack.c.l.b16 %v241
      %v310 = vpack.c.b16 %v295, %v294
      %v311 = vpack.c.b16 %v297, %v296
      %v312 = vpack.c.b16 %v299, %v298
      %v313 = vpack.c.b16 %v301, %v300
      %v314 = vpack.c.b16 %v303, %v302
      %v315 = vpack.c.b16 %v305, %v304
      %v316 = vpack.c.b16 %v307, %v306
      %v317 = vpack.c.b16 %v309, %v308
      %326 = vmatpush.bf16.msra.mxu0 %v317
      %327 = vmatpush.bf16.msra.mxu0 %v316
      %328 = vmatpush.bf16.msra.mxu0 %v315
      %329 = vmatpush.bf16.msra.mxu0 %v314
      %330 = vmatpush.bf16.msra.mxu0 %v313
      %331 = vmatpush.bf16.msra.mxu0 %v312
      %332 = vmatpush.bf16.msra.mxu0 %v311
      %333 = vmatpush.bf16.msra.mxu0 %v310
      %334 = vmatmul.bf16.gmra.mxu0 %v274
      %v335 = vpop.f32.mrf.mxu0
      %v336 = vadd.f32 %v249, %v335
      %v337 = vpop.f32.mrf.mxu0
      %v338 = vadd.f32 %v254, %v337
      %339 = vmatmul.bf16.gmra.mxu0 %v275
      %v340 = vpop.f32.mrf.mxu0
      %v341 = vadd.f32 %v259, %v340
      %v342 = vpop.f32.mrf.mxu0
      %v343 = vadd.f32 %v264, %v342
      %344 = vdwg.mxu0
      %v345 = vmax.f32 %v336, 0.0
      %v346 = vmax.f32 %v338, 0.0
      %v347 = vmax.f32 %v341, 0.0
      %v348 = vmax.f32 %v343, 0.0
      %v349 = vpack.c.bf16 %v345, %v345
      %v350 = vpack.c.bf16 %v346, %v346
      %v351 = vpack.c.bf16 %v347, %v347
      %v352 = vpack.c.bf16 %v348, %v348
      %353 = vst [vmem:[%s221] sm:$0xf] %v349
      %354 = vst [vmem:[%s221 + $0x4] sm:$0xf] %v350
      %355 = vst [vmem:[%s221 + $0x8] sm:$0xf] %v351
      %356 = vst [vmem:[%s221 + $0xc] sm:$0xf] %v352
      %p357 = scmp.lt.s32.totalorder %s18, 3
      %s358 = scalar_select %p357, %s18, 3
      %p359 = scmp.lt.s32.totalorder %s19, 0
      %s360 = scalar_select %p359, %s19, 0
      %s361 = smul.addr %s358, 4
      %s362 = sadd.s32 %s360, %s361
      %s363 = smul.addr %s362, 4
      %s364 = scalar_lea.vmem %s3, %s363
      // Predicated region
      $region33: #{vae_forward.17} parent=31 // pred_check
        %p365 = pneg %p121
      $region34: #{vae_forward.17} parent=31 // pred_check_branch
        %367 = sbr.rel (%p365) target = $region36
      $region35: #{vae_forward.17} parent=31 // pred_region
        _
      $region36: #{vae_forward.17} parent=31 // pred_fallthru
        _
    $region32: #{vae_forward.17} parent=5 // pred_fallthru
      _
    %p368 = scmp.le.s32.totalorder 2, %s9
    // Predicated region
    $region37: #{vae_forward.17} parent=5 // pred_check
      %p369 = pneg %p368
    $region38: #{vae_forward.17} parent=5 // pred_check_branch
      %371 = sbr.rel (%p369) target = $region40
    $region39: #{vae_forward.17} parent=5 // pred_region
      %s372 = ssub.s32 %s9, 2
      // Predicated region
      $region41: #{vae_forward.17} parent=39 // pred_check
        %p373 = pneg %p127
      $region42: #{vae_forward.17} parent=39 // pred_check_branch
        %375 = sbr.rel (%p373) target = $region44
      $region43: #{vae_forward.17} parent=39 // pred_region
        %p376 = scmp.lt.s32.totalorder %s20, 3
        %s377 = scalar_select %p376, %s20, 3
        %p378 = scmp.lt.s32.totalorder %s21, 0
        %s379 = scalar_select %p378, %s21, 0
        %s380 = smul.addr %s377, 4
        %s381 = sadd.s32 %s379, %s380
        %s382 = smul.addr %s381, 4
        %s383 = scalar_lea.vmem %s3, %s382
      $region44: #{vae_forward.17} parent=39 // pred_fallthru
        _
    $region40: #{vae_forward.17} parent=5 // pred_fallthru
      _
  $region6: #{vae_forward.17} parent=0 // loop_footer
    %s13 = sadd.s32 1, %s9
  $region7: #{vae_forward.17} parent=0 // loop_footer_branch
    %8 = sbr.rel target = $region3
  $region8: #{vae_forward.17} parent=0 // loop_exit
    _

// kernel: vae_forward.19
$region0: #{vae_forward.19}
  #allocation0 [shape = 'u32[]', space=smem, size = 0x4, offset = 0x4, fixed_abs, tag = 'smem constant byte address 0x4 - core index']
  #allocation1 [shape = 'u32[72,128]{1,0:T(1,128)}', space=vmem, size = 0x9000, scoped, tag = 'internal scratch']
  %s0 = inlined_call_operand.vmem [shape: bf16[4,32,128], index: 0, kind: input, shape index: {}]
  %s1 = inlined_call_operand.vmem [shape: bf16[4,128,512], index: 1, kind: input, shape index: {}]
  %s2 = inlined_call_operand.vmem [shape: f32[32,1], index: 2, kind: input, shape index: {}]
  %s3 = inlined_call_operand.vmem [shape: bf16[4,32,512], index: 3, kind: output, shape index: {}]
  %s4 = sld [smem:[#allocation0]]
  $region45: #{vae_forward.19} parent=0
    _
  %s6 = ssub.s32 1, %s4
  %s7 = scalar_select 0, %s6, %s4
  loop: start=0, step=1, limit=6
  $region2: #{vae_forward.19} parent=0 // loop_pre_header
    _
  $region3: #{vae_forward.19} parent=0 // loop_header
    %s9 = sphi 0, %s13
    %p10 = scmp.ge.s32.totalorder %s9, 6
    %s16 = sphi 0, %s28
    %s17 = sphi 0, %s24
    %s18 = sphi 0, %s16
    %s19 = sphi 0, %s17
    %s20 = sphi 0, %s18
    %s21 = sphi 0, %s19
    %s31 = sphi 0, %s33
    %s34 = sphi 0, %s31
    %s35 = sphi 0, %s34
    %s51 = sphi 0, %s35
    %s59 = sphi 0, %s61
    %s62 = sphi 0, %s59
    %s63 = sphi 0, %s62
    %s79 = sphi 0, %s63
    %s83 = sphi 0, %s83
    %s85 = sphi 0, %s83
    %s86 = sphi 0, %s85
    %s100 = sphi 0, %s86
    %s108 = sphi 0, %s110
    %s111 = sphi 0, %s108
    %s112 = sphi 0, %s111
    %s128 = sphi 0, %s112
  $region4: #{vae_forward.19} parent=0 // loop_header_branch
    %12 = sbr.rel (%p10) target = $region8
  $region5: #{vae_forward.19} parent=0 // loop_body
    %s14 = ssub.s32 %s9, 1
    %s15 = ssub.s32 %s9, 2
    %s22 = sadd.s32 1, %s17
    %p23 = scmp.ge.s32.totalorder %s22, 1
    %s24 = scalar_select %p23, 0, %s22
    %s25 = sadd.s32 1, %s16
    %s26 = scalar_select %p23, %s25, %s16
    %p27 = scmp.ge.s32.totalorder %s26, 4
    %s28 = scalar_select %p27, 0, %s26
    %s29 = ssub.s32 %s16, %s28
    %p30 = scmp.eq.s32.totalorder %s29, 0
    %s32 = sadd.s32 %s31, 1
    %s33 = scalar_select %p30, %s31, %s32
    %p36 = pneg %p30
    %p37 = scmp.eq.s32.totalorder %s9, 3
    %p38 = por %p36, %p37
    %p39 = scmp.ne.s32.totalorder %s31, %s34
    %p40 = scmp.eq.s32.totalorder %s9, 0
    %p41 = por %p39, %p40
    %p42 = scmp.ne.s32.totalorder %s31, %s34
    %p43 = scmp.eq.s32.totalorder %s14, 3
    %p44 = por %p42, %p43
    %p45 = scmp.ne.s32.totalorder %s34, %s35
    %p46 = scmp.eq.s32.totalorder %s14, 0
    %p47 = por %p45, %p46
    %p48 = scmp.ne.s32.totalorder %s34, %s35
    %p49 = scmp.eq.s32.totalorder %s15, 3
    %p50 = por %p48, %p49
    %p52 = scmp.ne.s32.totalorder %s35, %s51
    %p53 = scmp.eq.s32.totalorder %s15, 0
    %p54 = por %p52, %p53
    %s55 = ssub.s32 %s16, %s28
    %s56 = ssub.s32 %s17, %s24
    %s57 = sor.u32 %s55, %s56
    %p58 = scmp.eq.s32.totalorder %s57, 0
    %s60 = sadd.s32 %s59, 1
    %s61 = scalar_select %p58, %s59, %s60
    %p64 = pneg %p58
    %p65 = scmp.eq.s32.totalorder %s9, 3
    %p66 = por %p64, %p65
    %p67 = scmp.ne.s32.totalorder %s59, %s62
    %p68 = scmp.eq.s32.totalorder %s9, 0
    %p69 = por %p67, %p68
    %p70 = scmp.ne.s32.totalorder %s59, %s62
    %p71 = scmp.eq.s32.totalorder %s14, 3
    %p72 = por %p70, %p71
    %p73 = scmp.ne.s32.totalorder %s62, %s63
    %p74 = scmp.eq.s32.totalorder %s14, 0
    %p75 = por %p73, %p74
    %p76 = scmp.ne.s32.totalorder %s62, %s63
    %p77 = scmp.eq.s32.totalorder %s15, 3
    %p78 = por %p76, %p77
    %p80 = scmp.ne.s32.totalorder %s63, %s79
    %p81 = scmp.eq.s32.totalorder %s15, 0
    %p82 = por %p80, %p81
    %s84 = sadd.s32 %s83, 1
    %p87 = scmp.eq.s32.totalorder %s9, 3
    %p88 = scmp.ne.s32.totalorder %s83, %s85
    %p89 = scmp.eq.s32.totalorder %s9, 0
    %p90 = por %p88, %p89
    %p91 = scmp.ne.s32.totalorder %s83, %s85
    %p92 = scmp.eq.s32.totalorder %s14, 3
    %p93 = por %p91, %p92
    %p94 = scmp.ne.s32.totalorder %s85, %s86
    %p95 = scmp.eq.s32.totalorder %s14, 0
    %p96 = por %p94, %p95
    %p97 = scmp.ne.s32.totalorder %s85, %s86
    %p98 = scmp.eq.s32.totalorder %s15, 3
    %p99 = por %p97, %p98
    %p101 = scmp.ne.s32.totalorder %s86, %s100
    %p102 = scmp.eq.s32.totalorder %s15, 0
    %p103 = por %p101, %p102
    %s104 = ssub.s32 %s16, %s28
    %s105 = ssub.s32 %s17, %s24
    %s106 = sor.u32 %s104, %s105
    %p107 = scmp.eq.s32.totalorder %s106, 0
    %s109 = sadd.s32 %s108, 1
    %s110 = scalar_select %p107, %s108, %s109
    %p113 = pneg %p107
    %p114 = scmp.eq.s32.totalorder %s9, 3
    %p115 = por %p113, %p114
    %p116 = scmp.ne.s32.totalorder %s108, %s111
    %p117 = scmp.eq.s32.totalorder %s9, 0
    %p118 = por %p116, %p117
    %p119 = scmp.ne.s32.totalorder %s108, %s111
    %p120 = scmp.eq.s32.totalorder %s14, 3
    %p121 = por %p119, %p120
    %p122 = scmp.ne.s32.totalorder %s111, %s112
    %p123 = scmp.eq.s32.totalorder %s14, 0
    %p124 = por %p122, %p123
    %p125 = scmp.ne.s32.totalorder %s111, %s112
    %p126 = scmp.eq.s32.totalorder %s15, 3
    %p127 = por %p125, %p126
    %p129 = scmp.ne.s32.totalorder %s112, %s128
    %p130 = scmp.eq.s32.totalorder %s15, 0
    %p131 = por %p129, %p130
    %p132 = scmp.le.s32.totalorder 1, %s9
    %p133 = scmp.lt.s32.totalorder %s9, 5
    %p134 = pnand %p132, %p133
    %p135 = pneg %p134
    // Predicated region
    $region9: #{vae_forward.19} parent=5 // pred_check
      _
    $region10: #{vae_forward.19} parent=5 // pred_check_branch
      %137 = sbr.rel (%p134) target = $region12
    $region11: #{vae_forward.19} parent=5 // pred_region
      %s138 = ssub.s32 %s9, 1
      // Predicated region
      $region13: #{vae_forward.19} parent=11 // pred_check
        %p139 = pneg %p96
      $region14: #{vae_forward.19} parent=11 // pred_check_branch
        %141 = sbr.rel (%p139) target = $region16
      $region15: #{vae_forward.19} parent=11 // pred_region
        _
      $region16: #{vae_forward.19} parent=11 // pred_fallthru
        _
    $region12: #{vae_forward.19} parent=5 // pred_fallthru
      _
    %p142 = scmp.lt.s32.totalorder %s9, 4
    // Predicated region
    $region17: #{vae_forward.19} parent=5 // pred_check
      %p143 = pneg %p142
    $region18: #{vae_forward.19} parent=5 // pred_check_branch
      %145 = sbr.rel (%p143) target = $region20
    $region19: #{vae_forward.19} parent=5 // pred_region
      // Predicated region
      $region21: #{vae_forward.19} parent=19 // pred_check
        %p146 = pneg %p41
      $region22: #{vae_forward.19} parent=19 // pred_check_branch
        %148 = sbr.rel (%p146) target = $region24
      $region23: #{vae_forward.19} parent=19 // pred_region
        %p149 = scmp.lt.s32.totalorder %s16, 3
        %s150 = scalar_select %p149, %s16, 3
        %s151 = smul.addr %s150, 4
        %s152 = smul.addr %s151, 4
        %s153 = scalar_lea.vmem %s0, %s152
      $region24: #{vae_forward.19} parent=19 // pred_fallthru
        _
      // Predicated region
      $region25: #{vae_forward.19} parent=19 // pred_check
        %p154 = pneg %p69
      $region26: #{vae_forward.19} parent=19 // pred_check_branch
        %156 = sbr.rel (%p154) target = $region28
      $region27: #{vae_forward.19} parent=19 // pred_region
        %s157 = smul.u32 4, %s17
        %p158 = scmp.lt.s32.totalorder %s16, 3
        %s159 = scalar_select %p158, %s16, 3
        %p160 = scmp.lt.s32.totalorder %s157, 3
        %s161 = scalar_select %p160, %s157, 3
        %s162 = smul.addr %s159, 64
        %s163 = sadd.s32 %s161, %s162
        %s164 = smul.addr %s163, 4
        %s165 = scalar_lea.vmem %s1, %s164
        %s166 = smul.u32 4, %s17
      $region28: #{vae_forward.19} parent=19 // pred_fallthru
        _
    $region20: #{vae_forward.19} parent=5 // pred_fallthru
      _
    %p167 = scmp.le.s32.totalorder 1, %s9
    %p168 = scmp.lt.s32.totalorder %s9, 5
    %p169 = pnand %p167, %p168
    %p170 = pneg %p169
    // Predicated region
    $region29: #{vae_forward.19} parent=5 // pred_check
      _
    $region30: #{vae_forward.19} parent=5 // pred_check_branch
      %172 = sbr.rel (%p169) target = $region32
    $region31: #{vae_forward.19} parent=5 // pred_region
      %s173 = ssub.s32 %s9, 1
      %p174 = scmp.lt.s32.totalorder %s18, 3
      %s175 = scalar_select %p174, %s18, 3
      %s176 = smul.addr %s175, 4
      %s177 = smul.addr %s176, 4
      %s178 = scalar_lea.vmem %s0, %s177
      %p179 = pneg %p47
      %p180 = pneg %p44
      %s181 = smul.u32 4, %s19
      %p182 = scmp.lt.s32.totalorder %s18, 3
      %s183 = scalar_select %p182, %s18, 3
      %p184 = scmp.lt.s32.totalorder %s181, 3
      %s185 = scalar_select %p184, %s181, 3
      %s186 = smul.addr %s183, 64
      %s187 = sadd.s32 %s185, %s186
      %s188 = smul.addr %s187, 4
      %s189 = scalar_lea.vmem %s1, %s188
      %p190 = pneg %p75
      %p191 = pneg %p72
      %p192 = pneg %p96
      %p193 = pneg %p93
      %p194 = pneg %p124
      %p195 = pneg %p121
      %s196 = smul.u32 4, %s19
      %p197 = scmp.lt.s32.totalorder %s18, 3
      %s198 = scalar_select %p197, %s18, 3
      %p199 = scmp.lt.s32.totalorder %s196, 3
      %s200 = scalar_select %p199, %s196, 3
      %s201 = smul.addr %s198, 16
      %s202 = sadd.s32 %s200, %s201
      %s203 = smul.addr %s202, 4
      %s204 = scalar_lea.vmem %s3, %s203
      %p205 = scmp.lt.s32.totalorder %s18, 3
      %s206 = scalar_select %p205, %s18, 3
      %s207 = smul.addr %s206, 4
      %s208 = smul.addr %s207, 4
      %s209 = scalar_lea.vmem %s0, %s208
      %s210 = smul.u32 4, %s19
      %p211 = scmp.lt.s32.totalorder %s18, 3
      %s212 = scalar_select %p211, %s18, 3
      %p213 = scmp.lt.s32.totalorder %s210, 3
      %s214 = scalar_select %p213, %s210, 3
      %s215 = smul.addr %s212, 64
      %s216 = sadd.s32 %s214, %s215
      %s217 = smul.addr %s216, 4
      %s218 = scalar_lea.vmem %s1, %s217
      %s219 = smul.u32 4, %s19
      %s220 = smul.u32 4, %s19
      %p221 = scmp.lt.s32.totalorder %s18, 3
      %s222 = scalar_select %p221, %s18, 3
      %p223 = scmp.lt.s32.totalorder %s220, 3
      %s224 = scalar_select %p223, %s220, 3
      %s225 = smul.addr %s222, 16
      %s226 = sadd.s32 %s224, %s225
      %s227 = smul.addr %s226, 4
      %s228 = scalar_lea.vmem %s3, %s227
      %s229 = smul.u32 4, %s19
      %v230 = vld [vmem:[%s209] sm:$0xf]
      %v231 = vld [vmem:[%s209 + $0x4] sm:$0xf]
      %v232 = vld [vmem:[%s209 + $0x8] sm:$0xf]
      %v233 = vld [vmem:[%s209 + $0xc] sm:$0xf]
      %v234 = vld [vmem:[%s218] sm:$0xff]
      %v235 = vld [vmem:[%s218 + $0x8] sm:$0xff]
      %v236 = vld [vmem:[%s218 + $0x10] sm:$0xff]
      %v237 = vld [vmem:[%s218 + $0x18] sm:$0xff]
      %v238 = vld [vmem:[%s218 + $0x20] sm:$0xff]
      %v239 = vld [vmem:[%s218 + $0x28] sm:$0xff]
      %v240 = vld [vmem:[%s218 + $0x30] sm:$0xff]
      %v241 = vld [vmem:[%s218 + $0x38] sm:$0xff]
      %v242 = vld [vmem:[%s218 + $0x40] sm:$0xff]
      %v243 = vld [vmem:[%s218 + $0x48] sm:$0xff]
      %v244 = vld [vmem:[%s218 + $0x50] sm:$0xff]
      %v245 = vld [vmem:[%s218 + $0x58] sm:$0xff]
      %v246 = vld [vmem:[%s218 + $0x60] sm:$0xff]
      %v247 = vld [vmem:[%s218 + $0x68] sm:$0xff]
      %v248 = vld [vmem:[%s218 + $0x70] sm:$0xff]
      %v249 = vld [vmem:[%s218 + $0x78] sm:$0xff]
      %v250 = vld [vmem:[%s218 + $0x80] sm:$0xff]
      %v251 = vld [vmem:[%s218 + $0x88] sm:$0xff]
      %v252 = vld [vmem:[%s218 + $0x90] sm:$0xff]
      %v253 = vld [vmem:[%s218 + $0x98] sm:$0xff]
      %v254 = vld [vmem:[%s218 + $0xa0] sm:$0xff]
      %v255 = vld [vmem:[%s218 + $0xa8] sm:$0xff]
      %v256 = vld [vmem:[%s218 + $0xb0] sm:$0xff]
      %v257 = vld [vmem:[%s218 + $0xb8] sm:$0xff]
      %v258 = vld [vmem:[%s218 + $0xc0] sm:$0xff]
      %v259 = vld [vmem:[%s218 + $0xc8] sm:$0xff]
      %v260 = vld [vmem:[%s218 + $0xd0] sm:$0xff]
      %v261 = vld [vmem:[%s218 + $0xd8] sm:$0xff]
      %v262 = vld [vmem:[%s218 + $0xe0] sm:$0xff]
      %v263 = vld [vmem:[%s218 + $0xe8] sm:$0xff]
      %v264 = vld [vmem:[%s218 + $0xf0] sm:$0xff]
      %v265 = vld [vmem:[%s218 + $0xf8] sm:$0xff]
      %v266 = vld [vmem:[%s2] sm:$0xff]
      %v267 = vld [vmem:[%s2 + $0x8] sm:$0xff]
      %v268 = vld [vmem:[%s2 + $0x10] sm:$0xff]
      %v269 = vld [vmem:[%s2 + $0x18] sm:$0xff]
      %271 = vset.pattern.permute.xlu0 0
      %272 = vperm.xlu0 %271, %v266
      %v273 = vpop.permute.xlu0 %272
      %276 = vset.pattern.permute.xlu0 0
      %277 = vperm.xlu0 %276, %v267
      %v278 = vpop.permute.xlu0 %277
      %281 = vset.pattern.permute.xlu0 0
      %282 = vperm.xlu0 %281, %v268
      %v283 = vpop.permute.xlu0 %282
      %286 = vset.pattern.permute.xlu0 0
      %287 = vperm.xlu0 %286, %v269
      %v288 = vpop.permute.xlu0 %287
      %v294 = vunpack.c.l.b16 %v230
      %v295 = vunpack.c.l.b16 %v231
      %v296 = vunpack.c.l.b16 %v232
      %v297 = vunpack.c.l.b16 %v233
      %v298 = vpack.c.b16 %v295, %v294
      %v299 = vpack.c.b16 %v297, %v296
      %v334 = vunpack.c.l.b16 %v234
      %v335 = vunpack.c.h.b16 %v234
      %v336 = vunpack.c.l.b16 %v235
      %v337 = vunpack.c.h.b16 %v235
      %v338 = vunpack.c.l.b16 %v236
      %v339 = vunpack.c.h.b16 %v236
      %v340 = vunpack.c.l.b16 %v237
      %v341 = vunpack.c.h.b16 %v237
      %v342 = vunpack.c.l.b16 %v238
      %v343 = vunpack.c.h.b16 %v238
      %v344 = vunpack.c.l.b16 %v239
      %v345 = vunpack.c.h.b16 %v239
      %v346 = vunpack.c.l.b16 %v240
      %v347 = vunpack.c.h.b16 %v240
      %v348 = vunpack.c.l.b16 %v241
      %v349 = vunpack.c.h.b16 %v241
      %v350 = vunpack.c.l.b16 %v242
      %v351 = vunpack.c.h.b16 %v242
      %v352 = vunpack.c.l.b16 %v243
      %v353 = vunpack.c.h.b16 %v243
      %v354 = vunpack.c.l.b16 %v244
      %v355 = vunpack.c.h.b16 %v244
      %v356 = vunpack.c.l.b16 %v245
      %v357 = vunpack.c.h.b16 %v245
      %v358 = vunpack.c.l.b16 %v246
      %v359 = vunpack.c.h.b16 %v246
      %v360 = vunpack.c.l.b16 %v247
      %v361 = vunpack.c.h.b16 %v247
      %v362 = vunpack.c.l.b16 %v248
      %v363 = vunpack.c.h.b16 %v248
      %v364 = vunpack.c.l.b16 %v249
      %v365 = vunpack.c.h.b16 %v249
      %v366 = vunpack.c.l.b16 %v250
      %v367 = vunpack.c.h.b16 %v250
      %v368 = vunpack.c.l.b16 %v251
      %v369 = vunpack.c.h.b16 %v251
      %v370 = vunpack.c.l.b16 %v252
      %v371 = vunpack.c.h.b16 %v252
      %v372 = vunpack.c.l.b16 %v253
      %v373 = vunpack.c.h.b16 %v253
      %v374 = vunpack.c.l.b16 %v254
      %v375 = vunpack.c.h.b16 %v254
      %v376 = vunpack.c.l.b16 %v255
      %v377 = vunpack.c.h.b16 %v255
      %v378 = vunpack.c.l.b16 %v256
      %v379 = vunpack.c.h.b16 %v256
      %v380 = vunpack.c.l.b16 %v257
      %v381 = vunpack.c.h.b16 %v257
      %v382 = vunpack.c.l.b16 %v258
      %v383 = vunpack.c.h.b16 %v258
      %v384 = vunpack.c.l.b16 %v259
      %v385 = vunpack.c.h.b16 %v259
      %v386 = vunpack.c.l.b16 %v260
      %v387 = vunpack.c.h.b16 %v260
      %v388 = vunpack.c.l.b16 %v261
      %v389 = vunpack.c.h.b16 %v261
      %v390 = vunpack.c.l.b16 %v262
      %v391 = vunpack.c.h.b16 %v262
      %v392 = vunpack.c.l.b16 %v263
      %v393 = vunpack.c.h.b16 %v263
      %v394 = vunpack.c.l.b16 %v264
      %v395 = vunpack.c.h.b16 %v264
      %v396 = vunpack.c.l.b16 %v265
      %v397 = vunpack.c.h.b16 %v265
      %v398 = vpack.c.b16 %v338, %v334
      %v399 = vpack.c.b16 %v339, %v335
      %v400 = vpack.c.b16 %v340, %v336
      %v401 = vpack.c.b16 %v341, %v337
      %v402 = vpack.c.b16 %v346, %v342
      %v403 = vpack.c.b16 %v347, %v343
      %v404 = vpack.c.b16 %v348, %v344
      %v405 = vpack.c.b16 %v349, %v345
      %v406 = vpack.c.b16 %v354, %v350
      %v407 = vpack.c.b16 %v355, %v351
      %v408 = vpack.c.b16 %v356, %v352
      %v409 = vpack.c.b16 %v357, %v353
      %v410 = vpack.c.b16 %v362, %v358
      %v411 = vpack.c.b16 %v363, %v359
      %v412 = vpack.c.b16 %v364, %v360
      %v413 = vpack.c.b16 %v365, %v361
      %v414 = vpack.c.b16 %v370, %v366
      %v415 = vpack.c.b16 %v371, %v367
      %v416 = vpack.c.b16 %v372, %v368
      %v417 = vpack.c.b16 %v373, %v369
      %v418 = vpack.c.b16 %v378, %v374
      %v419 = vpack.c.b16 %v379, %v375
      %v420 = vpack.c.b16 %v380, %v376
      %v421 = vpack.c.b16 %v381, %v377
      %v422 = vpack.c.b16 %v386, %v382
      %v423 = vpack.c.b16 %v387, %v383
      %v424 = vpack.c.b16 %v388, %v384
      %v425 = vpack.c.b16 %v389, %v385
      %v426 = vpack.c.b16 %v394, %v390
      %v427 = vpack.c.b16 %v395, %v391
      %v428 = vpack.c.b16 %v396, %v392
      %v429 = vpack.c.b16 %v397, %v393
      %462 = vmatpush.bf16.msra.mxu0 %v426
      %463 = vmatpush.bf16.msra.mxu0 %v422
      %464 = vmatpush.bf16.msra.mxu0 %v418
      %465 = vmatpush.bf16.msra.mxu0 %v414
      %466 = vmatpush.bf16.msra.mxu0 %v410
      %467 = vmatpush.bf16.msra.mxu0 %v406
      %468 = vmatpush.bf16.msra.mxu0 %v402
      %469 = vmatpush.bf16.msra.mxu0 %v398
      %470 = vmatmul.bf16.gmra.mxu0 %v298
      %v471 = vpop.f32.mrf.mxu0
      %v472 = vadd.f32 %v273, %v471
      %v473 = vpop.f32.mrf.mxu0
      %v474 = vadd.f32 %v278, %v473
      %475 = vmatmul.bf16.gmra.mxu0 %v299
      %v476 = vpop.f32.mrf.mxu0
      %v477 = vadd.f32 %v283, %v476
      %v478 = vpop.f32.mrf.mxu0
      %v479 = vadd.f32 %v288, %v478
      %480 = vdwg.mxu0
      %481 = vmatpush.bf16.msra.mxu0 %v427
      %482 = vmatpush.bf16.msra.mxu0 %v423
      %483 = vmatpush.bf16.msra.mxu0 %v419
      %484 = vmatpush.bf16.msra.mxu0 %v415
      %485 = vmatpush.bf16.msra.mxu0 %v411
      %486 = vmatpush.bf16.msra.mxu0 %v407
      %487 = vmatpush.bf16.msra.mxu0 %v403
      %488 = vmatpush.bf16.msra.mxu0 %v399
      %489 = vmatmul.bf16.gmra.mxu0 %v298
      %v490 = vpop.f32.mrf.mxu0
      %v491 = vadd.f32 %v273, %v490
      %v492 = vpop.f32.mrf.mxu0
      %v493 = vadd.f32 %v278, %v492
      %494 = vmatmul.bf16.gmra.mxu0 %v299
      %v495 = vpop.f32.mrf.mxu0
      %v496 = vadd.f32 %v283, %v495
      %v497 = vpop.f32.mrf.mxu0
      %v498 = vadd.f32 %v288, %v497
      %499 = vdwg.mxu0
      %500 = vmatpush.bf16.msra.mxu0 %v428
      %501 = vmatpush.bf16.msra.mxu0 %v424
      %502 = vmatpush.bf16.msra.mxu0 %v420
      %503 = vmatpush.bf16.msra.mxu0 %v416
      %504 = vmatpush.bf16.msra.mxu0 %v412
      %505 = vmatpush.bf16.msra.mxu0 %v408
      %506 = vmatpush.bf16.msra.mxu0 %v404
      %507 = vmatpush.bf16.msra.mxu0 %v400
      %508 = vmatmul.bf16.gmra.mxu0 %v298
      %v509 = vpop.f32.mrf.mxu0
      %v510 = vadd.f32 %v273, %v509
      %v511 = vpop.f32.mrf.mxu0
      %v512 = vadd.f32 %v278, %v511
      %513 = vmatmul.bf16.gmra.mxu0 %v299
      %v514 = vpop.f32.mrf.mxu0
      %v515 = vadd.f32 %v283, %v514
      %v516 = vpop.f32.mrf.mxu0
      %v517 = vadd.f32 %v288, %v516
      %518 = vdwg.mxu0
      %519 = vmatpush.bf16.msra.mxu0 %v429
      %520 = vmatpush.bf16.msra.mxu0 %v425
      %521 = vmatpush.bf16.msra.mxu0 %v421
      %522 = vmatpush.bf16.msra.mxu0 %v417
      %523 = vmatpush.bf16.msra.mxu0 %v413
      %524 = vmatpush.bf16.msra.mxu0 %v409
      %525 = vmatpush.bf16.msra.mxu0 %v405
      %526 = vmatpush.bf16.msra.mxu0 %v401
      %527 = vmatmul.bf16.gmra.mxu0 %v298
      %v528 = vpop.f32.mrf.mxu0
      %v529 = vadd.f32 %v273, %v528
      %v530 = vpop.f32.mrf.mxu0
      %v531 = vadd.f32 %v278, %v530
      %532 = vmatmul.bf16.gmra.mxu0 %v299
      %v533 = vpop.f32.mrf.mxu0
      %v534 = vadd.f32 %v283, %v533
      %v535 = vpop.f32.mrf.mxu0
      %v536 = vadd.f32 %v288, %v535
      %537 = vdwg.mxu0
      %v538 = vmax.f32 %v472, 0.0
      %v539 = vmax.f32 %v491, 0.0
      %v540 = vmax.f32 %v510, 0.0
      %v541 = vmax.f32 %v529, 0.0
      %v542 = vmax.f32 %v474, 0.0
      %v543 = vmax.f32 %v493, 0.0
      %v544 = vmax.f32 %v512, 0.0
      %v545 = vmax.f32 %v531, 0.0
      %v546 = vmax.f32 %v477, 0.0
      %v547 = vmax.f32 %v496, 0.0
      %v548 = vmax.f32 %v515, 0.0
      %v549 = vmax.f32 %v534, 0.0
      %v550 = vmax.f32 %v479, 0.0
      %v551 = vmax.f32 %v498, 0.0
      %v552 = vmax.f32 %v517, 0.0
      %v553 = vmax.f32 %v536, 0.0
      %v554 = vpack.c.bf16 %v539, %v538
      %v555 = vpack.c.bf16 %v541, %v540
      %v556 = vpack.c.bf16 %v543, %v542
      %v557 = vpack.c.bf16 %v545, %v544
      %v558 = vpack.c.bf16 %v547, %v546
      %v559 = vpack.c.bf16 %v549, %v548
      %v560 = vpack.c.bf16 %v551, %v550
      %v561 = vpack.c.bf16 %v553, %v552
      %562 = vst [vmem:[%s228] sm:$0xff] %v554
      %563 = vst [vmem:[%s228 + $0x8] sm:$0xff] %v555
      %564 = vst [vmem:[%s228 + $0x10] sm:$0xff] %v556
      %565 = vst [vmem:[%s228 + $0x18] sm:$0xff] %v557
      %566 = vst [vmem:[%s228 + $0x20] sm:$0xff] %v558
      %567 = vst [vmem:[%s228 + $0x28] sm:$0xff] %v559
      %568 = vst [vmem:[%s228 + $0x30] sm:$0xff] %v560
      %569 = vst [vmem:[%s228 + $0x38] sm:$0xff] %v561
      %s570 = smul.u32 4, %s19
      %p571 = scmp.lt.s32.totalorder %s18, 3
      %s572 = scalar_select %p571, %s18, 3
      %p573 = scmp.lt.s32.totalorder %s570, 3
      %s574 = scalar_select %p573, %s570, 3
      %s575 = smul.addr %s572, 16
      %s576 = sadd.s32 %s574, %s575
      %s577 = smul.addr %s576, 4
      %s578 = scalar_lea.vmem %s3, %s577
      // Predicated region
      $region33: #{vae_forward.19} parent=31 // pred_check
        %p579 = pneg %p121
      $region34: #{vae_forward.19} parent=31 // pred_check_branch
        %581 = sbr.rel (%p579) target = $region36
      $region35: #{vae_forward.19} parent=31 // pred_region
        %s582 = smul.u32 4, %s19
      $region36: #{vae_forward.19} parent=31 // pred_fallthru
        _
    $region32: #{vae_forward.19} parent=5 // pred_fallthru
      _
    %p583 = scmp.le.s32.totalorder 2, %s9
    // Predicated region
    $region37: #{vae_forward.19} parent=5 // pred_check
      %p584 = pneg %p583
    $region38: #{vae_forward.19} parent=5 // pred_check_branch
      %586 = sbr.rel (%p584) target = $region40
    $region39: #{vae_forward.19} parent=5 // pred_region
      %s587 = ssub.s32 %s9, 2
      // Predicated region
      $region41: #{vae_forward.19} parent=39 // pred_check
        %p588 = pneg %p127
      $region42: #{vae_forward.19} parent=39 // pred_check_branch
        %590 = sbr.rel (%p588) target = $region44
      $region43: #{vae_forward.19} parent=39 // pred_region
        %s591 = smul.u32 4, %s21
        %p592 = scmp.lt.s32.totalorder %s20, 3
        %s593 = scalar_select %p592, %s20, 3
        %p594 = scmp.lt.s32.totalorder %s591, 3
        %s595 = scalar_select %p594, %s591, 3
        %s596 = smul.addr %s593, 16
        %s597 = sadd.s32 %s595, %s596
        %s598 = smul.addr %s597, 4
        %s599 = scalar_lea.vmem %s3, %s598
      $region44: #{vae_forward.19} parent=39 // pred_fallthru
        _
    $region40: #{vae_forward.19} parent=5 // pred_fallthru
      _
  $region6: #{vae_forward.19} parent=0 // loop_footer
    %s13 = sadd.s32 1, %s9
  $region7: #{vae_forward.19} parent=0 // loop_footer_branch
    %8 = sbr.rel target = $region3
  $region8: #{vae_forward.19} parent=0 // loop_exit
    _

// kernel: vae_forward.20
$region0: #{vae_forward.20}
  #allocation0 [shape = 'u32[]', space=smem, size = 0x4, offset = 0x4, fixed_abs, tag = 'smem constant byte address 0x4 - core index']
  #allocation1 [shape = 'u32[72,128]{1,0:T(1,128)}', space=vmem, size = 0x9000, scoped, tag = 'internal scratch']
  #allocation2 [shape = 'f32[1,1]{1,0:T(1,128)S(1)}', space=vmem, size = 0x200, scoped, tag = 'scoped memory for vae_forward.20']
  %s0 = inlined_call_operand.vmem [shape: bf16[4,1,128], index: 0, kind: input, shape index: {}]
  %s1 = inlined_call_operand.vmem [shape: bf16[4,128,2048], index: 1, kind: input, shape index: {}]
  %s2 = inlined_call_operand.<no memory space> [shape: f32[1,1], index: 2, kind: input, shape index: {}]
  %s3 = inlined_call_operand.vmem [shape: f32[4,1,2048], index: 3, kind: output, shape index: {}]
  %s4 = sld [smem:[#allocation0]]
  $region68: #{vae_forward.20} parent=0
    _
  %s6 = ssub.s32 1, %s4
  %s7 = scalar_select 0, %s6, %s4
  %v8 = vstv %s2
  %9 = vst [vmem:[#allocation2] sm:$0x1] %v8
  $region1: #{vae_forward.20} parent=0
    #allocation3 [shape = 'u8[262144]{0}', space=vmem, size = 0x40000, scoped, tag = 'input window, operand 1']
    loop: start=0, step=1, limit=18
    $region2: #{vae_forward.20} parent=1 // loop_pre_header
      _
    $region3: #{vae_forward.20} parent=1 // loop_header
      %s11 = sphi 0, %s15
      %p12 = scmp.ge.s32.totalorder %s11, 18
      %s18 = sphi 0, %s30
      %s19 = sphi 0, %s26
      %s20 = sphi 0, %s18
      %s21 = sphi 0, %s19
      %s22 = sphi 0, %s20
      %s23 = sphi 0, %s21
      %s33 = sphi 0, %s35
      %s36 = sphi 0, %s33
      %s37 = sphi 0, %s36
      %s53 = sphi 0, %s37
      %s61 = sphi 0, %s63
      %s64 = sphi 0, %s61
      %s65 = sphi 0, %s64
      %s81 = sphi 0, %s65
      %s85 = sphi 0, %s85
      %s87 = sphi 0, %s85
      %s88 = sphi 0, %s87
      %s102 = sphi 0, %s88
      %s110 = sphi 0, %s112
      %s113 = sphi 0, %s110
      %s114 = sphi 0, %s113
      %s130 = sphi 0, %s114
    $region4: #{vae_forward.20} parent=1 // loop_header_branch
      %14 = sbr.rel (%p12) target = $region8
    $region5: #{vae_forward.20} parent=1 // loop_body
      %s16 = ssub.s32 %s11, 1
      %s17 = ssub.s32 %s11, 2
      %s24 = sadd.s32 1, %s19
      %p25 = scmp.ge.s32.totalorder %s24, 4
      %s26 = scalar_select %p25, 0, %s24
      %s27 = sadd.s32 1, %s18
      %s28 = scalar_select %p25, %s27, %s18
      %p29 = scmp.ge.s32.totalorder %s28, 4
      %s30 = scalar_select %p29, 0, %s28
      %s31 = ssub.s32 %s18, %s30
      %p32 = scmp.eq.s32.totalorder %s31, 0
      %s34 = sadd.s32 %s33, 1
      %s35 = scalar_select %p32, %s33, %s34
      %p38 = pneg %p32
      %p39 = scmp.eq.s32.totalorder %s11, 15
      %p40 = por %p38, %p39
      %p41 = scmp.ne.s32.totalorder %s33, %s36
      %p42 = scmp.eq.s32.totalorder %s11, 0
      %p43 = por %p41, %p42
      %p44 = scmp.ne.s32.totalorder %s33, %s36
      %p45 = scmp.eq.s32.totalorder %s16, 15
      %p46 = por %p44, %p45
      %p47 = scmp.ne.s32.totalorder %s36, %s37
      %p48 = scmp.eq.s32.totalorder %s16, 0
      %p49 = por %p47, %p48
      %p50 = scmp.ne.s32.totalorder %s36, %s37
      %p51 = scmp.eq.s32.totalorder %s17, 15
      %p52 = por %p50, %p51
      %p54 = scmp.ne.s32.totalorder %s37, %s53
      %p55 = scmp.eq.s32.totalorder %s17, 0
      %p56 = por %p54, %p55
      %s57 = ssub.s32 %s18, %s30
      %s58 = ssub.s32 %s19, %s26
      %s59 = sor.u32 %s57, %s58
      %p60 = scmp.eq.s32.totalorder %s59, 0
      %s62 = sadd.s32 %s61, 1
      %s63 = scalar_select %p60, %s61, %s62
      %p66 = pneg %p60
      %p67 = scmp.eq.s32.totalorder %s11, 15
      %p68 = por %p66, %p67
      %p69 = scmp.ne.s32.totalorder %s61, %s64
      %p70 = scmp.eq.s32.totalorder %s11, 0
      %p71 = por %p69, %p70
      %p72 = scmp.ne.s32.totalorder %s61, %s64
      %p73 = scmp.eq.s32.totalorder %s16, 15
      %p74 = por %p72, %p73
      %p75 = scmp.ne.s32.totalorder %s64, %s65
      %p76 = scmp.eq.s32.totalorder %s16, 0
      %p77 = por %p75, %p76
      %p78 = scmp.ne.s32.totalorder %s64, %s65
      %p79 = scmp.eq.s32.totalorder %s17, 15
      %p80 = por %p78, %p79
      %p82 = scmp.ne.s32.totalorder %s65, %s81
      %p83 = scmp.eq.s32.totalorder %s17, 0
      %p84 = por %p82, %p83
      %s86 = sadd.s32 %s85, 1
      %p89 = scmp.eq.s32.totalorder %s11, 15
      %p90 = scmp.ne.s32.totalorder %s85, %s87
      %p91 = scmp.eq.s32.totalorder %s11, 0
      %p92 = por %p90, %p91
      %p93 = scmp.ne.s32.totalorder %s85, %s87
      %p94 = scmp.eq.s32.totalorder %s16, 15
      %p95 = por %p93, %p94
      %p96 = scmp.ne.s32.totalorder %s87, %s88
      %p97 = scmp.eq.s32.totalorder %s16, 0
      %p98 = por %p96, %p97
      %p99 = scmp.ne.s32.totalorder %s87, %s88
      %p100 = scmp.eq.s32.totalorder %s17, 15
      %p101 = por %p99, %p100
      %p103 = scmp.ne.s32.totalorder %s88, %s102
      %p104 = scmp.eq.s32.totalorder %s17, 0
      %p105 = por %p103, %p104
      %s106 = ssub.s32 %s18, %s30
      %s107 = ssub.s32 %s19, %s26
      %s108 = sor.u32 %s106, %s107
      %p109 = scmp.eq.s32.totalorder %s108, 0
      %s111 = sadd.s32 %s110, 1
      %s112 = scalar_select %p109, %s110, %s111
      %p115 = pneg %p109
      %p116 = scmp.eq.s32.totalorder %s11, 15
      %p117 = por %p115, %p116
      %p118 = scmp.ne.s32.totalorder %s110, %s113
      %p119 = scmp.eq.s32.totalorder %s11, 0
      %p120 = por %p118, %p119
      %p121 = scmp.ne.s32.totalorder %s110, %s113
      %p122 = scmp.eq.s32.totalorder %s16, 15
      %p123 = por %p121, %p122
      %p124 = scmp.ne.s32.totalorder %s113, %s114
      %p125 = scmp.eq.s32.totalorder %s16, 0
      %p126 = por %p124, %p125
      %p127 = scmp.ne.s32.totalorder %s113, %s114
      %p128 = scmp.eq.s32.totalorder %s17, 15
      %p129 = por %p127, %p128
      %p131 = scmp.ne.s32.totalorder %s114, %s130
      %p132 = scmp.eq.s32.totalorder %s17, 0
      %p133 = por %p131, %p132
      %p134 = scmp.le.s32.totalorder 1, %s11
      %p135 = scmp.lt.s32.totalorder %s11, 17
      %p136 = pnand %p134, %p135
      %p137 = pneg %p136
      // Predicated region
      $region9: #{vae_forward.20} parent=5 // pred_check
        _
      $region10: #{vae_forward.20} parent=5 // pred_check_branch
        %139 = sbr.rel (%p136) target = $region12
      $region11: #{vae_forward.20} parent=5 // pred_region
        %s140 = ssub.s32 %s11, 1
        // Predicated region
        $region13: #{vae_forward.20} parent=11 // pred_check
          %p141 = pneg %p98
        $region14: #{vae_forward.20} parent=11 // pred_check_branch
          %143 = sbr.rel (%p141) target = $region16
        $region15: #{vae_forward.20} parent=11 // pred_region
          _
        $region16: #{vae_forward.20} parent=11 // pred_fallthru
          _
      $region12: #{vae_forward.20} parent=5 // pred_fallthru
        _
      %p144 = scmp.lt.s32.totalorder %s11, 16
      // Predicated region
      $region17: #{vae_forward.20} parent=5 // pred_check
        %p145 = pneg %p144
      $region18: #{vae_forward.20} parent=5 // pred_check_branch
        %147 = sbr.rel (%p145) target = $region20
      $region19: #{vae_forward.20} parent=5 // pred_region
        // Predicated region
        $region21: #{vae_forward.20} parent=19 // pred_check
          %p148 = pneg %p43
        $region22: #{vae_forward.20} parent=19 // pred_check_branch
          %150 = sbr.rel (%p148) target = $region24
        $region23: #{vae_forward.20} parent=19 // pred_region
          %p151 = scmp.lt.s32.totalorder %s18, 3
          %s152 = scalar_select %p151, %s18, 3
          %s153 = scalar_lea.vmem %s0, %s152
        $region24: #{vae_forward.20} parent=19 // pred_fallthru
          _
        // Predicated region
        $region25: #{vae_forward.20} parent=19 // pred_check
          %p154 = pneg %p71
        $region26: #{vae_forward.20} parent=19 // pred_check_branch
          %156 = sbr.rel (%p154) target = $region28
        $region27: #{vae_forward.20} parent=19 // pred_region
          %s157 = sand.u32 %s61, 1
          %s158 = sand.u32 %s61, 1
          %s159 = smul.addr %s158, 256
          %s160 = scalar_lea.vmem [#allocation3], %s159
          %s161 = smul.u32 4, %s19
          %s162 = smul.addr %s18, 256
          %s163 = sadd.s32 %s161, %s162
          %s164 = smul.addr %s163, 4
          %s165 = scalar_lea.vmem %s1, %s164
          // Predicated region
          $region29: #{vae_forward.20} parent=27 // pred_check
            _
          $region30: #{vae_forward.20} parent=27 // pred_check_branch
            %167 = sbr.rel (0) target = $region32
          $region31: #{vae_forward.20} parent=27 // pred_region
            // Predicated region
            $region33: #{vae_forward.20} parent=31 // pred_check
              _
            $region34: #{vae_forward.20} parent=31 // pred_check_branch
              %169 = sbr.rel (0) target = $region36
            $region35: #{vae_forward.20} parent=31 // pred_region
              loop: start=0, step=1, limit=1
              $region37: #{vae_forward.20} parent=35 // loop_pre_header
                _
              $region38: #{vae_forward.20} parent=35 // loop_header
                %s171 = sphi 0, %s175
                %p172 = scmp.ge.s32.totalorder %s171, 1
                %s176 = sphi %s165, %s165
                %s177 = sphi %s160, %s160
              $region39: #{vae_forward.20} parent=35 // loop_header_branch
                %174 = sbr.rel (%p172) target = $region43
              $region40: #{vae_forward.20} parent=35 // loop_body
                %v178 = vld [vmem:[%s176] sm:$0xff]
                %179 = vst [vmem:[%s177] sm:$0xff] %v178
                %v180 = vld [vmem:[%s176 + $0x8] sm:$0xff]
                %181 = vst [vmem:[%s177 + $0x8] sm:$0xff] %v180
                %v182 = vld [vmem:[%s176 + $0x40] sm:$0xff]
                %183 = vst [vmem:[%s177 + $0x10] sm:$0xff] %v182
                %v184 = vld [vmem:[%s176 + $0x48] sm:$0xff]
                %185 = vst [vmem:[%s177 + $0x18] sm:$0xff] %v184
                %v186 = vld [vmem:[%s176 + $0x80] sm:$0xff]
                %187 = vst [vmem:[%s177 + $0x20] sm:$0xff] %v186
                %v188 = vld [vmem:[%s176 + $0x88] sm:$0xff]
                %189 = vst [vmem:[%s177 + $0x28] sm:$0xff] %v188
                %v190 = vld [vmem:[%s176 + $0xc0] sm:$0xff]
                %191 = vst [vmem:[%s177 + $0x30] sm:$0xff] %v190
                %v192 = vld [vmem:[%s176 + $0xc8] sm:$0xff]
                %193 = vst [vmem:[%s177 + $0x38] sm:$0xff] %v192
                %v194 = vld [vmem:[%s176 + $0x100] sm:$0xff]
                %195 = vst [vmem:[%s177 + $0x40] sm:$0xff] %v194
                %v196 = vld [vmem:[%s176 + $0x108] sm:$0xff]
                %197 = vst [vmem:[%s177 + $0x48] sm:$0xff] %v196
                %v198 = vld [vmem:[%s176 + $0x140] sm:$0xff]
                %199 = vst [vmem:[%s177 + $0x50] sm:$0xff] %v198
                %v200 = vld [vmem:[%s176 + $0x148] sm:$0xff]
                %201 = vst [vmem:[%s177 + $0x58] sm:$0xff] %v200
                %v202 = vld [vmem:[%s176 + $0x180] sm:$0xff]
                %203 = vst [vmem:[%s177 + $0x60] sm:$0xff] %v202
                %v204 = vld [vmem:[%s176 + $0x188] sm:$0xff]
                %205 = vst [vmem:[%s177 + $0x68] sm:$0xff] %v204
                %v206 = vld [vmem:[%s176 + $0x1c0] sm:$0xff]
                %207 = vst [vmem:[%s177 + $0x70] sm:$0xff] %v206
                %v208 = vld [vmem:[%s176 + $0x1c8] sm:$0xff]
                %209 = vst [vmem:[%s177 + $0x78] sm:$0xff] %v208
                %v210 = vld [vmem:[%s176 + $0x200] sm:$0xff]
                %211 = vst [vmem:[%s177 + $0x80] sm:$0xff] %v210
                %v212 = vld [vmem:[%s176 + $0x208] sm:$0xff]
                %213 = vst [vmem:[%s177 + $0x88] sm:$0xff] %v212
                %v214 = vld [vmem:[%s176 + $0x240] sm:$0xff]
                %215 = vst [vmem:[%s177 + $0x90] sm:$0xff] %v214
                %v216 = vld [vmem:[%s176 + $0x248] sm:$0xff]
                %217 = vst [vmem:[%s177 + $0x98] sm:$0xff] %v216
                %v218 = vld [vmem:[%s176 + $0x280] sm:$0xff]
                %219 = vst [vmem:[%s177 + $0xa0] sm:$0xff] %v218
                %v220 = vld [vmem:[%s176 + $0x288] sm:$0xff]
                %221 = vst [vmem:[%s177 + $0xa8] sm:$0xff] %v220
                %v222 = vld [vmem:[%s176 + $0x2c0] sm:$0xff]
                %223 = vst [vmem:[%s177 + $0xb0] sm:$0xff] %v222
                %v224 = vld [vmem:[%s176 + $0x2c8] sm:$0xff]
                %225 = vst [vmem:[%s177 + $0xb8] sm:$0xff] %v224
                %v226 = vld [vmem:[%s176 + $0x300] sm:$0xff]
                %227 = vst [vmem:[%s177 + $0xc0] sm:$0xff] %v226
                %v228 = vld [vmem:[%s176 + $0x308] sm:$0xff]
                %229 = vst [vmem:[%s177 + $0xc8] sm:$0xff] %v228
                %v230 = vld [vmem:[%s176 + $0x340] sm:$0xff]
                %231 = vst [vmem:[%s177 + $0xd0] sm:$0xff] %v230
                %v232 = vld [vmem:[%s176 + $0x348] sm:$0xff]
                %233 = vst [vmem:[%s177 + $0xd8] sm:$0xff] %v232
                %v234 = vld [vmem:[%s176 + $0x380] sm:$0xff]
                %235 = vst [vmem:[%s177 + $0xe0] sm:$0xff] %v234
                %v236 = vld [vmem:[%s176 + $0x388] sm:$0xff]
                %237 = vst [vmem:[%s177 + $0xe8] sm:$0xff] %v236
                %v238 = vld [vmem:[%s176 + $0x3c0] sm:$0xff]
                %239 = vst [vmem:[%s177 + $0xf0] sm:$0xff] %v238
                %v240 = vld [vmem:[%s176 + $0x3c8] sm:$0xff]
                %241 = vst [vmem:[%s177 + $0xf8] sm:$0xff] %v240
              $region41: #{vae_forward.20} parent=35 // loop_footer
                %s175 = sadd.s32 1, %s171
              $region42: #{vae_forward.20} parent=35 // loop_footer_branch
                %170 = sbr.rel target = $region38
              $region43: #{vae_forward.20} parent=35 // loop_exit
                _
            $region36: #{vae_forward.20} parent=31 // pred_fallthru
              _
            // Predicated region
            $region44: #{vae_forward.20} parent=31 // pred_check
              _
            $region45: #{vae_forward.20} parent=31 // pred_check_branch
              %243 = sbr.rel target = $region47
            $region46: #{vae_forward.20} parent=31 // pred_region
              _
            $region47: #{vae_forward.20} parent=31 // pred_fallthru
              _
          $region32: #{vae_forward.20} parent=27 // pred_fallthru
            _
          %244 = vnop
        $region28: #{vae_forward.20} parent=19 // pred_fallthru
          _
      $region20: #{vae_forward.20} parent=5 // pred_fallthru
        _
      %p245 = scmp.le.s32.totalorder 1, %s11
      %p246 = scmp.lt.s32.totalorder %s11, 17
      %p247 = pnand %p245, %p246
      %p248 = pneg %p247
      // Predicated region
      $region48: #{vae_forward.20} parent=5 // pred_check
        _
      $region49: #{vae_forward.20} parent=5 // pred_check_branch
        %250 = sbr.rel (%p247) target = $region51
      $region50: #{vae_forward.20} parent=5 // pred_region
        %s251 = ssub.s32 %s11, 1
        %s252 = sand.u32 %s64, 1
        %s253 = sand.u32 %s64, 1
        %s254 = smul.addr %s253, 256
        %s255 = scalar_lea.vmem [#allocation3], %s254
        // Predicated region
        $region52: #{vae_forward.20} parent=50 // pred_check
          %p256 = pneg %p77
        $region53: #{vae_forward.20} parent=50 // pred_check_branch
          %258 = sbr.rel (%p256) target = $region55
        $region54: #{vae_forward.20} parent=50 // pred_region
          _
        $region55: #{vae_forward.20} parent=50 // pred_fallthru
          _
        %p259 = scmp.lt.s32.totalorder %s20, 3
        %s260 = scalar_select %p259, %s20, 3
        %s261 = scalar_lea.vmem %s0, %s260
        %p262 = pneg %p49
        %p263 = pneg %p46
        %s264 = sand.u32 %s64, 1
        %s265 = sand.u32 %s64, 1
        %s266 = smul.addr %s265, 256
        %s267 = scalar_lea.vmem [#allocation3], %s266
        %p268 = pneg %p77
        %p269 = pneg %p74
        %p270 = pneg %p98
        %p271 = pneg %p95
        %p272 = pneg %p126
        %p273 = pneg %p123
        %s274 = smul.u32 4, %s21
        %p275 = scmp.lt.s32.totalorder %s20, 3
        %s276 = scalar_select %p275, %s20, 3
        %p277 = scmp.lt.s32.totalorder %s274, 15
        %s278 = scalar_select %p277, %s274, 15
        %s279 = smul.addr %s276, 16
        %s280 = sadd.s32 %s278, %s279
        %s281 = scalar_lea.vmem %s3, %s280
        %p282 = scmp.lt.s32.totalorder %s20, 3
        %s283 = scalar_select %p282, %s20, 3
        %s284 = scalar_lea.vmem %s0, %s283
        %s285 = smul.u32 4, %s21
        %s286 = smul.u32 4, %s21
        %p287 = scmp.lt.s32.totalorder %s20, 3
        %s288 = scalar_select %p287, %s20, 3
        %p289 = scmp.lt.s32.totalorder %s286, 15
        %s290 = scalar_select %p289, %s286, 15
        %s291 = smul.addr %s288, 16
        %s292 = sadd.s32 %s290, %s291
        %s293 = scalar_lea.vmem %s3, %s292
        %s294 = smul.u32 4, %s21
        %v295 = vld [vmem:[%s284] sm:$0x1]
        %v296 = vld [vmem:[%s255] sm:$0xff]
        %v297 = vld [vmem:[%s255 + $0x8] sm:$0xff]
        %v298 = vld [vmem:[%s255 + $0x10] sm:$0xff]
        %v299 = vld [vmem:[%s255 + $0x18] sm:$0xff]
        %v300 = vld [vmem:[%s255 + $0x20] sm:$0xff]
        %v301 = vld [vmem:[%s255 + $0x28] sm:$0xff]
        %v302 = vld [vmem:[%s255 + $0x30] sm:$0xff]
        %v303 = vld [vmem:[%s255 + $0x38] sm:$0xff]
        %v304 = vld [vmem:[%s255 + $0x40] sm:$0xff]
        %v305 = vld [vmem:[%s255 + $0x48] sm:$0xff]
        %v306 = vld [vmem:[%s255 + $0x50] sm:$0xff]
        %v307 = vld [vmem:[%s255 + $0x58] sm:$0xff]
        %v308 = vld [vmem:[%s255 + $0x60] sm:$0xff]
        %v309 = vld [vmem:[%s255 + $0x68] sm:$0xff]
        %v310 = vld [vmem:[%s255 + $0x70] sm:$0xff]
        %v311 = vld [vmem:[%s255 + $0x78] sm:$0xff]
        %v312 = vld [vmem:[%s255 + $0x80] sm:$0xff]
        %v313 = vld [vmem:[%s255 + $0x88] sm:$0xff]
        %v314 = vld [vmem:[%s255 + $0x90] sm:$0xff]
        %v315 = vld [vmem:[%s255 + $0x98] sm:$0xff]
        %v316 = vld [vmem:[%s255 + $0xa0] sm:$0xff]
        %v317 = vld [vmem:[%s255 + $0xa8] sm:$0xff]
        %v318 = vld [vmem:[%s255 + $0xb0] sm:$0xff]
        %v319 = vld [vmem:[%s255 + $0xb8] sm:$0xff]
        %v320 = vld [vmem:[%s255 + $0xc0] sm:$0xff]
        %v321 = vld [vmem:[%s255 + $0xc8] sm:$0xff]
        %v322 = vld [vmem:[%s255 + $0xd0] sm:$0xff]
        %v323 = vld [vmem:[%s255 + $0xd8] sm:$0xff]
        %v324 = vld [vmem:[%s255 + $0xe0] sm:$0xff]
        %v325 = vld [vmem:[%s255 + $0xe8] sm:$0xff]
        %v326 = vld [vmem:[%s255 + $0xf0] sm:$0xff]
        %v327 = vld [vmem:[%s255 + $0xf8] sm:$0xff]
        %v328 = vld [vmem:[#allocation2] sm:$0x1]
        %330 = vset.pattern.permute.xlu0 0
        %331 = vperm.xlu0 %330, %v328
        %v332 = vpop.permute.xlu0 %331
        %v334 = vperm.slane %v332, 0
        %v367 = vunpack.c.l.b16 %v296
        %v368 = vunpack.c.h.b16 %v296
        %v369 = vunpack.c.l.b16 %v297
        %v370 = vunpack.c.h.b16 %v297
        %v371 = vunpack.c.l.b16 %v298
        %v372 = vunpack.c.h.b16 %v298
        %v373 = vunpack.c.l.b16 %v299
        %v374 = vunpack.c.h.b16 %v299
        %v375 = vunpack.c.l.b16 %v300
        %v376 = vunpack.c.h.b16 %v300
        %v377 = vunpack.c.l.b16 %v301
        %v378 = vunpack.c.h.b16 %v301
        %v379 = vunpack.c.l.b16 %v302
        %v380 = vunpack.c.h.b16 %v302
        %v381 = vunpack.c.l.b16 %v303
        %v382 = vunpack.c.h.b16 %v303
        %v383 = vunpack.c.l.b16 %v304
        %v384 = vunpack.c.h.b16 %v304
        %v385 = vunpack.c.l.b16 %v305
        %v386 = vunpack.c.h.b16 %v305
        %v387 = vunpack.c.l.b16 %v306
        %v388 = vunpack.c.h.b16 %v306
        %v389 = vunpack.c.l.b16 %v307
        %v390 = vunpack.c.h.b16 %v307
        %v391 = vunpack.c.l.b16 %v308
        %v392 = vunpack.c.h.b16 %v308
        %v393 = vunpack.c.l.b16 %v309
        %v394 = vunpack.c.h.b16 %v309
        %v395 = vunpack.c.l.b16 %v310
        %v396 = vunpack.c.h.b16 %v310
        %v397 = vunpack.c.l.b16 %v311
        %v398 = vunpack.c.h.b16 %v311
        %v399 = vunpack.c.l.b16 %v312
        %v400 = vunpack.c.h.b16 %v312
        %v401 = vunpack.c.l.b16 %v313
        %v402 = vunpack.c.h.b16 %v313
        %v403 = vunpack.c.l.b16 %v314
        %v404 = vunpack.c.h.b16 %v314
        %v405 = vunpack.c.l.b16 %v315
        %v406 = vunpack.c.h.b16 %v315
        %v407 = vunpack.c.l.b16 %v316
        %v408 = vunpack.c.h.b16 %v316
        %v409 = vunpack.c.l.b16 %v317
        %v410 = vunpack.c.h.b16 %v317
        %v411 = vunpack.c.l.b16 %v318
        %v412 = vunpack.c.h.b16 %v318
        %v413 = vunpack.c.l.b16 %v319
        %v414 = vunpack.c.h.b16 %v319
        %v415 = vunpack.c.l.b16 %v320
        %v416 = vunpack.c.h.b16 %v320
        %v417 = vunpack.c.l.b16 %v321
        %v418 = vunpack.c.h.b16 %v321
        %v419 = vunpack.c.l.b16 %v322
        %v420 = vunpack.c.h.b16 %v322
        %v421 = vunpack.c.l.b16 %v323
        %v422 = vunpack.c.h.b16 %v323
        %v423 = vunpack.c.l.b16 %v324
        %v424 = vunpack.c.h.b16 %v324
        %v425 = vunpack.c.l.b16 %v325
        %v426 = vunpack.c.h.b16 %v325
        %v427 = vunpack.c.l.b16 %v326
        %v428 = vunpack.c.h.b16 %v326
        %v429 = vunpack.c.l.b16 %v327
        %v430 = vunpack.c.h.b16 %v327
        %v431 = vpack.c.b16 %v371, %v367
        %v432 = vpack.c.b16 %v372, %v368
        %v433 = vpack.c.b16 %v373, %v369
        %v434 = vpack.c.b16 %v374, %v370
        %v435 = vpack.c.b16 %v379, %v375
        %v436 = vpack.c.b16 %v380, %v376
        %v437 = vpack.c.b16 %v381, %v377
        %v438 = vpack.c.b16 %v382, %v378
        %v439 = vpack.c.b16 %v387, %v383
        %v440 = vpack.c.b16 %v388, %v384
        %v441 = vpack.c.b16 %v389, %v385
        %v442 = vpack.c.b16 %v390, %v386
        %v443 = vpack.c.b16 %v395, %v391
        %v444 = vpack.c.b16 %v396, %v392
        %v445 = vpack.c.b16 %v397, %v393
        %v446 = vpack.c.b16 %v398, %v394
        %v447 = vpack.c.b16 %v403, %v399
        %v448 = vpack.c.b16 %v404, %v400
        %v449 = vpack.c.b16 %v405, %v401
        %v450 = vpack.c.b16 %v406, %v402
        %v451 = vpack.c.b16 %v411, %v407
        %v452 = vpack.c.b16 %v412, %v408
        %v453 = vpack.c.b16 %v413, %v409
        %v454 = vpack.c.b16 %v414, %v410
        %v455 = vpack.c.b16 %v419, %v415
        %v456 = vpack.c.b16 %v420, %v416
        %v457 = vpack.c.b16 %v421, %v417
        %v458 = vpack.c.b16 %v422, %v418
        %v459 = vpack.c.b16 %v427, %v423
        %v460 = vpack.c.b16 %v428, %v424
        %v461 = vpack.c.b16 %v429, %v425
        %v462 = vpack.c.b16 %v430, %v426
        %495 = vmatpush.bf16.msra.mxu0 %v459
        %496 = vmatpush.bf16.msra.mxu0 %v455
        %497 = vmatpush.bf16.msra.mxu0 %v451
        %498 = vmatpush.bf16.msra.mxu0 %v447
        %499 = vmatpush.bf16.msra.mxu0 %v443
        %500 = vmatpush.bf16.msra.mxu0 %v439
        %501 = vmatpush.bf16.msra.mxu0 %v435
        %502 = vmatpush.bf16.msra.mxu0 %v431
        %503 = vmatmul.bf16.gmra.mxu0 %v295
        %v504 = vpop.f32.mrf.mxu0
        %v505 = vadd.f32 %v334, %v504
        %v506 = vpop.f32.mrf.mxu0
        %507 = vdwg.mxu0
        %508 = vmatpush.bf16.msra.mxu0 %v460
        %509 = vmatpush.bf16.msra.mxu0 %v456
        %510 = vmatpush.bf16.msra.mxu0 %v452
        %511 = vmatpush.bf16.msra.mxu0 %v448
        %512 = vmatpush.bf16.msra.mxu0 %v444
        %513 = vmatpush.bf16.msra.mxu0 %v440
        %514 = vmatpush.bf16.msra.mxu0 %v436
        %515 = vmatpush.bf16.msra.mxu0 %v432
        %516 = vmatmul.bf16.gmra.mxu0 %v295
        %v517 = vpop.f32.mrf.mxu0
        %v518 = vadd.f32 %v334, %v517
        %v519 = vpop.f32.mrf.mxu0
        %520 = vdwg.mxu0
        %521 = vmatpush.bf16.msra.mxu0 %v461
        %522 = vmatpush.bf16.msra.mxu0 %v457
        %523 = vmatpush.bf16.msra.mxu0 %v453
        %524 = vmatpush.bf16.msra.mxu0 %v449
        %525 = vmatpush.bf16.msra.mxu0 %v445
        %526 = vmatpush.bf16.msra.mxu0 %v441
        %527 = vmatpush.bf16.msra.mxu0 %v437
        %528 = vmatpush.bf16.msra.mxu0 %v433
        %529 = vmatmul.bf16.gmra.mxu0 %v295
        %v530 = vpop.f32.mrf.mxu0
        %v531 = vadd.f32 %v334, %v530
        %v532 = vpop.f32.mrf.mxu0
        %533 = vdwg.mxu0
        %534 = vmatpush.bf16.msra.mxu0 %v462
        %535 = vmatpush.bf16.msra.mxu0 %v458
        %536 = vmatpush.bf16.msra.mxu0 %v454
        %537 = vmatpush.bf16.msra.mxu0 %v450
        %538 = vmatpush.bf16.msra.mxu0 %v446
        %539 = vmatpush.bf16.msra.mxu0 %v442
        %540 = vmatpush.bf16.msra.mxu0 %v438
        %541 = vmatpush.bf16.msra.mxu0 %v434
        %542 = vmatmul.bf16.gmra.mxu0 %v295
        %v543 = vpop.f32.mrf.mxu0
        %v544 = vadd.f32 %v334, %v543
        %v545 = vpop.f32.mrf.mxu0
        %546 = vdwg.mxu0
        %v551 = vrot.slane %v518, 7
        %v552 = vrot.slane %v531, 6
        %v553 = vrot.slane %v544, 5
        %vm554 = vcmask 1040384
        %v555 = vsel %vm554, %v505, %v551
        %vm556 = vcmask 1042434
        %v557 = vsel %vm556, %v552, %v553
        %vm558 = vcmask 1041408
        %v559 = vsel %vm558, %v555, %v557
        %v561 = vlaneseq
        %vm562 = vcmp.ge.s32.totalorder %v561, 0
        %vm563 = vcmp.lt.s32.totalorder %v561, 512
        %vm564 = vmand %vm562, %vm563
        %565 = vst.msk [vmem:[%s293] sm:$0xf] %vm564, %v559
        %s566 = smul.u32 4, %s21
        %p567 = scmp.lt.s32.totalorder %s20, 3
        %s568 = scalar_select %p567, %s20, 3
        %p569 = scmp.lt.s32.totalorder %s566, 15
        %s570 = scalar_select %p569, %s566, 15
        %s571 = smul.addr %s568, 16
        %s572 = sadd.s32 %s570, %s571
        %s573 = scalar_lea.vmem %s3, %s572
        // Predicated region
        $region56: #{vae_forward.20} parent=50 // pred_check
          %p574 = pneg %p123
        $region57: #{vae_forward.20} parent=50 // pred_check_branch
          %576 = sbr.rel (%p574) target = $region59
        $region58: #{vae_forward.20} parent=50 // pred_region
          %s577 = smul.u32 4, %s21
        $region59: #{vae_forward.20} parent=50 // pred_fallthru
          _
      $region51: #{vae_forward.20} parent=5 // pred_fallthru
        _
      %p578 = scmp.le.s32.totalorder 2, %s11
      // Predicated region
      $region60: #{vae_forward.20} parent=5 // pred_check
        %p579 = pneg %p578
      $region61: #{vae_forward.20} parent=5 // pred_check_branch
        %581 = sbr.rel (%p579) target = $region63
      $region62: #{vae_forward.20} parent=5 // pred_region
        %s582 = ssub.s32 %s11, 2
        // Predicated region
        $region64: #{vae_forward.20} parent=62 // pred_check
          %p583 = pneg %p129
        $region65: #{vae_forward.20} parent=62 // pred_check_branch
          %585 = sbr.rel (%p583) target = $region67
        $region66: #{vae_forward.20} parent=62 // pred_region
          %s586 = smul.u32 4, %s23
          %p587 = scmp.lt.s32.totalorder %s22, 3
          %s588 = scalar_select %p587, %s22, 3
          %p589 = scmp.lt.s32.totalorder %s586, 15
          %s590 = scalar_select %p589, %s586, 15
          %s591 = smul.addr %s588, 16
          %s592 = sadd.s32 %s590, %s591
          %s593 = scalar_lea.vmem %s3, %s592
        $region67: #{vae_forward.20} parent=62 // pred_fallthru
          _
      $region63: #{vae_forward.20} parent=5 // pred_fallthru
        _
    $region6: #{vae_forward.20} parent=1 // loop_footer
      %s15 = sadd.s32 1, %s11
    $region7: #{vae_forward.20} parent=1 // loop_footer_branch
      %10 = sbr.rel target = $region3
    $region8: #{vae_forward.20} parent=1 // loop_exit
      _

// kernel: vae_forward.21
$region0: #{vae_forward.21}
  #allocation0 [shape = 'u32[]', space=smem, size = 0x4, offset = 0x4, fixed_abs, tag = 'smem constant byte address 0x4 - core index']
  #allocation1 [shape = 'u32[72,128]{1,0:T(1,128)}', space=vmem, size = 0x9000, scoped, tag = 'internal scratch']
  #allocation2 [shape = 'f32[1,1]{1,0:T(1,128)}', space=vmem, size = 0x200, scoped, tag = 'scratch operand']
  %s0 = inlined_call_operand.vmem [shape: f32[64,128], index: 0, kind: input, shape index: {}]
  %s1 = inlined_call_operand.vmem [shape: f32[64,128], index: 1, kind: input, shape index: {}]
  %s2 = inlined_call_operand.vmem [shape: f32[2,5], index: 2, kind: input, shape index: {}]
  %s3 = inlined_call_operand.vmem [shape: f32[2,5], index: 3, kind: input, shape index: {}]
  %s4 = inlined_call_operand.hbm [shape: f32[1,1], index: 4, kind: output, shape index: {0}]
  %s5 = inlined_call_operand.hbm [shape: f32[1,1], index: 5, kind: output, shape index: {1}]
  %6 = xla_tuple %s4, %s5
  %s7 = sld [smem:[#allocation0]]
  $region42: #{vae_forward.21} parent=0
    _
  %s9 = ssub.s32 1, %s7
  %s10 = scalar_select 0, %s9, %s7
  $region1: #{vae_forward.21} parent=0
    #allocation3 [shape = 'u8[512]{0}', space=vmem, size = 0x400, scoped, tag = 'output window, operand 0, single buffered']
    #allocation4 [shape = 's32[1]{0}', space=sflag, size = 0x4, scoped, tag = 'scoped memory for vae_forward.21']
    #allocation5 [shape = 'u8[512]{0}', space=vmem, size = 0x400, scoped, tag = 'output window, operand 1, single buffered']
    #allocation6 [shape = 's32[1]{0}', space=sflag, size = 0x4, scoped, tag = 'scoped memory for vae_forward.21']
    %11 = vsyncpa [#allocation4], 0
    %12 = vsyncpa [#allocation6], 0
    // Predicated region
    $region2: #{vae_forward.21} parent=1 // pred_check
      _
    $region3: #{vae_forward.21} parent=1 // pred_check_branch
      %14 = sbr.rel (0) target = $region5
    $region4: #{vae_forward.21} parent=1 // pred_region
      _
    $region5: #{vae_forward.21} parent=1 // pred_fallthru
      _
    // Predicated region
    $region6: #{vae_forward.21} parent=1 // pred_check
      _
    $region7: #{vae_forward.21} parent=1 // pred_check_branch
      %16 = sbr.rel (0) target = $region9
    $region8: #{vae_forward.21} parent=1 // pred_region
      _
    $region9: #{vae_forward.21} parent=1 // pred_fallthru
      _
    // Predicated region
    $region10: #{vae_forward.21} parent=1 // pred_check
      _
    $region11: #{vae_forward.21} parent=1 // pred_check_branch
      %18 = sbr.rel (0) target = $region13
    $region12: #{vae_forward.21} parent=1 // pred_region
      _
    $region13: #{vae_forward.21} parent=1 // pred_fallthru
      _
    // Predicated region
    $region14: #{vae_forward.21} parent=1 // pred_check
      _
    $region15: #{vae_forward.21} parent=1 // pred_check_branch
      %20 = sbr.rel (0) target = $region17
    $region16: #{vae_forward.21} parent=1 // pred_region
      _
    $region17: #{vae_forward.21} parent=1 // pred_fallthru
      _
    %p21 = scmp.eq.s32.totalorder 0, 0
    // Predicated region
    $region18: #{vae_forward.21} parent=1 // pred_check
      %p22 = pneg %p21
    $region19: #{vae_forward.21} parent=1 // pred_check_branch
      %24 = sbr.rel (%p22) target = $region21
    $region20: #{vae_forward.21} parent=1 // pred_region
      %vm25 = vcmask 0
      %26 = vst.msk [vmem:[#allocation2] sm:$0x1] %vm25, 0.0
    $region21: #{vae_forward.21} parent=1 // pred_fallthru
      _
    %v27 = vld [vmem:[%s0] sm:$0xff]
    %v28 = vld [vmem:[%s0 + $0x8] sm:$0xff]
    %v29 = vld [vmem:[%s0 + $0x10] sm:$0xff]
    %v30 = vld [vmem:[%s0 + $0x18] sm:$0xff]
    %v31 = vld [vmem:[%s0 + $0x20] sm:$0xff]
    %v32 = vld [vmem:[%s0 + $0x28] sm:$0xff]
    %v33 = vld [vmem:[%s0 + $0x30] sm:$0xff]
    %v34 = vld [vmem:[%s0 + $0x38] sm:$0xff]
    %v35 = vld [vmem:[%s1] sm:$0xff]
    %v36 = vld [vmem:[%s1 + $0x8] sm:$0xff]
    %v37 = vld [vmem:[%s1 + $0x10] sm:$0xff]
    %v38 = vld [vmem:[%s1 + $0x18] sm:$0xff]
    %v39 = vld [vmem:[%s1 + $0x20] sm:$0xff]
    %v40 = vld [vmem:[%s1 + $0x28] sm:$0xff]
    %v41 = vld [vmem:[%s1 + $0x30] sm:$0xff]
    %v42 = vld [vmem:[%s1 + $0x38] sm:$0xff]
    %v43 = vmax.f32 %v27, 0.0
    %v44 = vmax.f32 %v28, 0.0
    %v45 = vmax.f32 %v29, 0.0
    %v46 = vmax.f32 %v30, 0.0
    %v47 = vmax.f32 %v31, 0.0
    %v48 = vmax.f32 %v32, 0.0
    %v49 = vmax.f32 %v33, 0.0
    %v50 = vmax.f32 %v34, 0.0
    %v51 = vmul.f32 %v27, %v35
    %v52 = vmul.f32 %v28, %v36
    %v53 = vmul.f32 %v29, %v37
    %v54 = vmul.f32 %v30, %v38
    %v55 = vmul.f32 %v31, %v39
    %v56 = vmul.f32 %v32, %v40
    %v57 = vmul.f32 %v33, %v41
    %v58 = vmul.f32 %v34, %v42
    %v59 = vsub.f32 %v43, %v51
    %v60 = vsub.f32 %v44, %v52
    %v61 = vsub.f32 %v45, %v53
    %v62 = vsub.f32 %v46, %v54
    %v63 = vsub.f32 %v47, %v55
    %v64 = vsub.f32 %v48, %v56
    %v65 = vsub.f32 %v49, %v57
    %v66 = vsub.f32 %v50, %v58
    %v67 = vand.u32 2147483647, %v27
    %v68 = vand.u32 2147483647, %v28
    %v69 = vand.u32 2147483647, %v29
    %v70 = vand.u32 2147483647, %v30
    %v71 = vand.u32 2147483647, %v31
    %v72 = vand.u32 2147483647, %v32
    %v73 = vand.u32 2147483647, %v33
    %v74 = vand.u32 2147483647, %v34
    %v75 = vsub.f32 0.0, %v67
    %v76 = vsub.f32 0.0, %v68
    %v77 = vsub.f32 0.0, %v69
    %v78 = vsub.f32 0.0, %v70
    %v79 = vsub.f32 0.0, %v71
    %v80 = vsub.f32 0.0, %v72
    %v81 = vsub.f32 0.0, %v73
    %v82 = vsub.f32 0.0, %v74
    %v83 = vmul.f32 %v75, 1.442695
    %v84 = vpow.pop %v83
    %v85 = vmul.f32 %v76, 1.442695
    %v86 = vpow.pop %v85
    %v87 = vmul.f32 %v77, 1.442695
    %v88 = vpow.pop %v87
    %v89 = vmul.f32 %v78, 1.442695
    %v90 = vpow.pop %v89
    %v91 = vmul.f32 %v79, 1.442695
    %v92 = vpow.pop %v91
    %v93 = vmul.f32 %v80, 1.442695
    %v94 = vpow.pop %v93
    %v95 = vmul.f32 %v81, 1.442695
    %v96 = vpow.pop %v95
    %v97 = vmul.f32 %v82, 1.442695
    %v98 = vpow.pop %v97
    %v99 = vadd.f32 %v84, 1.0
    %v100 = vadd.f32 %v86, 1.0
    %v101 = vadd.f32 %v88, 1.0
    %v102 = vadd.f32 %v90, 1.0
    %v103 = vadd.f32 %v92, 1.0
    %v104 = vadd.f32 %v94, 1.0
    %v105 = vadd.f32 %v96, 1.0
    %v106 = vadd.f32 %v98, 1.0
    %v107 = vlog2.pop %v99
    %v108 = vmul.f32 %v107, 0.6931472
    %v109 = vlog2.pop %v100
    %v110 = vmul.f32 %v109, 0.6931472
    %v111 = vlog2.pop %v101
    %v112 = vmul.f32 %v111, 0.6931472
    %v113 = vlog2.pop %v102
    %v114 = vmul.f32 %v113, 0.6931472
    %v115 = vlog2.pop %v103
    %v116 = vmul.f32 %v115, 0.6931472
    %v117 = vlog2.pop %v104
    %v118 = vmul.f32 %v117, 0.6931472
    %v119 = vlog2.pop %v105
    %v120 = vmul.f32 %v119, 0.6931472
    %v121 = vlog2.pop %v106
    %v122 = vmul.f32 %v121, 0.6931472
    %v123 = vadd.f32 %v59, %v108
    %v124 = vadd.f32 %v60, %v110
    %v125 = vadd.f32 %v61, %v112
    %v126 = vadd.f32 %v62, %v114
    %v127 = vadd.f32 %v63, %v116
    %v128 = vadd.f32 %v64, %v118
    %v129 = vadd.f32 %v65, %v120
    %v130 = vadd.f32 %v66, %v122
    %v131 = vld [vmem:[#allocation2] sm:$0x1]
    %v132 = vadd.f32 %v123, %v124
    %v133 = vadd.f32 %v132, %v125
    %v134 = vadd.f32 %v133, %v126
    %v135 = vadd.f32 %v134, %v127
    %v136 = vadd.f32 %v135, %v128
    %v137 = vadd.f32 %v136, %v129
    %v138 = vadd.f32 %v137, %v130
    %139 = vadd.xlane.f32.xlu0 %v138
    %v140 = vpop.xlane.xlu0 %139
    %v141 = vrot.slane %v140, 4
    %v142 = vadd.f32 %v140, %v141
    %v143 = vrot.slane %v142, 2
    %v144 = vadd.f32 %v142, %v143
    %v145 = vrot.slane %v144, 1
    %v146 = vadd.f32 %v144, %v145
    %s147 = vtos %v146
    %v148 = vstv %s147
    %v149 = vadd.f32 %v131, %v148
    %vm150 = vcmask 0
    %151 = vst.msk [vmem:[#allocation2] sm:$0x1] %vm150, %v149
    // Predicated region
    $region22: #{vae_forward.21} parent=1 // pred_check
      %p152 = pneg %p21
    $region23: #{vae_forward.21} parent=1 // pred_check_branch
      %154 = sbr.rel (%p152) target = $region25
    $region24: #{vae_forward.21} parent=1 // pred_region
      %v155 = vld [vmem:[#allocation2] sm:$0x1]
      %156 = vst.msk [vmem:[#allocation3] sm:$0x1] %vm150, %v155
      %v157 = vld [vmem:[%s2] sm:$0x3]
      %v158 = vld [vmem:[%s3] sm:$0x3]
      %v159 = vadd.f32 %v158, 1.0
      %v160 = vmul.f32 %v157, %v157
      %v161 = vsub.f32 %v159, %v160
      %v162 = vmul.f32 %v158, 1.442695
      %v163 = vpow.pop %v162
      %v164 = vsub.f32 %v161, %v163
      %vm165 = vcmask 33792
      %v166 = vsel %vm165, %v164, 0.0
      %167 = vadd.xlane.f32.xlu0 %v166
      %v168 = vpop.xlane.xlu0 %167
      %v169 = vrot.slane %v168, 4
      %v170 = vadd.f32 %v168, %v169
      %v171 = vrot.slane %v170, 2
      %v172 = vadd.f32 %v170, %v171
      %v173 = vrot.slane %v172, 1
      %v174 = vadd.f32 %v172, %v173
      %s175 = vtos %v174
      %v176 = vstv %s175
      %v177 = vmul.f32 %v176, -0.5
      %178 = vst.msk [vmem:[#allocation5] sm:$0x1] %vm150, %v177
    $region25: #{vae_forward.21} parent=1 // pred_fallthru
      _
    // Predicated region
    $region26: #{vae_forward.21} parent=1 // pred_check
      _
    $region27: #{vae_forward.21} parent=1 // pred_check_branch
      %180 = sbr.rel (0) target = $region29
    $region28: #{vae_forward.21} parent=1 // pred_region
      %182 = vsyncadd [#allocation4], 0
      %s184 = sshll.u32 [#allocation3], 4
      %s185 = int_to_ptr.vmem [resolvable:$true] %s184
      %s186 = sshll.u32 %s4, 4
      %s187 = int_to_ptr.hbm [resolvable:$true] %s186
      %189 = dma.vmem_to_hbm [thread:$0]  %s185, 16, %s187, [#allocation4]
    $region29: #{vae_forward.21} parent=1 // pred_fallthru
      _
    // Predicated region
    $region30: #{vae_forward.21} parent=1 // pred_check
      _
    $region31: #{vae_forward.21} parent=1 // pred_check_branch
      %191 = sbr.rel (0) target = $region33
    $region32: #{vae_forward.21} parent=1 // pred_region
      %193 = vsyncadd [#allocation6], 0
      %s195 = sshll.u32 [#allocation5], 4
      %s196 = int_to_ptr.vmem [resolvable:$true] %s195
      %s197 = sshll.u32 %s5, 4
      %s198 = int_to_ptr.hbm [resolvable:$true] %s197
      %200 = dma.vmem_to_hbm [thread:$0]  %s196, 16, %s198, [#allocation6]
    $region33: #{vae_forward.21} parent=1 // pred_fallthru
      _
    // Predicated region
    $region34: #{vae_forward.21} parent=1 // pred_check
      _
    $region35: #{vae_forward.21} parent=1 // pred_check_branch
      %202 = sbr.rel (0) target = $region37
    $region36: #{vae_forward.21} parent=1 // pred_region
      %204 = dma.done [#allocation4], 16
    $region37: #{vae_forward.21} parent=1 // pred_fallthru
      _
    // Predicated region
    $region38: #{vae_forward.21} parent=1 // pred_check
      _
    $region39: #{vae_forward.21} parent=1 // pred_check_branch
      %206 = sbr.rel (0) target = $region41
    $region40: #{vae_forward.21} parent=1 // pred_region
      %208 = dma.done [#allocation6], 16
    $region41: #{vae_forward.21} parent=1 // pred_fallthru
      _
    %209 = vsyncpa [#allocation4], 1
    %210 = vsyncpa [#allocation6], 1

</llo_original>
